<compile_context>
chip_gen: v7x
topology: tpu7x:2x2x1
jax: 0.10.0
libtpu: 0.0.40
codegen_flags: <defaults>
</compile_context>

<pallas_src>
import numpy as np
import jax
import jax.numpy as jnp
from jax import lax
from jax.experimental import pallas as pl
from jax.experimental.pallas import tpu as pltpu

PREC = jax.lax.Precision.HIGHEST  # full-f32 MXU passes so the test tolerance is meaningful


def _tap(k):
    """(phase, start) for tap k of a 3x3/stride-2/pad-1 conv on zero-padded phases."""
    if k == 0:
        return 1, 0   # odd phase, shifted (-1) -> slice [0:ho]
    if k == 1:
        return 0, 1   # even phase               -> slice [1:ho+1]
    return 1, 1       # odd phase                -> slice [1:ho+1]


def make_inverted_residual_kernel(nb, cin, bf, ho, wo):
    hp, wp = ho + 1, wo + 1
    oup = 2 * bf
    pix = nb * ho * wo

    def kernel(xph_ref, wd1_ref, wd2_ref, wa_ref, ba_ref, a_ref, b_ref, bias_ref,
               out_ref, tph_scr):

        def dw_s2(read_phase, w_ref, c):
            # 3x3 depthwise conv, stride 2, pad 1, on zero-padded phases (VPU FMA taps).
            acc = jnp.zeros((nb, ho, wo, c), jnp.float32)
            for kh in range(3):
                pr, sr = _tap(kh)
                for kw in range(3):
                    pc, sc = _tap(kw)
                    acc = acc + read_phase(2 * pr + pc, sr, sc) * w_ref[kh, kw, :]
            return acc

        # ---- branch2 stage 1: folded 1x1 conv + bias + ReLU over all 4 phases ---------
        # (single MXU matmul; BN2a already folded into wa/ba)
        x_all = xph_ref[:, :, 1:, 1:, :]                              # (nb,4,ho,wo,cin)
        t = jnp.dot(x_all.reshape(nb * 4 * ho * wo, cin), wa_ref[...],
                    preferred_element_type=jnp.float32, precision=PREC)
        t = jnp.maximum(t + ba_ref[0, :], 0.0)

        # Refresh only the zero-pad border of the scratch (interior is fully rewritten
        # every step; unguarded so it is correct when the parallel axis is core-sharded).
        tph_scr[:, :, 0:1, :, :] = jnp.zeros((nb, 4, 1, wp, bf), jnp.float32)
        tph_scr[:, :, :, 0:1, :] = jnp.zeros((nb, 4, hp, 1, bf), jnp.float32)
        tph_scr[:, :, 1:, 1:, :] = t.reshape(nb, 4, ho, wo, bf)

        # ---- depthwise 3x3 / stride-2 convs (BN scale folded into the taps) -----------
        d1 = dw_s2(lambda p, sr, sc: xph_ref[:, p, sr:sr + ho, sc:sc + wo, :],
                   wd1_ref, cin)                                      # branch1 dw
        d2 = dw_s2(lambda p, sr, sc: tph_scr[:, p, sr:sr + ho, sc:sc + wo, :],
                   wd2_ref, bf)                                       # branch2 dw

        # ---- trailing 1x1 convs + BN shift + ReLU, channel shuffle folded into A/B ----
        o = jnp.dot(d1.reshape(pix, cin), a_ref[...],
                    preferred_element_type=jnp.float32, precision=PREC)
        o = o + jnp.dot(d2.reshape(pix, bf), b_ref[...],
                        preferred_element_type=jnp.float32, precision=PREC)
        o = jnp.maximum(o + bias_ref[0, :], 0.0)
        out_ref[...] = o.reshape(nb, ho, wo, oup)

    return kernel


def inverted_residual_stride2(x_nchw, params, batch_block=1):
    n, cin, h, w = x_nchw.shape
    assert h % 2 == 0 and w % 2 == 0
    nb = batch_block
    assert n % nb == 0
    ho, wo = h // 2, w // 2
    hp, wp = ho + 1, wo + 1
    bf = params["w_pw1"].shape[1]
    oup = 2 * bf

    # ---------------- constant folding (wrapper-side, zero kernel cost) ----------------
    s1a, t1a = params["bn1a"][0], params["bn1a"][1]
    s1b, t1b = params["bn1b"][0], params["bn1b"][1]
    s2a, t2a = params["bn2a"][0], params["bn2a"][1]
    s2b, t2b = params["bn2b"][0], params["bn2b"][1]
    s2c, t2c = params["bn2c"][0], params["bn2c"][1]

    wd1 = params["w_dw1"] * s1a[None, None, :]                       # dw1 * bn1a.scale
    wd2 = params["w_dw2"] * s2b[None, None, :]                       # dw2 * bn2b.scale
    wa = params["w_pw2a"] * s2a[None, :]                             # pw2a * bn2a.scale
    ba = t2a[None, :]                                                # (1, bf)

    w1p = params["w_pw1"] * s1b[None, :]                             # (cin, bf)
    c1p = jnp.dot(t1a, params["w_pw1"], precision=PREC) * s1b + t1b  # (bf,)
    w2p = params["w_pw2b"] * s2c[None, :]                            # (bf, bf)
    c2p = jnp.dot(t2b, params["w_pw2b"], precision=PREC) * s2c + t2c  # (bf,)

    # channel shuffle (groups=2, split_shuffle=True) folded into weight columns:
    # combined output channel k takes concat([b1, b2])[perm[k]]
    perm = np.arange(oup).reshape(2, bf).T.flatten()
    from_b1 = perm < bf
    i1 = np.where(from_b1, perm, 0)
    i2 = np.where(~from_b1, perm - bf, 0)
    A = jnp.where(from_b1[None, :], w1p[:, i1], 0.0)                 # (cin, oup)
    B = jnp.where(~from_b1[None, :], w2p[:, i2], 0.0)                # (bf,  oup)
    bias_c = jnp.where(from_b1, c1p[i1], c2p[i2])[None, :]           # (1,   oup)

    # ---------------- zero-padded stride-2 phase decomposition (layout only) -----------
    x = jnp.transpose(x_nchw, (0, 2, 3, 1)).astype(jnp.float32)      # NHWC
    xph = x.reshape(n, ho, 2, wo, 2, cin)
    xph = jnp.transpose(xph, (0, 2, 4, 1, 3, 5)).reshape(n, 4, ho, wo, cin)
    xph = jnp.pad(xph, ((0, 0), (0, 0), (1, 0), (1, 0), (0, 0)))     # (n,4,hp,wp,cin)

    kernel = make_inverted_residual_kernel(nb, cin, bf, ho, wo)

    weights = [wd1, wd2, wa, ba, A, B, bias_c]

    def const_spec(a):
        nd = a.ndim
        return pl.BlockSpec(a.shape, lambda i, nd=nd: (0,) * nd)

    in_specs = [pl.BlockSpec((nb, 4, hp, wp, cin), lambda i: (i, 0, 0, 0, 0))]
    in_specs += [const_spec(a) for a in weights]
    out_spec = pl.BlockSpec((nb, ho, wo, oup), lambda i: (i, 0, 0, 0))

    y = pl.pallas_call(
        kernel,
        out_shape=jax.ShapeDtypeStruct((n, ho, wo, oup), jnp.float32),
        grid=(n // nb,),
        in_specs=in_specs,
        out_specs=out_spec,
        scratch_shapes=[pltpu.VMEM((nb, 4, hp, wp, bf), jnp.float32)],
        compiler_params=pltpu.CompilerParams(dimension_semantics=("parallel",)),
    )(xph, *weights)

    # y already holds the shuffled channel order [out1 | out2]; split + NCHW in wrapper.
    out1 = jnp.transpose(y[..., :bf], (0, 3, 1, 2))
    out2 = jnp.transpose(y[..., bf:], (0, 3, 1, 2))
    return out1, out2


def init_params(key, inp, oup):
    bf = oup // 2
    eps = 1e-5
    keys = iter(jax.random.split(key, 25))

    def conv(shape):
        return 0.2 * jax.random.normal(next(keys), shape, jnp.float32)

    def bn_fold(c):
        gamma = 1.0 + 0.2 * jax.random.normal(next(keys), (c,), jnp.float32)
        beta = 0.1 * jax.random.normal(next(keys), (c,), jnp.float32)
        mean = 0.1 * jax.random.normal(next(keys), (c,), jnp.float32)
        var = jax.random.uniform(next(keys), (c,), jnp.float32, minval=0.5, maxval=1.5)
        scale = gamma / jnp.sqrt(var + eps)
        shift = beta - mean * scale
        return jnp.stack([scale, shift], axis=0)                     # (2, c)

    p = {}
    p["w_dw1"] = conv((3, 3, inp))        # branch1 depthwise, layout (kh, kw, c)
    p["bn1a"] = bn_fold(inp)
    p["w_pw1"] = conv((inp, bf))          # 1x1 conv, layout (cin, cout)
    p["bn1b"] = bn_fold(bf)
    p["w_pw2a"] = conv((inp, bf))
    p["bn2a"] = bn_fold(bf)
    p["w_dw2"] = conv((3, 3, bf))
    p["bn2b"] = bn_fold(bf)
    p["w_pw2b"] = conv((bf, bf))
    p["bn2c"] = bn_fold(bf)
    return p


def ref_forward(x, p):
    """Plain-JAX NCHW reference mirroring the PyTorch module (stride=2, split shuffle)."""
    relu = lambda z: jnp.maximum(z, 0.0)

    def bn(y, s):
        return y * s[0][None, :, None, None] + s[1][None, :, None, None]

    def dwconv(y, w, stride):
        w_oihw = jnp.transpose(w, (2, 0, 1))[:, None, :, :]          # (C, 1, 3, 3)
        return lax.conv_general_dilated(
            y, w_oihw, (stride, stride), ((1, 1), (1, 1)),
            feature_group_count=y.shape[1],
            dimension_numbers=("NCHW", "OIHW", "NCHW"), precision=PREC)

    def pwconv(y, w):
        w_oihw = jnp.transpose(w, (1, 0))[:, :, None, None]          # (Cout, Cin, 1, 1)
        return lax.conv_general_dilated(
            y, w_oihw, (1, 1), ((0, 0), (0, 0)),
            dimension_numbers=("NCHW", "OIHW", "NCHW"), precision=PREC)

    b1 = relu(bn(pwconv(bn(dwconv(x, p["w_dw1"], 2), p["bn1a"]), p["w_pw1"]), p["bn1b"]))
    t = relu(bn(pwconv(x, p["w_pw2a"]), p["bn2a"]))
    b2 = relu(bn(pwconv(bn(dwconv(t, p["w_dw2"], 2), p["bn2b"]), p["w_pw2b"]), p["bn2c"]))

    full = jnp.concatenate([b1, b2], axis=1)
    bf = b1.shape[1]
    perm = np.arange(2 * bf).reshape(2, bf).T.flatten()
    return full[:, perm[:bf]], full[:, perm[bf:]]


if __name__ == "__main__":
    INP, OUP = 4, 8          # branch_features = 4, stride = 2
    N, H, W = 2, 16, 16

    key = jax.random.PRNGKey(0)
    kx, kp = jax.random.split(key)
    x = jax.random.normal(kx, (N, INP, H, W), jnp.float32)
    params = init_params(kp, INP, OUP)

    out1, out2 = inverted_residual_stride2(x, params, batch_block=1)
    out1, out2 = jax.block_until_ready((out1, out2))

    assert out1.shape == (N, OUP // 2, H // 2, W // 2)
    assert out2.shape == (N, OUP // 2, H // 2, W // 2)

    r1, r2 = ref_forward(x, params)
    np.testing.assert_allclose(np.asarray(out1), np.asarray(r1), rtol=1e-4, atol=1e-4)
    np.testing.assert_allclose(np.asarray(out2), np.asarray(r2), rtol=1e-4, atol=1e-4)

    print("KERNEL_OK")
</pallas_src>

<mosaic_0001>
module attributes {stable_mosaic.version = 11 : i64} {
  func.func @kernel(%arg0: i32, %arg1: memref<1x4x9x9x4xf32, #tpu.memory_space<vmem>>, %arg2: memref<3x3x4xf32, #tpu.memory_space<vmem>>, %arg3: memref<3x3x4xf32, #tpu.memory_space<vmem>>, %arg4: memref<4x4xf32, #tpu.memory_space<vmem>>, %arg5: memref<1x4xf32, #tpu.memory_space<vmem>>, %arg6: memref<4x8xf32, #tpu.memory_space<vmem>>, %arg7: memref<4x8xf32, #tpu.memory_space<vmem>>, %arg8: memref<1x8xf32, #tpu.memory_space<vmem>>, %arg9: memref<1x8x8x8xf32, #tpu.memory_space<vmem>>, %arg10: memref<1x4x9x9x4xf32, #tpu.memory_space<vmem>>) attributes {dimension_semantics = [#tpu.dimension_semantics<parallel>], iteration_bounds = array<i64: 2>, scalar_prefetch = 0 : i64, scratch_operands = 1 : i64, tpu.core_type = #tpu.core_type<tc>, window_params = [{transform_indices = @transform_0, window_bounds = array<i64: 1, 4, 9, 9, 4>}, {pipeline_mode = #tpu.pipeline_mode<synchronous>, transform_indices = @transform_1, window_bounds = array<i64: 3, 3, 4>}, {pipeline_mode = #tpu.pipeline_mode<synchronous>, transform_indices = @transform_2, window_bounds = array<i64: 3, 3, 4>}, {pipeline_mode = #tpu.pipeline_mode<synchronous>, transform_indices = @transform_3, window_bounds = array<i64: 4, 4>}, {pipeline_mode = #tpu.pipeline_mode<synchronous>, transform_indices = @transform_4, window_bounds = array<i64: 1, 4>}, {pipeline_mode = #tpu.pipeline_mode<synchronous>, transform_indices = @transform_5, window_bounds = array<i64: 4, 8>}, {pipeline_mode = #tpu.pipeline_mode<synchronous>, transform_indices = @transform_6, window_bounds = array<i64: 4, 8>}, {pipeline_mode = #tpu.pipeline_mode<synchronous>, transform_indices = @transform_7, window_bounds = array<i64: 1, 8>}, {transform_indices = @transform_8, window_bounds = array<i64: 1, 8, 8, 8>}]} {
    %c0 = arith.constant 0 : index
    %c0_0 = arith.constant 0 : index
    %c1 = arith.constant 1 : index
    %c1_1 = arith.constant 1 : index
    %c0_2 = arith.constant 0 : index
    %0 = vector.load %arg1[%c0, %c0_0, %c1, %c1_1, %c0_2] : memref<1x4x9x9x4xf32, #tpu.memory_space<vmem>>, vector<1x4x8x8x4xf32>
    %1 = vector.shape_cast %0 : vector<1x4x8x8x4xf32> to vector<256x4xf32>
    %c0_3 = arith.constant 0 : index
    %c0_4 = arith.constant 0 : index
    %2 = vector.load %arg4[%c0_3, %c0_4] : memref<4x4xf32, #tpu.memory_space<vmem>>, vector<4x4xf32>
    %cst = arith.constant dense<0.000000e+00> : vector<256x4xf32>
    %3 = tpu.matmul %1, %2, %cst {dimension_numbers = #tpu.dot_dimension_numbers<[1], [0], [0], [1], [0, 0, 1, 1], [], []>, precision = #tpu.contract_precision<fp32>} : vector<256x4xf32>, vector<4x4xf32>, vector<256x4xf32> -> vector<256x4xf32>
    %c0_5 = arith.constant 0 : index
    %c0_6 = arith.constant 0 : index
    %4 = vector.load %arg5[%c0_5, %c0_6] : memref<1x4xf32, #tpu.memory_space<vmem>>, vector<1x4xf32>
    %5 = vector.shape_cast %4 : vector<1x4xf32> to vector<4xf32>
    %6 = vector.shape_cast %5 : vector<4xf32> to vector<1x4xf32>
    %7 = vector.broadcast %6 : vector<1x4xf32> to vector<256x4xf32>
    %8 = arith.addf %3, %7 : vector<256x4xf32>
    %cst_7 = arith.constant 0.000000e+00 : f32
    %9 = vector.broadcast %cst_7 : f32 to vector<256x4xf32>
    %10 = arith.maximumf %8, %9 : vector<256x4xf32>
    %cst_8 = arith.constant 0.000000e+00 : f32
    %11 = vector.broadcast %cst_8 : f32 to vector<1x4x1x9x4xf32>
    %c0_9 = arith.constant 0 : index
    %c0_10 = arith.constant 0 : index
    %c0_11 = arith.constant 0 : index
    %c0_12 = arith.constant 0 : index
    %c0_13 = arith.constant 0 : index
    %12 = vector.load %arg10[%c0_9, %c0_10, %c0_11, %c0_12, %c0_13] : memref<1x4x9x9x4xf32, #tpu.memory_space<vmem>>, vector<1x4x1x9x4xf32>
    tpu.vector_store %arg10[%c0_9, %c0_10, %c0_11, %c0_12, %c0_13], %11 {strides = array<i32>} : memref<1x4x9x9x4xf32, #tpu.memory_space<vmem>>, vector<1x4x1x9x4xf32>,
    %cst_14 = arith.constant 0.000000e+00 : f32
    %13 = vector.broadcast %cst_14 : f32 to vector<1x4x9x1x4xf32>
    %c0_15 = arith.constant 0 : index
    %c0_16 = arith.constant 0 : index
    %c0_17 = arith.constant 0 : index
    %c0_18 = arith.constant 0 : index
    %c0_19 = arith.constant 0 : index
    %14 = vector.load %arg10[%c0_15, %c0_16, %c0_17, %c0_18, %c0_19] : memref<1x4x9x9x4xf32, #tpu.memory_space<vmem>>, vector<1x4x9x1x4xf32>
    tpu.vector_store %arg10[%c0_15, %c0_16, %c0_17, %c0_18, %c0_19], %13 {strides = array<i32>} : memref<1x4x9x9x4xf32, #tpu.memory_space<vmem>>, vector<1x4x9x1x4xf32>,
    %15 = vector.shape_cast %10 : vector<256x4xf32> to vector<1x4x8x8x4xf32>
    %c0_20 = arith.constant 0 : index
    %c0_21 = arith.constant 0 : index
    %c1_22 = arith.constant 1 : index
    %c1_23 = arith.constant 1 : index
    %c0_24 = arith.constant 0 : index
    %16 = vector.load %arg10[%c0_20, %c0_21, %c1_22, %c1_23, %c0_24] : memref<1x4x9x9x4xf32, #tpu.memory_space<vmem>>, vector<1x4x8x8x4xf32>
    tpu.vector_store %arg10[%c0_20, %c0_21, %c1_22, %c1_23, %c0_24], %15 {strides = array<i32>} : memref<1x4x9x9x4xf32, #tpu.memory_space<vmem>>, vector<1x4x8x8x4xf32>,
    %cst_25 = arith.constant 0.000000e+00 : f32
    %17 = vector.broadcast %cst_25 : f32 to vector<1x8x8x4xf32>
    %c0_26 = arith.constant 0 : index
    %c3 = arith.constant 3 : index
    %c0_27 = arith.constant 0 : index
    %c0_28 = arith.constant 0 : index
    %c0_29 = arith.constant 0 : index
    %18 = vector.load %arg1[%c0_26, %c3, %c0_27, %c0_28, %c0_29] : memref<1x4x9x9x4xf32, #tpu.memory_space<vmem>>, vector<1x1x8x8x4xf32>
    %19 = vector.shape_cast %18 : vector<1x1x8x8x4xf32> to vector<1x8x8x4xf32>
    %c0_30 = arith.constant 0 : index
    %c0_31 = arith.constant 0 : index
    %c0_32 = arith.constant 0 : index
    %20 = vector.load %arg2[%c0_30, %c0_31, %c0_32] : memref<3x3x4xf32, #tpu.memory_space<vmem>>, vector<1x1x4xf32>
    %21 = vector.shape_cast %20 : vector<1x1x4xf32> to vector<4xf32>
    %22 = vector.shape_cast %21 : vector<4xf32> to vector<1x1x1x4xf32>
    %23 = vector.broadcast %22 : vector<1x1x1x4xf32> to vector<1x8x8x4xf32>
    %24 = arith.mulf %19, %23 : vector<1x8x8x4xf32>
    %25 = arith.addf %17, %24 : vector<1x8x8x4xf32>
    %c0_33 = arith.constant 0 : index
    %c2 = arith.constant 2 : index
    %c0_34 = arith.constant 0 : index
    %c1_35 = arith.constant 1 : index
    %c0_36 = arith.constant 0 : index
    %26 = vector.load %arg1[%c0_33, %c2, %c0_34, %c1_35, %c0_36] : memref<1x4x9x9x4xf32, #tpu.memory_space<vmem>>, vector<1x1x8x8x4xf32>
    %27 = vector.shape_cast %26 : vector<1x1x8x8x4xf32> to vector<1x8x8x4xf32>
    %c0_37 = arith.constant 0 : index
    %c1_38 = arith.constant 1 : index
    %c0_39 = arith.constant 0 : index
    %28 = vector.load %arg2[%c0_37, %c1_38, %c0_39] : memref<3x3x4xf32, #tpu.memory_space<vmem>>, vector<1x1x4xf32>
    %29 = vector.shape_cast %28 : vector<1x1x4xf32> to vector<4xf32>
    %30 = vector.shape_cast %29 : vector<4xf32> to vector<1x1x1x4xf32>
    %31 = vector.broadcast %30 : vector<1x1x1x4xf32> to vector<1x8x8x4xf32>
    %32 = arith.mulf %27, %31 : vector<1x8x8x4xf32>
    %33 = arith.addf %25, %32 : vector<1x8x8x4xf32>
    %c0_40 = arith.constant 0 : index
    %c3_41 = arith.constant 3 : index
    %c0_42 = arith.constant 0 : index
    %c1_43 = arith.constant 1 : index
    %c0_44 = arith.constant 0 : index
    %34 = vector.load %arg1[%c0_40, %c3_41, %c0_42, %c1_43, %c0_44] : memref<1x4x9x9x4xf32, #tpu.memory_space<vmem>>, vector<1x1x8x8x4xf32>
    %35 = vector.shape_cast %34 : vector<1x1x8x8x4xf32> to vector<1x8x8x4xf32>
    %c0_45 = arith.constant 0 : index
    %c2_46 = arith.constant 2 : index
    %c0_47 = arith.constant 0 : index
    %36 = vector.load %arg2[%c0_45, %c2_46, %c0_47] : memref<3x3x4xf32, #tpu.memory_space<vmem>>, vector<1x1x4xf32>
    %37 = vector.shape_cast %36 : vector<1x1x4xf32> to vector<4xf32>
    %38 = vector.shape_cast %37 : vector<4xf32> to vector<1x1x1x4xf32>
    %39 = vector.broadcast %38 : vector<1x1x1x4xf32> to vector<1x8x8x4xf32>
    %40 = arith.mulf %35, %39 : vector<1x8x8x4xf32>
    %41 = arith.addf %33, %40 : vector<1x8x8x4xf32>
    %c0_48 = arith.constant 0 : index
    %c1_49 = arith.constant 1 : index
    %c1_50 = arith.constant 1 : index
    %c0_51 = arith.constant 0 : index
    %c0_52 = arith.constant 0 : index
    %42 = vector.load %arg1[%c0_48, %c1_49, %c1_50, %c0_51, %c0_52] : memref<1x4x9x9x4xf32, #tpu.memory_space<vmem>>, vector<1x1x8x8x4xf32>
    %43 = vector.shape_cast %42 : vector<1x1x8x8x4xf32> to vector<1x8x8x4xf32>
    %c1_53 = arith.constant 1 : index
    %c0_54 = arith.constant 0 : index
    %c0_55 = arith.constant 0 : index
    %44 = vector.load %arg2[%c1_53, %c0_54, %c0_55] : memref<3x3x4xf32, #tpu.memory_space<vmem>>, vector<1x1x4xf32>
    %45 = vector.shape_cast %44 : vector<1x1x4xf32> to vector<4xf32>
    %46 = vector.shape_cast %45 : vector<4xf32> to vector<1x1x1x4xf32>
    %47 = vector.broadcast %46 : vector<1x1x1x4xf32> to vector<1x8x8x4xf32>
    %48 = arith.mulf %43, %47 : vector<1x8x8x4xf32>
    %49 = arith.addf %41, %48 : vector<1x8x8x4xf32>
    %c0_56 = arith.constant 0 : index
    %c0_57 = arith.constant 0 : index
    %c1_58 = arith.constant 1 : index
    %c1_59 = arith.constant 1 : index
    %c0_60 = arith.constant 0 : index
    %50 = vector.load %arg1[%c0_56, %c0_57, %c1_58, %c1_59, %c0_60] : memref<1x4x9x9x4xf32, #tpu.memory_space<vmem>>, vector<1x1x8x8x4xf32>
    %51 = vector.shape_cast %50 : vector<1x1x8x8x4xf32> to vector<1x8x8x4xf32>
    %c1_61 = arith.constant 1 : index
    %c1_62 = arith.constant 1 : index
    %c0_63 = arith.constant 0 : index
    %52 = vector.load %arg2[%c1_61, %c1_62, %c0_63] : memref<3x3x4xf32, #tpu.memory_space<vmem>>, vector<1x1x4xf32>
    %53 = vector.shape_cast %52 : vector<1x1x4xf32> to vector<4xf32>
    %54 = vector.shape_cast %53 : vector<4xf32> to vector<1x1x1x4xf32>
    %55 = vector.broadcast %54 : vector<1x1x1x4xf32> to vector<1x8x8x4xf32>
    %56 = arith.mulf %51, %55 : vector<1x8x8x4xf32>
    %57 = arith.addf %49, %56 : vector<1x8x8x4xf32>
    %c0_64 = arith.constant 0 : index
    %c1_65 = arith.constant 1 : index
    %c1_66 = arith.constant 1 : index
    %c1_67 = arith.constant 1 : index
    %c0_68 = arith.constant 0 : index
    %58 = vector.load %arg1[%c0_64, %c1_65, %c1_66, %c1_67, %c0_68] : memref<1x4x9x9x4xf32, #tpu.memory_space<vmem>>, vector<1x1x8x8x4xf32>
    %59 = vector.shape_cast %58 : vector<1x1x8x8x4xf32> to vector<1x8x8x4xf32>
    %c1_69 = arith.constant 1 : index
    %c2_70 = arith.constant 2 : index
    %c0_71 = arith.constant 0 : index
    %60 = vector.load %arg2[%c1_69, %c2_70, %c0_71] : memref<3x3x4xf32, #tpu.memory_space<vmem>>, vector<1x1x4xf32>
    %61 = vector.shape_cast %60 : vector<1x1x4xf32> to vector<4xf32>
    %62 = vector.shape_cast %61 : vector<4xf32> to vector<1x1x1x4xf32>
    %63 = vector.broadcast %62 : vector<1x1x1x4xf32> to vector<1x8x8x4xf32>
    %64 = arith.mulf %59, %63 : vector<1x8x8x4xf32>
    %65 = arith.addf %57, %64 : vector<1x8x8x4xf32>
    %c0_72 = arith.constant 0 : index
    %c3_73 = arith.constant 3 : index
    %c1_74 = arith.constant 1 : index
    %c0_75 = arith.constant 0 : index
    %c0_76 = arith.constant 0 : index
    %66 = vector.load %arg1[%c0_72, %c3_73, %c1_74, %c0_75, %c0_76] : memref<1x4x9x9x4xf32, #tpu.memory_space<vmem>>, vector<1x1x8x8x4xf32>
    %67 = vector.shape_cast %66 : vector<1x1x8x8x4xf32> to vector<1x8x8x4xf32>
    %c2_77 = arith.constant 2 : index
    %c0_78 = arith.constant 0 : index
    %c0_79 = arith.constant 0 : index
    %68 = vector.load %arg2[%c2_77, %c0_78, %c0_79] : memref<3x3x4xf32, #tpu.memory_space<vmem>>, vector<1x1x4xf32>
    %69 = vector.shape_cast %68 : vector<1x1x4xf32> to vector<4xf32>
    %70 = vector.shape_cast %69 : vector<4xf32> to vector<1x1x1x4xf32>
    %71 = vector.broadcast %70 : vector<1x1x1x4xf32> to vector<1x8x8x4xf32>
    %72 = arith.mulf %67, %71 : vector<1x8x8x4xf32>
    %73 = arith.addf %65, %72 : vector<1x8x8x4xf32>
    %c0_80 = arith.constant 0 : index
    %c2_81 = arith.constant 2 : index
    %c1_82 = arith.constant 1 : index
    %c1_83 = arith.constant 1 : index
    %c0_84 = arith.constant 0 : index
    %74 = vector.load %arg1[%c0_80, %c2_81, %c1_82, %c1_83, %c0_84] : memref<1x4x9x9x4xf32, #tpu.memory_space<vmem>>, vector<1x1x8x8x4xf32>
    %75 = vector.shape_cast %74 : vector<1x1x8x8x4xf32> to vector<1x8x8x4xf32>
    %c2_85 = arith.constant 2 : index
    %c1_86 = arith.constant 1 : index
    %c0_87 = arith.constant 0 : index
    %76 = vector.load %arg2[%c2_85, %c1_86, %c0_87] : memref<3x3x4xf32, #tpu.memory_space<vmem>>, vector<1x1x4xf32>
    %77 = vector.shape_cast %76 : vector<1x1x4xf32> to vector<4xf32>
    %78 = vector.shape_cast %77 : vector<4xf32> to vector<1x1x1x4xf32>
    %79 = vector.broadcast %78 : vector<1x1x1x4xf32> to vector<1x8x8x4xf32>
    %80 = arith.mulf %75, %79 : vector<1x8x8x4xf32>
    %81 = arith.addf %73, %80 : vector<1x8x8x4xf32>
    %c0_88 = arith.constant 0 : index
    %c3_89 = arith.constant 3 : index
    %c1_90 = arith.constant 1 : index
    %c1_91 = arith.constant 1 : index
    %c0_92 = arith.constant 0 : index
    %82 = vector.load %arg1[%c0_88, %c3_89, %c1_90, %c1_91, %c0_92] : memref<1x4x9x9x4xf32, #tpu.memory_space<vmem>>, vector<1x1x8x8x4xf32>
    %83 = vector.shape_cast %82 : vector<1x1x8x8x4xf32> to vector<1x8x8x4xf32>
    %c2_93 = arith.constant 2 : index
    %c2_94 = arith.constant 2 : index
    %c0_95 = arith.constant 0 : index
    %84 = vector.load %arg2[%c2_93, %c2_94, %c0_95] : memref<3x3x4xf32, #tpu.memory_space<vmem>>, vector<1x1x4xf32>
    %85 = vector.shape_cast %84 : vector<1x1x4xf32> to vector<4xf32>
    %86 = vector.shape_cast %85 : vector<4xf32> to vector<1x1x1x4xf32>
    %87 = vector.broadcast %86 : vector<1x1x1x4xf32> to vector<1x8x8x4xf32>
    %88 = arith.mulf %83, %87 : vector<1x8x8x4xf32>
    %89 = arith.addf %81, %88 : vector<1x8x8x4xf32>
    %cst_96 = arith.constant 0.000000e+00 : f32
    %90 = vector.broadcast %cst_96 : f32 to vector<1x8x8x4xf32>
    %c0_97 = arith.constant 0 : index
    %c3_98 = arith.constant 3 : index
    %c0_99 = arith.constant 0 : index
    %c0_100 = arith.constant 0 : index
    %c0_101 = arith.constant 0 : index
    %91 = vector.load %arg10[%c0_97, %c3_98, %c0_99, %c0_100, %c0_101] : memref<1x4x9x9x4xf32, #tpu.memory_space<vmem>>, vector<1x1x8x8x4xf32>
    %92 = vector.shape_cast %91 : vector<1x1x8x8x4xf32> to vector<1x8x8x4xf32>
    %c0_102 = arith.constant 0 : index
    %c0_103 = arith.constant 0 : index
    %c0_104 = arith.constant 0 : index
    %93 = vector.load %arg3[%c0_102, %c0_103, %c0_104] : memref<3x3x4xf32, #tpu.memory_space<vmem>>, vector<1x1x4xf32>
    %94 = vector.shape_cast %93 : vector<1x1x4xf32> to vector<4xf32>
    %95 = vector.shape_cast %94 : vector<4xf32> to vector<1x1x1x4xf32>
    %96 = vector.broadcast %95 : vector<1x1x1x4xf32> to vector<1x8x8x4xf32>
    %97 = arith.mulf %92, %96 : vector<1x8x8x4xf32>
    %98 = arith.addf %90, %97 : vector<1x8x8x4xf32>
    %c0_105 = arith.constant 0 : index
    %c2_106 = arith.constant 2 : index
    %c0_107 = arith.constant 0 : index
    %c1_108 = arith.constant 1 : index
    %c0_109 = arith.constant 0 : index
    %99 = vector.load %arg10[%c0_105, %c2_106, %c0_107, %c1_108, %c0_109] : memref<1x4x9x9x4xf32, #tpu.memory_space<vmem>>, vector<1x1x8x8x4xf32>
    %100 = vector.shape_cast %99 : vector<1x1x8x8x4xf32> to vector<1x8x8x4xf32>
    %c0_110 = arith.constant 0 : index
    %c1_111 = arith.constant 1 : index
    %c0_112 = arith.constant 0 : index
    %101 = vector.load %arg3[%c0_110, %c1_111, %c0_112] : memref<3x3x4xf32, #tpu.memory_space<vmem>>, vector<1x1x4xf32>
    %102 = vector.shape_cast %101 : vector<1x1x4xf32> to vector<4xf32>
    %103 = vector.shape_cast %102 : vector<4xf32> to vector<1x1x1x4xf32>
    %104 = vector.broadcast %103 : vector<1x1x1x4xf32> to vector<1x8x8x4xf32>
    %105 = arith.mulf %100, %104 : vector<1x8x8x4xf32>
    %106 = arith.addf %98, %105 : vector<1x8x8x4xf32>
    %c0_113 = arith.constant 0 : index
    %c3_114 = arith.constant 3 : index
    %c0_115 = arith.constant 0 : index
    %c1_116 = arith.constant 1 : index
    %c0_117 = arith.constant 0 : index
    %107 = vector.load %arg10[%c0_113, %c3_114, %c0_115, %c1_116, %c0_117] : memref<1x4x9x9x4xf32, #tpu.memory_space<vmem>>, vector<1x1x8x8x4xf32>
    %108 = vector.shape_cast %107 : vector<1x1x8x8x4xf32> to vector<1x8x8x4xf32>
    %c0_118 = arith.constant 0 : index
    %c2_119 = arith.constant 2 : index
    %c0_120 = arith.constant 0 : index
    %109 = vector.load %arg3[%c0_118, %c2_119, %c0_120] : memref<3x3x4xf32, #tpu.memory_space<vmem>>, vector<1x1x4xf32>
    %110 = vector.shape_cast %109 : vector<1x1x4xf32> to vector<4xf32>
    %111 = vector.shape_cast %110 : vector<4xf32> to vector<1x1x1x4xf32>
    %112 = vector.broadcast %111 : vector<1x1x1x4xf32> to vector<1x8x8x4xf32>
    %113 = arith.mulf %108, %112 : vector<1x8x8x4xf32>
    %114 = arith.addf %106, %113 : vector<1x8x8x4xf32>
    %c0_121 = arith.constant 0 : index
    %c1_122 = arith.constant 1 : index
    %c1_123 = arith.constant 1 : index
    %c0_124 = arith.constant 0 : index
    %c0_125 = arith.constant 0 : index
    %115 = vector.load %arg10[%c0_121, %c1_122, %c1_123, %c0_124, %c0_125] : memref<1x4x9x9x4xf32, #tpu.memory_space<vmem>>, vector<1x1x8x8x4xf32>
    %116 = vector.shape_cast %115 : vector<1x1x8x8x4xf32> to vector<1x8x8x4xf32>
    %c1_126 = arith.constant 1 : index
    %c0_127 = arith.constant 0 : index
    %c0_128 = arith.constant 0 : index
    %117 = vector.load %arg3[%c1_126, %c0_127, %c0_128] : memref<3x3x4xf32, #tpu.memory_space<vmem>>, vector<1x1x4xf32>
    %118 = vector.shape_cast %117 : vector<1x1x4xf32> to vector<4xf32>
    %119 = vector.shape_cast %118 : vector<4xf32> to vector<1x1x1x4xf32>
    %120 = vector.broadcast %119 : vector<1x1x1x4xf32> to vector<1x8x8x4xf32>
    %121 = arith.mulf %116, %120 : vector<1x8x8x4xf32>
    %122 = arith.addf %114, %121 : vector<1x8x8x4xf32>
    %c0_129 = arith.constant 0 : index
    %c0_130 = arith.constant 0 : index
    %c1_131 = arith.constant 1 : index
    %c1_132 = arith.constant 1 : index
    %c0_133 = arith.constant 0 : index
    %123 = vector.load %arg10[%c0_129, %c0_130, %c1_131, %c1_132, %c0_133] : memref<1x4x9x9x4xf32, #tpu.memory_space<vmem>>, vector<1x1x8x8x4xf32>
    %124 = vector.shape_cast %123 : vector<1x1x8x8x4xf32> to vector<1x8x8x4xf32>
    %c1_134 = arith.constant 1 : index
    %c1_135 = arith.constant 1 : index
    %c0_136 = arith.constant 0 : index
    %125 = vector.load %arg3[%c1_134, %c1_135, %c0_136] : memref<3x3x4xf32, #tpu.memory_space<vmem>>, vector<1x1x4xf32>
    %126 = vector.shape_cast %125 : vector<1x1x4xf32> to vector<4xf32>
    %127 = vector.shape_cast %126 : vector<4xf32> to vector<1x1x1x4xf32>
    %128 = vector.broadcast %127 : vector<1x1x1x4xf32> to vector<1x8x8x4xf32>
    %129 = arith.mulf %124, %128 : vector<1x8x8x4xf32>
    %130 = arith.addf %122, %129 : vector<1x8x8x4xf32>
    %c0_137 = arith.constant 0 : index
    %c1_138 = arith.constant 1 : index
    %c1_139 = arith.constant 1 : index
    %c1_140 = arith.constant 1 : index
    %c0_141 = arith.constant 0 : index
    %131 = vector.load %arg10[%c0_137, %c1_138, %c1_139, %c1_140, %c0_141] : memref<1x4x9x9x4xf32, #tpu.memory_space<vmem>>, vector<1x1x8x8x4xf32>
    %132 = vector.shape_cast %131 : vector<1x1x8x8x4xf32> to vector<1x8x8x4xf32>
    %c1_142 = arith.constant 1 : index
    %c2_143 = arith.constant 2 : index
    %c0_144 = arith.constant 0 : index
    %133 = vector.load %arg3[%c1_142, %c2_143, %c0_144] : memref<3x3x4xf32, #tpu.memory_space<vmem>>, vector<1x1x4xf32>
    %134 = vector.shape_cast %133 : vector<1x1x4xf32> to vector<4xf32>
    %135 = vector.shape_cast %134 : vector<4xf32> to vector<1x1x1x4xf32>
    %136 = vector.broadcast %135 : vector<1x1x1x4xf32> to vector<1x8x8x4xf32>
    %137 = arith.mulf %132, %136 : vector<1x8x8x4xf32>
    %138 = arith.addf %130, %137 : vector<1x8x8x4xf32>
    %c0_145 = arith.constant 0 : index
    %c3_146 = arith.constant 3 : index
    %c1_147 = arith.constant 1 : index
    %c0_148 = arith.constant 0 : index
    %c0_149 = arith.constant 0 : index
    %139 = vector.load %arg10[%c0_145, %c3_146, %c1_147, %c0_148, %c0_149] : memref<1x4x9x9x4xf32, #tpu.memory_space<vmem>>, vector<1x1x8x8x4xf32>
    %140 = vector.shape_cast %139 : vector<1x1x8x8x4xf32> to vector<1x8x8x4xf32>
    %c2_150 = arith.constant 2 : index
    %c0_151 = arith.constant 0 : index
    %c0_152 = arith.constant 0 : index
    %141 = vector.load %arg3[%c2_150, %c0_151, %c0_152] : memref<3x3x4xf32, #tpu.memory_space<vmem>>, vector<1x1x4xf32>
    %142 = vector.shape_cast %141 : vector<1x1x4xf32> to vector<4xf32>
    %143 = vector.shape_cast %142 : vector<4xf32> to vector<1x1x1x4xf32>
    %144 = vector.broadcast %143 : vector<1x1x1x4xf32> to vector<1x8x8x4xf32>
    %145 = arith.mulf %140, %144 : vector<1x8x8x4xf32>
    %146 = arith.addf %138, %145 : vector<1x8x8x4xf32>
    %c0_153 = arith.constant 0 : index
    %c2_154 = arith.constant 2 : index
    %c1_155 = arith.constant 1 : index
    %c1_156 = arith.constant 1 : index
    %c0_157 = arith.constant 0 : index
    %147 = vector.load %arg10[%c0_153, %c2_154, %c1_155, %c1_156, %c0_157] : memref<1x4x9x9x4xf32, #tpu.memory_space<vmem>>, vector<1x1x8x8x4xf32>
    %148 = vector.shape_cast %147 : vector<1x1x8x8x4xf32> to vector<1x8x8x4xf32>
    %c2_158 = arith.constant 2 : index
    %c1_159 = arith.constant 1 : index
    %c0_160 = arith.constant 0 : index
    %149 = vector.load %arg3[%c2_158, %c1_159, %c0_160] : memref<3x3x4xf32, #tpu.memory_space<vmem>>, vector<1x1x4xf32>
    %150 = vector.shape_cast %149 : vector<1x1x4xf32> to vector<4xf32>
    %151 = vector.shape_cast %150 : vector<4xf32> to vector<1x1x1x4xf32>
    %152 = vector.broadcast %151 : vector<1x1x1x4xf32> to vector<1x8x8x4xf32>
    %153 = arith.mulf %148, %152 : vector<1x8x8x4xf32>
    %154 = arith.addf %146, %153 : vector<1x8x8x4xf32>
    %c0_161 = arith.constant 0 : index
    %c3_162 = arith.constant 3 : index
    %c1_163 = arith.constant 1 : index
    %c1_164 = arith.constant 1 : index
    %c0_165 = arith.constant 0 : index
    %155 = vector.load %arg10[%c0_161, %c3_162, %c1_163, %c1_164, %c0_165] : memref<1x4x9x9x4xf32, #tpu.memory_space<vmem>>, vector<1x1x8x8x4xf32>
    %156 = vector.shape_cast %155 : vector<1x1x8x8x4xf32> to vector<1x8x8x4xf32>
    %c2_166 = arith.constant 2 : index
    %c2_167 = arith.constant 2 : index
    %c0_168 = arith.constant 0 : index
    %157 = vector.load %arg3[%c2_166, %c2_167, %c0_168] : memref<3x3x4xf32, #tpu.memory_space<vmem>>, vector<1x1x4xf32>
    %158 = vector.shape_cast %157 : vector<1x1x4xf32> to vector<4xf32>
    %159 = vector.shape_cast %158 : vector<4xf32> to vector<1x1x1x4xf32>
    %160 = vector.broadcast %159 : vector<1x1x1x4xf32> to vector<1x8x8x4xf32>
    %161 = arith.mulf %156, %160 : vector<1x8x8x4xf32>
    %162 = arith.addf %154, %161 : vector<1x8x8x4xf32>
    %163 = vector.shape_cast %89 : vector<1x8x8x4xf32> to vector<64x4xf32>
    %c0_169 = arith.constant 0 : index
    %c0_170 = arith.constant 0 : index
    %164 = vector.load %arg6[%c0_169, %c0_170] : memref<4x8xf32, #tpu.memory_space<vmem>>, vector<4x8xf32>
    %cst_171 = arith.constant dense<0.000000e+00> : vector<64x8xf32>
    %165 = tpu.matmul %163, %164, %cst_171 {dimension_numbers = #tpu.dot_dimension_numbers<[1], [0], [0], [1], [0, 0, 1, 1], [], []>, precision = #tpu.contract_precision<fp32>} : vector<64x4xf32>, vector<4x8xf32>, vector<64x8xf32> -> vector<64x8xf32>
    %166 = vector.shape_cast %162 : vector<1x8x8x4xf32> to vector<64x4xf32>
    %c0_172 = arith.constant 0 : index
    %c0_173 = arith.constant 0 : index
    %167 = vector.load %arg7[%c0_172, %c0_173] : memref<4x8xf32, #tpu.memory_space<vmem>>, vector<4x8xf32>
    %cst_174 = arith.constant dense<0.000000e+00> : vector<64x8xf32>
    %168 = tpu.matmul %166, %167, %cst_174 {dimension_numbers = #tpu.dot_dimension_numbers<[1], [0], [0], [1], [0, 0, 1, 1], [], []>, precision = #tpu.contract_precision<fp32>} : vector<64x4xf32>, vector<4x8xf32>, vector<64x8xf32> -> vector<64x8xf32>
    %169 = arith.addf %165, %168 : vector<64x8xf32>
    %c0_175 = arith.constant 0 : index
    %c0_176 = arith.constant 0 : index
    %170 = vector.load %arg8[%c0_175, %c0_176] : memref<1x8xf32, #tpu.memory_space<vmem>>, vector<1x8xf32>
    %171 = vector.shape_cast %170 : vector<1x8xf32> to vector<8xf32>
    %172 = vector.shape_cast %171 : vector<8xf32> to vector<1x8xf32>
    %173 = vector.broadcast %172 : vector<1x8xf32> to vector<64x8xf32>
    %174 = arith.addf %169, %173 : vector<64x8xf32>
    %cst_177 = arith.constant 0.000000e+00 : f32
    %175 = vector.broadcast %cst_177 : f32 to vector<64x8xf32>
    %176 = arith.maximumf %174, %175 : vector<64x8xf32>
    %177 = vector.shape_cast %176 : vector<64x8xf32> to vector<1x8x8x8xf32>
    %c0_178 = arith.constant 0 : index
    %c0_179 = arith.constant 0 : index
    %c0_180 = arith.constant 0 : index
    %c0_181 = arith.constant 0 : index
    %178 = vector.load %arg9[%c0_178, %c0_179, %c0_180, %c0_181] : memref<1x8x8x8xf32, #tpu.memory_space<vmem>>, vector<1x8x8x8xf32>
    tpu.vector_store %arg9[%c0_178, %c0_179, %c0_180, %c0_181], %177 {strides = array<i32>} : memref<1x8x8x8xf32, #tpu.memory_space<vmem>>, vector<1x8x8x8xf32>,
    return
  }
  func.func @transform_0(%arg0: i32) -> (i32, i32, i32, i32, i32) {
    %c0_i32 = arith.constant 0 : i32
    %c0_i32_0 = arith.constant 0 : i32
    %c0_i32_1 = arith.constant 0 : i32
    %c0_i32_2 = arith.constant 0 : i32
    %c0_i32_3 = arith.constant 0 : i32
    return %arg0, %c0_i32, %c0_i32_0, %c0_i32_1, %c0_i32_2 : i32, i32, i32, i32, i32
  }
  func.func @transform_1(%arg0: i32) -> (i32, i32, i32) {
    %c0_i32 = arith.constant 0 : i32
    %c0_i32_0 = arith.constant 0 : i32
    %c0_i32_1 = arith.constant 0 : i32
    %c0_i32_2 = arith.constant 0 : i32
    return %c0_i32, %c0_i32_0, %c0_i32_1 : i32, i32, i32
  }
  func.func @transform_2(%arg0: i32) -> (i32, i32, i32) {
    %c0_i32 = arith.constant 0 : i32
    %c0_i32_0 = arith.constant 0 : i32
    %c0_i32_1 = arith.constant 0 : i32
    %c0_i32_2 = arith.constant 0 : i32
    return %c0_i32, %c0_i32_0, %c0_i32_1 : i32, i32, i32
  }
  func.func @transform_3(%arg0: i32) -> (i32, i32) {
    %c0_i32 = arith.constant 0 : i32
    %c0_i32_0 = arith.constant 0 : i32
    %c0_i32_1 = arith.constant 0 : i32
    return %c0_i32, %c0_i32_0 : i32, i32
  }
  func.func @transform_4(%arg0: i32) -> (i32, i32) {
    %c0_i32 = arith.constant 0 : i32
    %c0_i32_0 = arith.constant 0 : i32
    %c0_i32_1 = arith.constant 0 : i32
    return %c0_i32, %c0_i32_0 : i32, i32
  }
  func.func @transform_5(%arg0: i32) -> (i32, i32) {
    %c0_i32 = arith.constant 0 : i32
    %c0_i32_0 = arith.constant 0 : i32
    %c0_i32_1 = arith.constant 0 : i32
    return %c0_i32, %c0_i32_0 : i32, i32
  }
  func.func @transform_6(%arg0: i32) -> (i32, i32) {
    %c0_i32 = arith.constant 0 : i32
    %c0_i32_0 = arith.constant 0 : i32
    %c0_i32_1 = arith.constant 0 : i32
    return %c0_i32, %c0_i32_0 : i32, i32
  }
  func.func @transform_7(%arg0: i32) -> (i32, i32) {
    %c0_i32 = arith.constant 0 : i32
    %c0_i32_0 = arith.constant 0 : i32
    %c0_i32_1 = arith.constant 0 : i32
    return %c0_i32, %c0_i32_0 : i32, i32
  }
  func.func @transform_8(%arg0: i32) -> (i32, i32, i32, i32) {
    %c0_i32 = arith.constant 0 : i32
    %c0_i32_0 = arith.constant 0 : i32
    %c0_i32_1 = arith.constant 0 : i32
    %c0_i32_2 = arith.constant 0 : i32
    return %arg0, %c0_i32, %c0_i32_0, %c0_i32_1 : i32, i32, i32, i32
  }
}

</mosaic_0001>

<llo_original>
// kernel: tpu_custom_call.1
$region0: #{tpu_custom_call.1}
  #allocation0 [shape = 'u32[]', space=smem, size = 0x4, offset = 0x4, fixed_abs, tag = 'smem constant byte address 0x4 - core index']
  #allocation1 [shape = 'u32[144,128]{1,0:T(1,128)}', space=vmem, size = 0x12000, scoped, tag = 'internal scratch']
  #allocation2 [shape = 'f32[1,4,9,9,4]{4,3,2,1,0:T(8,128)}', space=vmem, size = 0x48000, scoped, tag = 'scratch operand']
  %s0 = inlined_call_operand.vmem [shape: f32[2,4,9,9,4], index: 0, kind: input, shape index: {}]
  %s1 = inlined_call_operand.vmem [shape: f32[3,3,4], index: 1, kind: input, shape index: {}]
  %s2 = inlined_call_operand.vmem [shape: f32[3,3,4], index: 2, kind: input, shape index: {}]
  %s3 = inlined_call_operand.vmem [shape: f32[4,4], index: 3, kind: input, shape index: {}]
  %s4 = inlined_call_operand.vmem [shape: f32[1,4], index: 4, kind: input, shape index: {}]
  %s5 = inlined_call_operand.vmem [shape: f32[4,8], index: 5, kind: input, shape index: {}]
  %s6 = inlined_call_operand.vmem [shape: f32[4,8], index: 6, kind: input, shape index: {}]
  %s7 = inlined_call_operand.vmem [shape: f32[1,8], index: 7, kind: input, shape index: {}]
  %s8 = inlined_call_operand.hbm [shape: f32[2,8,8,8], index: 8, kind: output, shape index: {}]
  %s9 = sld [smem:[#allocation0]]
  $region65: #{tpu_custom_call.1} parent=0
    _
  %s11 = ssub.s32 1, %s9
  %s12 = scalar_select 0, %s11, %s9
  $region1: #{tpu_custom_call.1} parent=0
    #allocation3 [shape = 'u8[65536]{0}', space=vmem, size = 0x10000, scoped, tag = 'output window, operand 0']
    #allocation4 [shape = 's32[2]{0}', space=sflag, size = 0x8, scoped, tag = 'scoped memory for tpu_custom_call.1']
    %13 = vsyncpa [#allocation4], 0
    %s14 = scalar_lea.sflag [#allocation4], 1
    %15 = vsyncpa %s14, 0
    loop: start=0, step=1, limit=4
    $region2: #{tpu_custom_call.1} parent=1 // loop_pre_header
      _
    $region3: #{tpu_custom_call.1} parent=1 // loop_header
      %s17 = sphi 0, %s21
      %p18 = scmp.ge.s32.totalorder %s17, 4
      %s27 = sphi 0, %s29
      %s30 = sphi 0, %s27
      %s31 = sphi 0, %s30
      %s47 = sphi 0, %s31
      %s51 = sphi 0, %s51
      %s53 = sphi 0, %s51
      %s54 = sphi 0, %s53
      %s68 = sphi 0, %s54
      %s72 = sphi 0, %s72
      %s74 = sphi 0, %s72
      %s75 = sphi 0, %s74
      %s89 = sphi 0, %s75
      %s93 = sphi 0, %s93
      %s95 = sphi 0, %s93
      %s96 = sphi 0, %s95
      %s110 = sphi 0, %s96
      %s114 = sphi 0, %s114
      %s116 = sphi 0, %s114
      %s117 = sphi 0, %s116
      %s131 = sphi 0, %s117
      %s135 = sphi 0, %s135
      %s137 = sphi 0, %s135
      %s138 = sphi 0, %s137
      %s152 = sphi 0, %s138
      %s156 = sphi 0, %s156
      %s158 = sphi 0, %s156
      %s159 = sphi 0, %s158
      %s173 = sphi 0, %s159
      %s177 = sphi 0, %s177
      %s179 = sphi 0, %s177
      %s180 = sphi 0, %s179
      %s194 = sphi 0, %s180
      %s200 = sphi 0, %s202
      %s203 = sphi 0, %s200
      %s204 = sphi 0, %s203
      %s220 = sphi 0, %s204
    $region4: #{tpu_custom_call.1} parent=1 // loop_header_branch
      %20 = sbr.rel (%p18) target = $region8
    $region5: #{tpu_custom_call.1} parent=1 // loop_body
      %s22 = ssub.s32 %s17, 1
      %s23 = ssub.s32 %s17, 2
      %s24 = sadd.s32 %s17, 1
      %s25 = ssub.s32 %s17, %s24
      %p26 = scmp.eq.s32.totalorder %s25, 0
      %s28 = sadd.s32 %s27, 1
      %s29 = scalar_select %p26, %s27, %s28
      %p32 = pneg %p26
      %p33 = scmp.eq.s32.totalorder %s17, 1
      %p34 = por %p32, %p33
      %p35 = scmp.ne.s32.totalorder %s27, %s30
      %p36 = scmp.eq.s32.totalorder %s17, 0
      %p37 = por %p35, %p36
      %p38 = scmp.ne.s32.totalorder %s27, %s30
      %p39 = scmp.eq.s32.totalorder %s22, 1
      %p40 = por %p38, %p39
      %p41 = scmp.ne.s32.totalorder %s30, %s31
      %p42 = scmp.eq.s32.totalorder %s22, 0
      %p43 = por %p41, %p42
      %p44 = scmp.ne.s32.totalorder %s30, %s31
      %p45 = scmp.eq.s32.totalorder %s23, 1
      %p46 = por %p44, %p45
      %p48 = scmp.ne.s32.totalorder %s31, %s47
      %p49 = scmp.eq.s32.totalorder %s23, 0
      %p50 = por %p48, %p49
      %s52 = sadd.s32 %s51, 1
      %p55 = scmp.eq.s32.totalorder %s17, 1
      %p56 = scmp.ne.s32.totalorder %s51, %s53
      %p57 = scmp.eq.s32.totalorder %s17, 0
      %p58 = por %p56, %p57
      %p59 = scmp.ne.s32.totalorder %s51, %s53
      %p60 = scmp.eq.s32.totalorder %s22, 1
      %p61 = por %p59, %p60
      %p62 = scmp.ne.s32.totalorder %s53, %s54
      %p63 = scmp.eq.s32.totalorder %s22, 0
      %p64 = por %p62, %p63
      %p65 = scmp.ne.s32.totalorder %s53, %s54
      %p66 = scmp.eq.s32.totalorder %s23, 1
      %p67 = por %p65, %p66
      %p69 = scmp.ne.s32.totalorder %s54, %s68
      %p70 = scmp.eq.s32.totalorder %s23, 0
      %p71 = por %p69, %p70
      %s73 = sadd.s32 %s72, 1
      %p76 = scmp.eq.s32.totalorder %s17, 1
      %p77 = scmp.ne.s32.totalorder %s72, %s74
      %p78 = scmp.eq.s32.totalorder %s17, 0
      %p79 = por %p77, %p78
      %p80 = scmp.ne.s32.totalorder %s72, %s74
      %p81 = scmp.eq.s32.totalorder %s22, 1
      %p82 = por %p80, %p81
      %p83 = scmp.ne.s32.totalorder %s74, %s75
      %p84 = scmp.eq.s32.totalorder %s22, 0
      %p85 = por %p83, %p84
      %p86 = scmp.ne.s32.totalorder %s74, %s75
      %p87 = scmp.eq.s32.totalorder %s23, 1
      %p88 = por %p86, %p87
      %p90 = scmp.ne.s32.totalorder %s75, %s89
      %p91 = scmp.eq.s32.totalorder %s23, 0
      %p92 = por %p90, %p91
      %s94 = sadd.s32 %s93, 1
      %p97 = scmp.eq.s32.totalorder %s17, 1
      %p98 = scmp.ne.s32.totalorder %s93, %s95
      %p99 = scmp.eq.s32.totalorder %s17, 0
      %p100 = por %p98, %p99
      %p101 = scmp.ne.s32.totalorder %s93, %s95
      %p102 = scmp.eq.s32.totalorder %s22, 1
      %p103 = por %p101, %p102
      %p104 = scmp.ne.s32.totalorder %s95, %s96
      %p105 = scmp.eq.s32.totalorder %s22, 0
      %p106 = por %p104, %p105
      %p107 = scmp.ne.s32.totalorder %s95, %s96
      %p108 = scmp.eq.s32.totalorder %s23, 1
      %p109 = por %p107, %p108
      %p111 = scmp.ne.s32.totalorder %s96, %s110
      %p112 = scmp.eq.s32.totalorder %s23, 0
      %p113 = por %p111, %p112
      %s115 = sadd.s32 %s114, 1
      %p118 = scmp.eq.s32.totalorder %s17, 1
      %p119 = scmp.ne.s32.totalorder %s114, %s116
      %p120 = scmp.eq.s32.totalorder %s17, 0
      %p121 = por %p119, %p120
      %p122 = scmp.ne.s32.totalorder %s114, %s116
      %p123 = scmp.eq.s32.totalorder %s22, 1
      %p124 = por %p122, %p123
      %p125 = scmp.ne.s32.totalorder %s116, %s117
      %p126 = scmp.eq.s32.totalorder %s22, 0
      %p127 = por %p125, %p126
      %p128 = scmp.ne.s32.totalorder %s116, %s117
      %p129 = scmp.eq.s32.totalorder %s23, 1
      %p130 = por %p128, %p129
      %p132 = scmp.ne.s32.totalorder %s117, %s131
      %p133 = scmp.eq.s32.totalorder %s23, 0
      %p134 = por %p132, %p133
      %s136 = sadd.s32 %s135, 1
      %p139 = scmp.eq.s32.totalorder %s17, 1
      %p140 = scmp.ne.s32.totalorder %s135, %s137
      %p141 = scmp.eq.s32.totalorder %s17, 0
      %p142 = por %p140, %p141
      %p143 = scmp.ne.s32.totalorder %s135, %s137
      %p144 = scmp.eq.s32.totalorder %s22, 1
      %p145 = por %p143, %p144
      %p146 = scmp.ne.s32.totalorder %s137, %s138
      %p147 = scmp.eq.s32.totalorder %s22, 0
      %p148 = por %p146, %p147
      %p149 = scmp.ne.s32.totalorder %s137, %s138
      %p150 = scmp.eq.s32.totalorder %s23, 1
      %p151 = por %p149, %p150
      %p153 = scmp.ne.s32.totalorder %s138, %s152
      %p154 = scmp.eq.s32.totalorder %s23, 0
      %p155 = por %p153, %p154
      %s157 = sadd.s32 %s156, 1
      %p160 = scmp.eq.s32.totalorder %s17, 1
      %p161 = scmp.ne.s32.totalorder %s156, %s158
      %p162 = scmp.eq.s32.totalorder %s17, 0
      %p163 = por %p161, %p162
      %p164 = scmp.ne.s32.totalorder %s156, %s158
      %p165 = scmp.eq.s32.totalorder %s22, 1
      %p166 = por %p164, %p165
      %p167 = scmp.ne.s32.totalorder %s158, %s159
      %p168 = scmp.eq.s32.totalorder %s22, 0
      %p169 = por %p167, %p168
      %p170 = scmp.ne.s32.totalorder %s158, %s159
      %p171 = scmp.eq.s32.totalorder %s23, 1
      %p172 = por %p170, %p171
      %p174 = scmp.ne.s32.totalorder %s159, %s173
      %p175 = scmp.eq.s32.totalorder %s23, 0
      %p176 = por %p174, %p175
      %s178 = sadd.s32 %s177, 1
      %p181 = scmp.eq.s32.totalorder %s17, 1
      %p182 = scmp.ne.s32.totalorder %s177, %s179
      %p183 = scmp.eq.s32.totalorder %s17, 0
      %p184 = por %p182, %p183
      %p185 = scmp.ne.s32.totalorder %s177, %s179
      %p186 = scmp.eq.s32.totalorder %s22, 1
      %p187 = por %p185, %p186
      %p188 = scmp.ne.s32.totalorder %s179, %s180
      %p189 = scmp.eq.s32.totalorder %s22, 0
      %p190 = por %p188, %p189
      %p191 = scmp.ne.s32.totalorder %s179, %s180
      %p192 = scmp.eq.s32.totalorder %s23, 1
      %p193 = por %p191, %p192
      %p195 = scmp.ne.s32.totalorder %s180, %s194
      %p196 = scmp.eq.s32.totalorder %s23, 0
      %p197 = por %p195, %p196
      %s198 = ssub.s32 %s17, %s24
      %p199 = scmp.eq.s32.totalorder %s198, 0
      %s201 = sadd.s32 %s200, 1
      %s202 = scalar_select %p199, %s200, %s201
      %p205 = pneg %p199
      %p206 = scmp.eq.s32.totalorder %s17, 1
      %p207 = por %p205, %p206
      %p208 = scmp.ne.s32.totalorder %s200, %s203
      %p209 = scmp.eq.s32.totalorder %s17, 0
      %p210 = por %p208, %p209
      %p211 = scmp.ne.s32.totalorder %s200, %s203
      %p212 = scmp.eq.s32.totalorder %s22, 1
      %p213 = por %p211, %p212
      %p214 = scmp.ne.s32.totalorder %s203, %s204
      %p215 = scmp.eq.s32.totalorder %s22, 0
      %p216 = por %p214, %p215
      %p217 = scmp.ne.s32.totalorder %s203, %s204
      %p218 = scmp.eq.s32.totalorder %s23, 1
      %p219 = por %p217, %p218
      %p221 = scmp.ne.s32.totalorder %s204, %s220
      %p222 = scmp.eq.s32.totalorder %s23, 0
      %p223 = por %p221, %p222
      %p224 = scmp.le.s32.totalorder 1, %s17
      %p225 = scmp.lt.s32.totalorder %s17, 3
      %p226 = pnand %p224, %p225
      %p227 = pneg %p226
      // Predicated region
      $region9: #{tpu_custom_call.1} parent=5 // pred_check
        _
      $region10: #{tpu_custom_call.1} parent=5 // pred_check_branch
        %229 = sbr.rel (%p226) target = $region12
      $region11: #{tpu_custom_call.1} parent=5 // pred_region
        %s230 = ssub.s32 %s17, 1
        // Predicated region
        $region13: #{tpu_custom_call.1} parent=11 // pred_check
          %p231 = pneg %p64
        $region14: #{tpu_custom_call.1} parent=11 // pred_check_branch
          %233 = sbr.rel (%p231) target = $region16
        $region15: #{tpu_custom_call.1} parent=11 // pred_region
          _
        $region16: #{tpu_custom_call.1} parent=11 // pred_fallthru
          _
        // Predicated region
        $region17: #{tpu_custom_call.1} parent=11 // pred_check
          %p234 = pneg %p85
        $region18: #{tpu_custom_call.1} parent=11 // pred_check_branch
          %236 = sbr.rel (%p234) target = $region20
        $region19: #{tpu_custom_call.1} parent=11 // pred_region
          _
        $region20: #{tpu_custom_call.1} parent=11 // pred_fallthru
          _
        // Predicated region
        $region21: #{tpu_custom_call.1} parent=11 // pred_check
          %p237 = pneg %p106
        $region22: #{tpu_custom_call.1} parent=11 // pred_check_branch
          %239 = sbr.rel (%p237) target = $region24
        $region23: #{tpu_custom_call.1} parent=11 // pred_region
          _
        $region24: #{tpu_custom_call.1} parent=11 // pred_fallthru
          _
        // Predicated region
        $region25: #{tpu_custom_call.1} parent=11 // pred_check
          %p240 = pneg %p127
        $region26: #{tpu_custom_call.1} parent=11 // pred_check_branch
          %242 = sbr.rel (%p240) target = $region28
        $region27: #{tpu_custom_call.1} parent=11 // pred_region
          _
        $region28: #{tpu_custom_call.1} parent=11 // pred_fallthru
          _
        // Predicated region
        $region29: #{tpu_custom_call.1} parent=11 // pred_check
          %p243 = pneg %p148
        $region30: #{tpu_custom_call.1} parent=11 // pred_check_branch
          %245 = sbr.rel (%p243) target = $region32
        $region31: #{tpu_custom_call.1} parent=11 // pred_region
          _
        $region32: #{tpu_custom_call.1} parent=11 // pred_fallthru
          _
        // Predicated region
        $region33: #{tpu_custom_call.1} parent=11 // pred_check
          %p246 = pneg %p169
        $region34: #{tpu_custom_call.1} parent=11 // pred_check_branch
          %248 = sbr.rel (%p246) target = $region36
        $region35: #{tpu_custom_call.1} parent=11 // pred_region
          _
        $region36: #{tpu_custom_call.1} parent=11 // pred_fallthru
          _
        // Predicated region
        $region37: #{tpu_custom_call.1} parent=11 // pred_check
          %p249 = pneg %p190
        $region38: #{tpu_custom_call.1} parent=11 // pred_check_branch
          %251 = sbr.rel (%p249) target = $region40
        $region39: #{tpu_custom_call.1} parent=11 // pred_region
          _
        $region40: #{tpu_custom_call.1} parent=11 // pred_fallthru
          _
      $region12: #{tpu_custom_call.1} parent=5 // pred_fallthru
        _
      %p252 = scmp.lt.s32.totalorder %s17, 2
      // Predicated region
      $region41: #{tpu_custom_call.1} parent=5 // pred_check
        %p253 = pneg %p252
      $region42: #{tpu_custom_call.1} parent=5 // pred_check_branch
        %255 = sbr.rel (%p253) target = $region44
      $region43: #{tpu_custom_call.1} parent=5 // pred_region
        // Predicated region
        $region45: #{tpu_custom_call.1} parent=43 // pred_check
          %p256 = pneg %p37
        $region46: #{tpu_custom_call.1} parent=43 // pred_check_branch
          %258 = sbr.rel (%p256) target = $region48
        $region47: #{tpu_custom_call.1} parent=43 // pred_region
          %p259 = scmp.lt.s32.totalorder %s17, 1
          %s260 = scalar_select %p259, %s17, 1
          %s261 = smul.addr %s260, 72
          %s262 = smul.addr %s261, 8
          %s263 = scalar_lea.vmem %s0, %s262
        $region48: #{tpu_custom_call.1} parent=43 // pred_fallthru
          _
      $region44: #{tpu_custom_call.1} parent=5 // pred_fallthru
        _
      %p264 = scmp.le.s32.totalorder 1, %s17
      %p265 = scmp.lt.s32.totalorder %s17, 3
      %p266 = pnand %p264, %p265
      %p267 = pneg %p266
      // Predicated region
      $region49: #{tpu_custom_call.1} parent=5 // pred_check
        _
      $region50: #{tpu_custom_call.1} parent=5 // pred_check_branch
        %269 = sbr.rel (%p266) target = $region52
      $region51: #{tpu_custom_call.1} parent=5 // pred_region
        %s270 = ssub.s32 %s17, 1
        %p271 = scmp.lt.s32.totalorder %s22, 1
        %s272 = scalar_select %p271, %s22, 1
        %s273 = smul.addr %s272, 72
        %s274 = smul.addr %s273, 8
        %s275 = scalar_lea.vmem %s0, %s274
        %p276 = pneg %p43
        %p277 = pneg %p40
        %p278 = pneg %p64
        %p279 = pneg %p61
        %p280 = pneg %p85
        %p281 = pneg %p82
        %p282 = pneg %p106
        %p283 = pneg %p103
        %p284 = pneg %p127
        %p285 = pneg %p124
        %p286 = pneg %p148
        %p287 = pneg %p145
        %p288 = pneg %p169
        %p289 = pneg %p166
        %p290 = pneg %p190
        %p291 = pneg %p187
        %p292 = pneg %p216
        %p293 = pneg %p213
        %s294 = sand.u32 %s203, 1
        %s295 = scalar_lea.sflag [#allocation4], %s294
        %s296 = sand.u32 %s203, 1
        %s297 = smul.addr %s296, 64
        %s298 = scalar_lea.vmem [#allocation3], %s297
        %p299 = scmp.lt.s32.totalorder %s22, 1
        %s300 = scalar_select %p299, %s22, 1
        %s301 = smul.addr %s300, 72
        %s302 = smul.addr %s301, 8
        %s303 = scalar_lea.vmem %s0, %s302
        %s304 = scalar_lea.vmem %s303, 16
        %v305 = vld [vmem:[%s304 + $0x1] sm:$0xff]
        %v306 = vld [vmem:[%s304 + $0x11] sm:$0xff]
        %v307 = vld [vmem:[%s304 + $0x21] sm:$0xff]
        %v308 = vld [vmem:[%s304 + $0x31] sm:$0xff]
        %v309 = vld [vmem:[%s304 + $0x41] sm:$0xff]
        %v310 = vld [vmem:[%s304 + $0x51] sm:$0xff]
        %v311 = vld [vmem:[%s304 + $0x61] sm:$0xff]
        %v312 = vld [vmem:[%s304 + $0x71] sm:$0xff]
        %v313 = vld [vmem:[%s304 + $0x91] sm:$0xff]
        %v314 = vld [vmem:[%s304 + $0xa1] sm:$0xff]
        %v315 = vld [vmem:[%s304 + $0xb1] sm:$0xff]
        %v316 = vld [vmem:[%s304 + $0xc1] sm:$0xff]
        %v317 = vld [vmem:[%s304 + $0xd1] sm:$0xff]
        %v318 = vld [vmem:[%s304 + $0xe1] sm:$0xff]
        %v319 = vld [vmem:[%s304 + $0xf1] sm:$0xff]
        %v320 = vld [vmem:[%s304 + $0x101] sm:$0xff]
        %v321 = vld [vmem:[%s304 + $0x121] sm:$0xff]
        %v322 = vld [vmem:[%s304 + $0x131] sm:$0xff]
        %v323 = vld [vmem:[%s304 + $0x141] sm:$0xff]
        %v324 = vld [vmem:[%s304 + $0x151] sm:$0xff]
        %v325 = vld [vmem:[%s304 + $0x161] sm:$0xff]
        %v326 = vld [vmem:[%s304 + $0x171] sm:$0xff]
        %v327 = vld [vmem:[%s304 + $0x181] sm:$0xff]
        %v328 = vld [vmem:[%s304 + $0x191] sm:$0xff]
        %v329 = vld [vmem:[%s304 + $0x1b1] sm:$0xff]
        %v330 = vld [vmem:[%s304 + $0x1c1] sm:$0xff]
        %v331 = vld [vmem:[%s304 + $0x1d1] sm:$0xff]
        %v332 = vld [vmem:[%s304 + $0x1e1] sm:$0xff]
        %v333 = vld [vmem:[%s304 + $0x1f1] sm:$0xff]
        %v334 = vld [vmem:[%s304 + $0x201] sm:$0xff]
        %v335 = vld [vmem:[%s304 + $0x211] sm:$0xff]
        %v336 = vld [vmem:[%s304 + $0x221] sm:$0xff]
        %v337 = vld [vmem:[%s3] sm:$0xf]
        %v338 = vld [vmem:[%s4] sm:$0x1]
        %v340 = vlaneseq
        %v341 = vshrl.u32 %v340, 7
        %v342 = vsub.s32 0, %v341
        %v343 = vrot.slane %v338, %v342
        %vm345 = vcmask 31744
        %v347 = vsel %vm345, %v305, 0
        %v350 = vsel %vm345, %v306, 0
        %v353 = vsel %vm345, %v307, 0
        %v356 = vsel %vm345, %v308, 0
        %v359 = vsel %vm345, %v309, 0
        %v362 = vsel %vm345, %v310, 0
        %v365 = vsel %vm345, %v311, 0
        %v368 = vsel %vm345, %v312, 0
        %v371 = vsel %vm345, %v313, 0
        %v374 = vsel %vm345, %v314, 0
        %v377 = vsel %vm345, %v315, 0
        %v380 = vsel %vm345, %v316, 0
        %v383 = vsel %vm345, %v317, 0
        %v386 = vsel %vm345, %v318, 0
        %v389 = vsel %vm345, %v319, 0
        %v392 = vsel %vm345, %v320, 0
        %v395 = vsel %vm345, %v321, 0
        %v398 = vsel %vm345, %v322, 0
        %v401 = vsel %vm345, %v323, 0
        %v404 = vsel %vm345, %v324, 0
        %v407 = vsel %vm345, %v325, 0
        %v410 = vsel %vm345, %v326, 0
        %v413 = vsel %vm345, %v327, 0
        %v416 = vsel %vm345, %v328, 0
        %v419 = vsel %vm345, %v329, 0
        %v422 = vsel %vm345, %v330, 0
        %v425 = vsel %vm345, %v331, 0
        %v428 = vsel %vm345, %v332, 0
        %v431 = vsel %vm345, %v333, 0
        %v434 = vsel %vm345, %v334, 0
        %v437 = vsel %vm345, %v335, 0
        %v440 = vsel %vm345, %v336, 0
        %vm442 = vcmask 1043456
        %v444 = vsel %vm442, %v337, 0
        %446 = vmatprep.subr.mxu0 0.0
        %v447 = vand.u32 %v444, 4294901760
        %448 = vmatpush1.msra.mxu0 %v447
        %449 = vmatprep.subr.mxu0 0.0
        %450 = vmatpush1.msra.mxu0 0.0
        %451 = vmatprep.subr.mxu0 0.0
        %452 = vmatpush1.msra.mxu0 0.0
        %453 = vmatprep.subr.mxu0 0.0
        %454 = vmatpush1.msra.mxu0 0.0
        %455 = vmatprep.subr.mxu0 0.0
        %456 = vmatpush1.msra.mxu0 0.0
        %457 = vmatprep.subr.mxu0 0.0
        %458 = vmatpush1.msra.mxu0 0.0
        %459 = vmatprep.subr.mxu0 0.0
        %460 = vmatpush1.msra.mxu0 0.0
        %461 = vmatprep.subr.mxu0 0.0
        %462 = vmatpush1.msra.mxu0 0.0
        %463 = vmatprep.subr.mxu0 0.0
        %464 = vmatpush1.msra.mxu0 0.0
        %465 = vmatprep.subr.mxu0 0.0
        %466 = vmatpush1.msra.mxu0 0.0
        %467 = vmatprep.subr.mxu0 0.0
        %468 = vmatpush1.msra.mxu0 0.0
        %469 = vmatprep.subr.mxu0 0.0
        %470 = vmatpush1.msra.mxu0 0.0
        %471 = vmatprep.subr.mxu0 0.0
        %472 = vmatpush1.msra.mxu0 0.0
        %473 = vmatprep.subr.mxu0 0.0
        %474 = vmatpush1.msra.mxu0 0.0
        %475 = vmatprep.subr.mxu0 0.0
        %476 = vmatpush1.msra.mxu0 0.0
        %477 = vmatprep.subr.mxu0 0.0
        %478 = vmatpush1.msra.mxu0 0.0
        %479 = vmatprep.subr.mxu0 0.0
        %480 = vmatpush1.msra.mxu0 0.0
        %481 = vmatprep.subr.mxu0 0.0
        %482 = vmatpush1.msra.mxu0 0.0
        %483 = vmatprep.subr.mxu0 0.0
        %484 = vmatpush1.msra.mxu0 0.0
        %485 = vmatprep.subr.mxu0 0.0
        %486 = vmatpush1.msra.mxu0 0.0
        %487 = vmatprep.subr.mxu0 0.0
        %488 = vmatpush1.msra.mxu0 0.0
        %489 = vmatprep.subr.mxu0 0.0
        %490 = vmatpush1.msra.mxu0 0.0
        %491 = vmatprep.subr.mxu0 0.0
        %492 = vmatpush1.msra.mxu0 0.0
        %493 = vmatprep.subr.mxu0 0.0
        %494 = vmatpush1.msra.mxu0 0.0
        %495 = vmatprep.subr.mxu0 0.0
        %496 = vmatpush1.msra.mxu0 0.0
        %497 = vmatprep.subr.mxu0 0.0
        %498 = vmatpush1.msra.mxu0 0.0
        %499 = vmatprep.subr.mxu0 0.0
        %500 = vmatpush1.msra.mxu0 0.0
        %501 = vmatprep.subr.mxu0 0.0
        %502 = vmatpush1.msra.mxu0 0.0
        %503 = vmatprep.subr.mxu0 0.0
        %504 = vmatpush1.msra.mxu0 0.0
        %505 = vmatprep.subr.mxu0 0.0
        %506 = vmatpush1.msra.mxu0 0.0
        %507 = vmatprep.subr.mxu0 0.0
        %508 = vmatpush1.msra.mxu0 0.0
        %509 = vmatprep.subr.mxu0 0.0
        %510 = vmatpush1.msra.mxu0 0.0
        %511 = vmatprep.mubr.f32.mxu0 0.0
        %v512 = vand.u32 %v347, 4294901760
        %v513 = vsub.f32 %v347, %v512
        %v514 = vand.u32 %v513, 4294901760
        %v515 = vsub.f32 %v513, %v514
        %v516 = vand.u32 %v515, 4294901760
        %517 = vmatmul.mubr.f32.gmra.mrb[0].mxu0 %v516
        %v518 = vpop.f32.mrb[0].mxu0
        %v519 = vadd.f32 %v343, %v518
        %v520 = vpop.f32.mrb[0].mxu0
        %521 = vmatprep.mubr.f32.mxu0 0.0
        %v522 = vand.u32 %v350, 4294901760
        %v523 = vsub.f32 %v350, %v522
        %v524 = vand.u32 %v523, 4294901760
        %v525 = vsub.f32 %v523, %v524
        %v526 = vand.u32 %v525, 4294901760
        %527 = vmatmul.mubr.f32.gmra.mrb[0].mxu0 %v526
        %v528 = vpop.f32.mrb[0].mxu0
        %v529 = vadd.f32 %v343, %v528
        %v530 = vpop.f32.mrb[0].mxu0
        %531 = vmatprep.mubr.f32.mxu0 0.0
        %v532 = vand.u32 %v353, 4294901760
        %v533 = vsub.f32 %v353, %v532
        %v534 = vand.u32 %v533, 4294901760
        %v535 = vsub.f32 %v533, %v534
        %v536 = vand.u32 %v535, 4294901760
        %537 = vmatmul.mubr.f32.gmra.mrb[0].mxu0 %v536
        %v538 = vpop.f32.mrb[0].mxu0
        %v539 = vadd.f32 %v343, %v538
        %v540 = vpop.f32.mrb[0].mxu0
        %541 = vmatprep.mubr.f32.mxu0 0.0
        %v542 = vand.u32 %v356, 4294901760
        %v543 = vsub.f32 %v356, %v542
        %v544 = vand.u32 %v543, 4294901760
        %v545 = vsub.f32 %v543, %v544
        %v546 = vand.u32 %v545, 4294901760
        %547 = vmatmul.mubr.f32.gmra.mrb[0].mxu0 %v546
        %v548 = vpop.f32.mrb[0].mxu0
        %v549 = vadd.f32 %v343, %v548
        %v550 = vpop.f32.mrb[0].mxu0
        %551 = vmatprep.mubr.f32.mxu0 0.0
        %v552 = vand.u32 %v359, 4294901760
        %v553 = vsub.f32 %v359, %v552
        %v554 = vand.u32 %v553, 4294901760
        %v555 = vsub.f32 %v553, %v554
        %v556 = vand.u32 %v555, 4294901760
        %557 = vmatmul.mubr.f32.gmra.mrb[0].mxu0 %v556
        %v558 = vpop.f32.mrb[0].mxu0
        %v559 = vadd.f32 %v343, %v558
        %v560 = vpop.f32.mrb[0].mxu0
        %561 = vmatprep.mubr.f32.mxu0 0.0
        %v562 = vand.u32 %v362, 4294901760
        %v563 = vsub.f32 %v362, %v562
        %v564 = vand.u32 %v563, 4294901760
        %v565 = vsub.f32 %v563, %v564
        %v566 = vand.u32 %v565, 4294901760
        %567 = vmatmul.mubr.f32.gmra.mrb[0].mxu0 %v566
        %v568 = vpop.f32.mrb[0].mxu0
        %v569 = vadd.f32 %v343, %v568
        %v570 = vpop.f32.mrb[0].mxu0
        %571 = vmatprep.mubr.f32.mxu0 0.0
        %v572 = vand.u32 %v365, 4294901760
        %v573 = vsub.f32 %v365, %v572
        %v574 = vand.u32 %v573, 4294901760
        %v575 = vsub.f32 %v573, %v574
        %v576 = vand.u32 %v575, 4294901760
        %577 = vmatmul.mubr.f32.gmra.mrb[0].mxu0 %v576
        %v578 = vpop.f32.mrb[0].mxu0
        %v579 = vadd.f32 %v343, %v578
        %v580 = vpop.f32.mrb[0].mxu0
        %581 = vmatprep.mubr.f32.mxu0 0.0
        %v582 = vand.u32 %v368, 4294901760
        %v583 = vsub.f32 %v368, %v582
        %v584 = vand.u32 %v583, 4294901760
        %v585 = vsub.f32 %v583, %v584
        %v586 = vand.u32 %v585, 4294901760
        %587 = vmatmul.mubr.f32.gmra.mrb[0].mxu0 %v586
        %v588 = vpop.f32.mrb[0].mxu0
        %v589 = vadd.f32 %v343, %v588
        %v590 = vpop.f32.mrb[0].mxu0
        %591 = vmatprep.mubr.f32.mxu0 0.0
        %v592 = vand.u32 %v371, 4294901760
        %v593 = vsub.f32 %v371, %v592
        %v594 = vand.u32 %v593, 4294901760
        %v595 = vsub.f32 %v593, %v594
        %v596 = vand.u32 %v595, 4294901760
        %597 = vmatmul.mubr.f32.gmra.mrb[0].mxu0 %v596
        %v598 = vpop.f32.mrb[0].mxu0
        %v599 = vadd.f32 %v343, %v598
        %v600 = vpop.f32.mrb[0].mxu0
        %601 = vmatprep.mubr.f32.mxu0 0.0
        %v602 = vand.u32 %v374, 4294901760
        %v603 = vsub.f32 %v374, %v602
        %v604 = vand.u32 %v603, 4294901760
        %v605 = vsub.f32 %v603, %v604
        %v606 = vand.u32 %v605, 4294901760
        %607 = vmatmul.mubr.f32.gmra.mrb[0].mxu0 %v606
        %v608 = vpop.f32.mrb[0].mxu0
        %v609 = vadd.f32 %v343, %v608
        %v610 = vpop.f32.mrb[0].mxu0
        %611 = vmatprep.mubr.f32.mxu0 0.0
        %v612 = vand.u32 %v377, 4294901760
        %v613 = vsub.f32 %v377, %v612
        %v614 = vand.u32 %v613, 4294901760
        %v615 = vsub.f32 %v613, %v614
        %v616 = vand.u32 %v615, 4294901760
        %617 = vmatmul.mubr.f32.gmra.mrb[0].mxu0 %v616
        %v618 = vpop.f32.mrb[0].mxu0
        %v619 = vadd.f32 %v343, %v618
        %v620 = vpop.f32.mrb[0].mxu0
        %621 = vmatprep.mubr.f32.mxu0 0.0
        %v622 = vand.u32 %v380, 4294901760
        %v623 = vsub.f32 %v380, %v622
        %v624 = vand.u32 %v623, 4294901760
        %v625 = vsub.f32 %v623, %v624
        %v626 = vand.u32 %v625, 4294901760
        %627 = vmatmul.mubr.f32.gmra.mrb[0].mxu0 %v626
        %v628 = vpop.f32.mrb[0].mxu0
        %v629 = vadd.f32 %v343, %v628
        %v630 = vpop.f32.mrb[0].mxu0
        %631 = vmatprep.mubr.f32.mxu0 0.0
        %v632 = vand.u32 %v383, 4294901760
        %v633 = vsub.f32 %v383, %v632
        %v634 = vand.u32 %v633, 4294901760
        %v635 = vsub.f32 %v633, %v634
        %v636 = vand.u32 %v635, 4294901760
        %637 = vmatmul.mubr.f32.gmra.mrb[0].mxu0 %v636
        %v638 = vpop.f32.mrb[0].mxu0
        %v639 = vadd.f32 %v343, %v638
        %v640 = vpop.f32.mrb[0].mxu0
        %641 = vmatprep.mubr.f32.mxu0 0.0
        %v642 = vand.u32 %v386, 4294901760
        %v643 = vsub.f32 %v386, %v642
        %v644 = vand.u32 %v643, 4294901760
        %v645 = vsub.f32 %v643, %v644
        %v646 = vand.u32 %v645, 4294901760
        %647 = vmatmul.mubr.f32.gmra.mrb[0].mxu0 %v646
        %v648 = vpop.f32.mrb[0].mxu0
        %v649 = vadd.f32 %v343, %v648
        %v650 = vpop.f32.mrb[0].mxu0
        %651 = vmatprep.mubr.f32.mxu0 0.0
        %v652 = vand.u32 %v389, 4294901760
        %v653 = vsub.f32 %v389, %v652
        %v654 = vand.u32 %v653, 4294901760
        %v655 = vsub.f32 %v653, %v654
        %v656 = vand.u32 %v655, 4294901760
        %657 = vmatmul.mubr.f32.gmra.mrb[0].mxu0 %v656
        %v658 = vpop.f32.mrb[0].mxu0
        %v659 = vadd.f32 %v343, %v658
        %v660 = vpop.f32.mrb[0].mxu0
        %661 = vmatprep.mubr.f32.mxu0 0.0
        %v662 = vand.u32 %v392, 4294901760
        %v663 = vsub.f32 %v392, %v662
        %v664 = vand.u32 %v663, 4294901760
        %v665 = vsub.f32 %v663, %v664
        %v666 = vand.u32 %v665, 4294901760
        %667 = vmatmul.mubr.f32.gmra.mrb[0].mxu0 %v666
        %v668 = vpop.f32.mrb[0].mxu0
        %v669 = vadd.f32 %v343, %v668
        %v670 = vpop.f32.mrb[0].mxu0
        %671 = vmatprep.mubr.f32.mxu0 0.0
        %v672 = vand.u32 %v395, 4294901760
        %v673 = vsub.f32 %v395, %v672
        %v674 = vand.u32 %v673, 4294901760
        %v675 = vsub.f32 %v673, %v674
        %v676 = vand.u32 %v675, 4294901760
        %677 = vmatmul.mubr.f32.gmra.mrb[0].mxu0 %v676
        %v678 = vpop.f32.mrb[0].mxu0
        %v679 = vadd.f32 %v343, %v678
        %v680 = vpop.f32.mrb[0].mxu0
        %681 = vmatprep.mubr.f32.mxu0 0.0
        %v682 = vand.u32 %v398, 4294901760
        %v683 = vsub.f32 %v398, %v682
        %v684 = vand.u32 %v683, 4294901760
        %v685 = vsub.f32 %v683, %v684
        %v686 = vand.u32 %v685, 4294901760
        %687 = vmatmul.mubr.f32.gmra.mrb[0].mxu0 %v686
        %v688 = vpop.f32.mrb[0].mxu0
        %v689 = vadd.f32 %v343, %v688
        %v690 = vpop.f32.mrb[0].mxu0
        %691 = vmatprep.mubr.f32.mxu0 0.0
        %v692 = vand.u32 %v401, 4294901760
        %v693 = vsub.f32 %v401, %v692
        %v694 = vand.u32 %v693, 4294901760
        %v695 = vsub.f32 %v693, %v694
        %v696 = vand.u32 %v695, 4294901760
        %697 = vmatmul.mubr.f32.gmra.mrb[0].mxu0 %v696
        %v698 = vpop.f32.mrb[0].mxu0
        %v699 = vadd.f32 %v343, %v698
        %v700 = vpop.f32.mrb[0].mxu0
        %701 = vmatprep.mubr.f32.mxu0 0.0
        %v702 = vand.u32 %v404, 4294901760
        %v703 = vsub.f32 %v404, %v702
        %v704 = vand.u32 %v703, 4294901760
        %v705 = vsub.f32 %v703, %v704
        %v706 = vand.u32 %v705, 4294901760
        %707 = vmatmul.mubr.f32.gmra.mrb[0].mxu0 %v706
        %v708 = vpop.f32.mrb[0].mxu0
        %v709 = vadd.f32 %v343, %v708
        %v710 = vpop.f32.mrb[0].mxu0
        %711 = vmatprep.mubr.f32.mxu0 0.0
        %v712 = vand.u32 %v407, 4294901760
        %v713 = vsub.f32 %v407, %v712
        %v714 = vand.u32 %v713, 4294901760
        %v715 = vsub.f32 %v713, %v714
        %v716 = vand.u32 %v715, 4294901760
        %717 = vmatmul.mubr.f32.gmra.mrb[0].mxu0 %v716
        %v718 = vpop.f32.mrb[0].mxu0
        %v719 = vadd.f32 %v343, %v718
        %v720 = vpop.f32.mrb[0].mxu0
        %721 = vmatprep.mubr.f32.mxu0 0.0
        %v722 = vand.u32 %v410, 4294901760
        %v723 = vsub.f32 %v410, %v722
        %v724 = vand.u32 %v723, 4294901760
        %v725 = vsub.f32 %v723, %v724
        %v726 = vand.u32 %v725, 4294901760
        %727 = vmatmul.mubr.f32.gmra.mrb[0].mxu0 %v726
        %v728 = vpop.f32.mrb[0].mxu0
        %v729 = vadd.f32 %v343, %v728
        %v730 = vpop.f32.mrb[0].mxu0
        %731 = vmatprep.mubr.f32.mxu0 0.0
        %v732 = vand.u32 %v413, 4294901760
        %v733 = vsub.f32 %v413, %v732
        %v734 = vand.u32 %v733, 4294901760
        %v735 = vsub.f32 %v733, %v734
        %v736 = vand.u32 %v735, 4294901760
        %737 = vmatmul.mubr.f32.gmra.mrb[0].mxu0 %v736
        %v738 = vpop.f32.mrb[0].mxu0
        %v739 = vadd.f32 %v343, %v738
        %v740 = vpop.f32.mrb[0].mxu0
        %741 = vmatprep.mubr.f32.mxu0 0.0
        %v742 = vand.u32 %v416, 4294901760
        %v743 = vsub.f32 %v416, %v742
        %v744 = vand.u32 %v743, 4294901760
        %v745 = vsub.f32 %v743, %v744
        %v746 = vand.u32 %v745, 4294901760
        %747 = vmatmul.mubr.f32.gmra.mrb[0].mxu0 %v746
        %v748 = vpop.f32.mrb[0].mxu0
        %v749 = vadd.f32 %v343, %v748
        %v750 = vpop.f32.mrb[0].mxu0
        %751 = vmatprep.mubr.f32.mxu0 0.0
        %v752 = vand.u32 %v419, 4294901760
        %v753 = vsub.f32 %v419, %v752
        %v754 = vand.u32 %v753, 4294901760
        %v755 = vsub.f32 %v753, %v754
        %v756 = vand.u32 %v755, 4294901760
        %757 = vmatmul.mubr.f32.gmra.mrb[0].mxu0 %v756
        %v758 = vpop.f32.mrb[0].mxu0
        %v759 = vadd.f32 %v343, %v758
        %v760 = vpop.f32.mrb[0].mxu0
        %761 = vmatprep.mubr.f32.mxu0 0.0
        %v762 = vand.u32 %v422, 4294901760
        %v763 = vsub.f32 %v422, %v762
        %v764 = vand.u32 %v763, 4294901760
        %v765 = vsub.f32 %v763, %v764
        %v766 = vand.u32 %v765, 4294901760
        %767 = vmatmul.mubr.f32.gmra.mrb[0].mxu0 %v766
        %v768 = vpop.f32.mrb[0].mxu0
        %v769 = vadd.f32 %v343, %v768
        %v770 = vpop.f32.mrb[0].mxu0
        %771 = vmatprep.mubr.f32.mxu0 0.0
        %v772 = vand.u32 %v425, 4294901760
        %v773 = vsub.f32 %v425, %v772
        %v774 = vand.u32 %v773, 4294901760
        %v775 = vsub.f32 %v773, %v774
        %v776 = vand.u32 %v775, 4294901760
        %777 = vmatmul.mubr.f32.gmra.mrb[0].mxu0 %v776
        %v778 = vpop.f32.mrb[0].mxu0
        %v779 = vadd.f32 %v343, %v778
        %v780 = vpop.f32.mrb[0].mxu0
        %781 = vmatprep.mubr.f32.mxu0 0.0
        %v782 = vand.u32 %v428, 4294901760
        %v783 = vsub.f32 %v428, %v782
        %v784 = vand.u32 %v783, 4294901760
        %v785 = vsub.f32 %v783, %v784
        %v786 = vand.u32 %v785, 4294901760
        %787 = vmatmul.mubr.f32.gmra.mrb[0].mxu0 %v786
        %v788 = vpop.f32.mrb[0].mxu0
        %v789 = vadd.f32 %v343, %v788
        %v790 = vpop.f32.mrb[0].mxu0
        %791 = vmatprep.mubr.f32.mxu0 0.0
        %v792 = vand.u32 %v431, 4294901760
        %v793 = vsub.f32 %v431, %v792
        %v794 = vand.u32 %v793, 4294901760
        %v795 = vsub.f32 %v793, %v794
        %v796 = vand.u32 %v795, 4294901760
        %797 = vmatmul.mubr.f32.gmra.mrb[0].mxu0 %v796
        %v798 = vpop.f32.mrb[0].mxu0
        %v799 = vadd.f32 %v343, %v798
        %v800 = vpop.f32.mrb[0].mxu0
        %801 = vmatprep.mubr.f32.mxu0 0.0
        %v802 = vand.u32 %v434, 4294901760
        %v803 = vsub.f32 %v434, %v802
        %v804 = vand.u32 %v803, 4294901760
        %v805 = vsub.f32 %v803, %v804
        %v806 = vand.u32 %v805, 4294901760
        %807 = vmatmul.mubr.f32.gmra.mrb[0].mxu0 %v806
        %v808 = vpop.f32.mrb[0].mxu0
        %v809 = vadd.f32 %v343, %v808
        %v810 = vpop.f32.mrb[0].mxu0
        %811 = vmatprep.mubr.f32.mxu0 0.0
        %v812 = vand.u32 %v437, 4294901760
        %v813 = vsub.f32 %v437, %v812
        %v814 = vand.u32 %v813, 4294901760
        %v815 = vsub.f32 %v813, %v814
        %v816 = vand.u32 %v815, 4294901760
        %817 = vmatmul.mubr.f32.gmra.mrb[0].mxu0 %v816
        %v818 = vpop.f32.mrb[0].mxu0
        %v819 = vadd.f32 %v343, %v818
        %v820 = vpop.f32.mrb[0].mxu0
        %821 = vmatprep.mubr.f32.mxu0 0.0
        %v822 = vand.u32 %v440, 4294901760
        %v823 = vsub.f32 %v440, %v822
        %v824 = vand.u32 %v823, 4294901760
        %v825 = vsub.f32 %v823, %v824
        %v826 = vand.u32 %v825, 4294901760
        %827 = vmatmul.mubr.f32.gmra.mrb[0].mxu0 %v826
        %v828 = vpop.f32.mrb[0].mxu0
        %v829 = vadd.f32 %v343, %v828
        %v830 = vpop.f32.mrb[0].mxu0
        %831 = vdwg.mxu0
        %832 = vmatprep.subr.mxu0 0.0
        %v833 = vand.u32 %v444, 4294901760
        %v834 = vsub.f32 %v444, %v833
        %v835 = vand.u32 %v834, 4294901760
        %v836 = vsub.f32 %v834, %v835
        %v837 = vand.u32 %v836, 4294901760
        %838 = vmatpush1.msra.mxu0 %v837
        %839 = vmatprep.subr.mxu0 0.0
        %840 = vmatpush1.msra.mxu0 0.0
        %841 = vmatprep.subr.mxu0 0.0
        %842 = vmatpush1.msra.mxu0 0.0
        %843 = vmatprep.subr.mxu0 0.0
        %844 = vmatpush1.msra.mxu0 0.0
        %845 = vmatprep.subr.mxu0 0.0
        %846 = vmatpush1.msra.mxu0 0.0
        %847 = vmatprep.subr.mxu0 0.0
        %848 = vmatpush1.msra.mxu0 0.0
        %849 = vmatprep.subr.mxu0 0.0
        %850 = vmatpush1.msra.mxu0 0.0
        %851 = vmatprep.subr.mxu0 0.0
        %852 = vmatpush1.msra.mxu0 0.0
        %853 = vmatprep.subr.mxu0 0.0
        %854 = vmatpush1.msra.mxu0 0.0
        %855 = vmatprep.subr.mxu0 0.0
        %856 = vmatpush1.msra.mxu0 0.0
        %857 = vmatprep.subr.mxu0 0.0
        %858 = vmatpush1.msra.mxu0 0.0
        %859 = vmatprep.subr.mxu0 0.0
        %860 = vmatpush1.msra.mxu0 0.0
        %861 = vmatprep.subr.mxu0 0.0
        %862 = vmatpush1.msra.mxu0 0.0
        %863 = vmatprep.subr.mxu0 0.0
        %864 = vmatpush1.msra.mxu0 0.0
        %865 = vmatprep.subr.mxu0 0.0
        %866 = vmatpush1.msra.mxu0 0.0
        %867 = vmatprep.subr.mxu0 0.0
        %868 = vmatpush1.msra.mxu0 0.0
        %869 = vmatprep.subr.mxu0 0.0
        %870 = vmatpush1.msra.mxu0 0.0
        %871 = vmatprep.subr.mxu0 0.0
        %872 = vmatpush1.msra.mxu0 0.0
        %873 = vmatprep.subr.mxu0 0.0
        %874 = vmatpush1.msra.mxu0 0.0
        %875 = vmatprep.subr.mxu0 0.0
        %876 = vmatpush1.msra.mxu0 0.0
        %877 = vmatprep.subr.mxu0 0.0
        %878 = vmatpush1.msra.mxu0 0.0
        %879 = vmatprep.subr.mxu0 0.0
        %880 = vmatpush1.msra.mxu0 0.0
        %881 = vmatprep.subr.mxu0 0.0
        %882 = vmatpush1.msra.mxu0 0.0
        %883 = vmatprep.subr.mxu0 0.0
        %884 = vmatpush1.msra.mxu0 0.0
        %885 = vmatprep.subr.mxu0 0.0
        %886 = vmatpush1.msra.mxu0 0.0
        %887 = vmatprep.subr.mxu0 0.0
        %888 = vmatpush1.msra.mxu0 0.0
        %889 = vmatprep.subr.mxu0 0.0
        %890 = vmatpush1.msra.mxu0 0.0
        %891 = vmatprep.subr.mxu0 0.0
        %892 = vmatpush1.msra.mxu0 0.0
        %893 = vmatprep.subr.mxu0 0.0
        %894 = vmatpush1.msra.mxu0 0.0
        %895 = vmatprep.subr.mxu0 0.0
        %896 = vmatpush1.msra.mxu0 0.0
        %897 = vmatprep.subr.mxu0 0.0
        %898 = vmatpush1.msra.mxu0 0.0
        %899 = vmatprep.subr.mxu0 0.0
        %900 = vmatpush1.msra.mxu0 0.0
        %901 = vmatprep.mubr.f32.mxu0 0.0
        %v902 = vand.u32 %v347, 4294901760
        %903 = vmatmul.mubr.f32.gmra.mrb[0].mxu0 %v902
        %v904 = vpop.f32.mrb[0].mxu0
        %v905 = vadd.f32 %v519, %v904
        %v906 = vpop.f32.mrb[0].mxu0
        %907 = vmatprep.mubr.f32.mxu0 0.0
        %v908 = vand.u32 %v350, 4294901760
        %909 = vmatmul.mubr.f32.gmra.mrb[0].mxu0 %v908
        %v910 = vpop.f32.mrb[0].mxu0
        %v911 = vadd.f32 %v529, %v910
        %v912 = vpop.f32.mrb[0].mxu0
        %913 = vmatprep.mubr.f32.mxu0 0.0
        %v914 = vand.u32 %v353, 4294901760
        %915 = vmatmul.mubr.f32.gmra.mrb[0].mxu0 %v914
        %v916 = vpop.f32.mrb[0].mxu0
        %v917 = vadd.f32 %v539, %v916
        %v918 = vpop.f32.mrb[0].mxu0
        %919 = vmatprep.mubr.f32.mxu0 0.0
        %v920 = vand.u32 %v356, 4294901760
        %921 = vmatmul.mubr.f32.gmra.mrb[0].mxu0 %v920
        %v922 = vpop.f32.mrb[0].mxu0
        %v923 = vadd.f32 %v549, %v922
        %v924 = vpop.f32.mrb[0].mxu0
        %925 = vmatprep.mubr.f32.mxu0 0.0
        %v926 = vand.u32 %v359, 4294901760
        %927 = vmatmul.mubr.f32.gmra.mrb[0].mxu0 %v926
        %v928 = vpop.f32.mrb[0].mxu0
        %v929 = vadd.f32 %v559, %v928
        %v930 = vpop.f32.mrb[0].mxu0
        %931 = vmatprep.mubr.f32.mxu0 0.0
        %v932 = vand.u32 %v362, 4294901760
        %933 = vmatmul.mubr.f32.gmra.mrb[0].mxu0 %v932
        %v934 = vpop.f32.mrb[0].mxu0
        %v935 = vadd.f32 %v569, %v934
        %v936 = vpop.f32.mrb[0].mxu0
        %937 = vmatprep.mubr.f32.mxu0 0.0
        %v938 = vand.u32 %v365, 4294901760
        %939 = vmatmul.mubr.f32.gmra.mrb[0].mxu0 %v938
        %v940 = vpop.f32.mrb[0].mxu0
        %v941 = vadd.f32 %v579, %v940
        %v942 = vpop.f32.mrb[0].mxu0
        %943 = vmatprep.mubr.f32.mxu0 0.0
        %v944 = vand.u32 %v368, 4294901760
        %945 = vmatmul.mubr.f32.gmra.mrb[0].mxu0 %v944
        %v946 = vpop.f32.mrb[0].mxu0
        %v947 = vadd.f32 %v589, %v946
        %v948 = vpop.f32.mrb[0].mxu0
        %949 = vmatprep.mubr.f32.mxu0 0.0
        %v950 = vand.u32 %v371, 4294901760
        %951 = vmatmul.mubr.f32.gmra.mrb[0].mxu0 %v950
        %v952 = vpop.f32.mrb[0].mxu0
        %v953 = vadd.f32 %v599, %v952
        %v954 = vpop.f32.mrb[0].mxu0
        %955 = vmatprep.mubr.f32.mxu0 0.0
        %v956 = vand.u32 %v374, 4294901760
        %957 = vmatmul.mubr.f32.gmra.mrb[0].mxu0 %v956
        %v958 = vpop.f32.mrb[0].mxu0
        %v959 = vadd.f32 %v609, %v958
        %v960 = vpop.f32.mrb[0].mxu0
        %961 = vmatprep.mubr.f32.mxu0 0.0
        %v962 = vand.u32 %v377, 4294901760
        %963 = vmatmul.mubr.f32.gmra.mrb[0].mxu0 %v962
        %v964 = vpop.f32.mrb[0].mxu0
        %v965 = vadd.f32 %v619, %v964
        %v966 = vpop.f32.mrb[0].mxu0
        %967 = vmatprep.mubr.f32.mxu0 0.0
        %v968 = vand.u32 %v380, 4294901760
        %969 = vmatmul.mubr.f32.gmra.mrb[0].mxu0 %v968
        %v970 = vpop.f32.mrb[0].mxu0
        %v971 = vadd.f32 %v629, %v970
        %v972 = vpop.f32.mrb[0].mxu0
        %973 = vmatprep.mubr.f32.mxu0 0.0
        %v974 = vand.u32 %v383, 4294901760
        %975 = vmatmul.mubr.f32.gmra.mrb[0].mxu0 %v974
        %v976 = vpop.f32.mrb[0].mxu0
        %v977 = vadd.f32 %v639, %v976
        %v978 = vpop.f32.mrb[0].mxu0
        %979 = vmatprep.mubr.f32.mxu0 0.0
        %v980 = vand.u32 %v386, 4294901760
        %981 = vmatmul.mubr.f32.gmra.mrb[0].mxu0 %v980
        %v982 = vpop.f32.mrb[0].mxu0
        %v983 = vadd.f32 %v649, %v982
        %v984 = vpop.f32.mrb[0].mxu0
        %985 = vmatprep.mubr.f32.mxu0 0.0
        %v986 = vand.u32 %v389, 4294901760
        %987 = vmatmul.mubr.f32.gmra.mrb[0].mxu0 %v986
        %v988 = vpop.f32.mrb[0].mxu0
        %v989 = vadd.f32 %v659, %v988
        %v990 = vpop.f32.mrb[0].mxu0
        %991 = vmatprep.mubr.f32.mxu0 0.0
        %v992 = vand.u32 %v392, 4294901760
        %993 = vmatmul.mubr.f32.gmra.mrb[0].mxu0 %v992
        %v994 = vpop.f32.mrb[0].mxu0
        %v995 = vadd.f32 %v669, %v994
        %v996 = vpop.f32.mrb[0].mxu0
        %997 = vmatprep.mubr.f32.mxu0 0.0
        %v998 = vand.u32 %v395, 4294901760
        %999 = vmatmul.mubr.f32.gmra.mrb[0].mxu0 %v998
        %v1000 = vpop.f32.mrb[0].mxu0
        %v1001 = vadd.f32 %v679, %v1000
        %v1002 = vpop.f32.mrb[0].mxu0
        %1003 = vmatprep.mubr.f32.mxu0 0.0
        %v1004 = vand.u32 %v398, 4294901760
        %1005 = vmatmul.mubr.f32.gmra.mrb[0].mxu0 %v1004
        %v1006 = vpop.f32.mrb[0].mxu0
        %v1007 = vadd.f32 %v689, %v1006
        %v1008 = vpop.f32.mrb[0].mxu0
        %1009 = vmatprep.mubr.f32.mxu0 0.0
        %v1010 = vand.u32 %v401, 4294901760
        %1011 = vmatmul.mubr.f32.gmra.mrb[0].mxu0 %v1010
        %v1012 = vpop.f32.mrb[0].mxu0
        %v1013 = vadd.f32 %v699, %v1012
        %v1014 = vpop.f32.mrb[0].mxu0
        %1015 = vmatprep.mubr.f32.mxu0 0.0
        %v1016 = vand.u32 %v404, 4294901760
        %1017 = vmatmul.mubr.f32.gmra.mrb[0].mxu0 %v1016
        %v1018 = vpop.f32.mrb[0].mxu0
        %v1019 = vadd.f32 %v709, %v1018
        %v1020 = vpop.f32.mrb[0].mxu0
        %1021 = vmatprep.mubr.f32.mxu0 0.0
        %v1022 = vand.u32 %v407, 4294901760
        %1023 = vmatmul.mubr.f32.gmra.mrb[0].mxu0 %v1022
        %v1024 = vpop.f32.mrb[0].mxu0
        %v1025 = vadd.f32 %v719, %v1024
        %v1026 = vpop.f32.mrb[0].mxu0
        %1027 = vmatprep.mubr.f32.mxu0 0.0
        %v1028 = vand.u32 %v410, 4294901760
        %1029 = vmatmul.mubr.f32.gmra.mrb[0].mxu0 %v1028
        %v1030 = vpop.f32.mrb[0].mxu0
        %v1031 = vadd.f32 %v729, %v1030
        %v1032 = vpop.f32.mrb[0].mxu0
        %1033 = vmatprep.mubr.f32.mxu0 0.0
        %v1034 = vand.u32 %v413, 4294901760
        %1035 = vmatmul.mubr.f32.gmra.mrb[0].mxu0 %v1034
        %v1036 = vpop.f32.mrb[0].mxu0
        %v1037 = vadd.f32 %v739, %v1036
        %v1038 = vpop.f32.mrb[0].mxu0
        %1039 = vmatprep.mubr.f32.mxu0 0.0
        %v1040 = vand.u32 %v416, 4294901760
        %1041 = vmatmul.mubr.f32.gmra.mrb[0].mxu0 %v1040
        %v1042 = vpop.f32.mrb[0].mxu0
        %v1043 = vadd.f32 %v749, %v1042
        %v1044 = vpop.f32.mrb[0].mxu0
        %1045 = vmatprep.mubr.f32.mxu0 0.0
        %v1046 = vand.u32 %v419, 4294901760
        %1047 = vmatmul.mubr.f32.gmra.mrb[0].mxu0 %v1046
        %v1048 = vpop.f32.mrb[0].mxu0
        %v1049 = vadd.f32 %v759, %v1048
        %v1050 = vpop.f32.mrb[0].mxu0
        %1051 = vmatprep.mubr.f32.mxu0 0.0
        %v1052 = vand.u32 %v422, 4294901760
        %1053 = vmatmul.mubr.f32.gmra.mrb[0].mxu0 %v1052
        %v1054 = vpop.f32.mrb[0].mxu0
        %v1055 = vadd.f32 %v769, %v1054
        %v1056 = vpop.f32.mrb[0].mxu0
        %1057 = vmatprep.mubr.f32.mxu0 0.0
        %v1058 = vand.u32 %v425, 4294901760
        %1059 = vmatmul.mubr.f32.gmra.mrb[0].mxu0 %v1058
        %v1060 = vpop.f32.mrb[0].mxu0
        %v1061 = vadd.f32 %v779, %v1060
        %v1062 = vpop.f32.mrb[0].mxu0
        %1063 = vmatprep.mubr.f32.mxu0 0.0
        %v1064 = vand.u32 %v428, 4294901760
        %1065 = vmatmul.mubr.f32.gmra.mrb[0].mxu0 %v1064
        %v1066 = vpop.f32.mrb[0].mxu0
        %v1067 = vadd.f32 %v789, %v1066
        %v1068 = vpop.f32.mrb[0].mxu0
        %1069 = vmatprep.mubr.f32.mxu0 0.0
        %v1070 = vand.u32 %v431, 4294901760
        %1071 = vmatmul.mubr.f32.gmra.mrb[0].mxu0 %v1070
        %v1072 = vpop.f32.mrb[0].mxu0
        %v1073 = vadd.f32 %v799, %v1072
        %v1074 = vpop.f32.mrb[0].mxu0
        %1075 = vmatprep.mubr.f32.mxu0 0.0
        %v1076 = vand.u32 %v434, 4294901760
        %1077 = vmatmul.mubr.f32.gmra.mrb[0].mxu0 %v1076
        %v1078 = vpop.f32.mrb[0].mxu0
        %v1079 = vadd.f32 %v809, %v1078
        %v1080 = vpop.f32.mrb[0].mxu0
        %1081 = vmatprep.mubr.f32.mxu0 0.0
        %v1082 = vand.u32 %v437, 4294901760
        %1083 = vmatmul.mubr.f32.gmra.mrb[0].mxu0 %v1082
        %v1084 = vpop.f32.mrb[0].mxu0
        %v1085 = vadd.f32 %v819, %v1084
        %v1086 = vpop.f32.mrb[0].mxu0
        %1087 = vmatprep.mubr.f32.mxu0 0.0
        %v1088 = vand.u32 %v440, 4294901760
        %1089 = vmatmul.mubr.f32.gmra.mrb[0].mxu0 %v1088
        %v1090 = vpop.f32.mrb[0].mxu0
        %v1091 = vadd.f32 %v829, %v1090
        %v1092 = vpop.f32.mrb[0].mxu0
        %1093 = vdwg.mxu0
        %1094 = vmatprep.subr.mxu0 0.0
        %v1095 = vand.u32 %v444, 4294901760
        %v1096 = vsub.f32 %v444, %v1095
        %1097 = vmatpush1.msra.mxu0 %v1096
        %1098 = vmatprep.subr.mxu0 0.0
        %1099 = vmatpush1.msra.mxu0 0.0
        %1100 = vmatprep.subr.mxu0 0.0
        %1101 = vmatpush1.msra.mxu0 0.0
        %1102 = vmatprep.subr.mxu0 0.0
        %1103 = vmatpush1.msra.mxu0 0.0
        %1104 = vmatprep.subr.mxu0 0.0
        %1105 = vmatpush1.msra.mxu0 0.0
        %1106 = vmatprep.subr.mxu0 0.0
        %1107 = vmatpush1.msra.mxu0 0.0
        %1108 = vmatprep.subr.mxu0 0.0
        %1109 = vmatpush1.msra.mxu0 0.0
        %1110 = vmatprep.subr.mxu0 0.0
        %1111 = vmatpush1.msra.mxu0 0.0
        %1112 = vmatprep.subr.mxu0 0.0
        %1113 = vmatpush1.msra.mxu0 0.0
        %1114 = vmatprep.subr.mxu0 0.0
        %1115 = vmatpush1.msra.mxu0 0.0
        %1116 = vmatprep.subr.mxu0 0.0
        %1117 = vmatpush1.msra.mxu0 0.0
        %1118 = vmatprep.subr.mxu0 0.0
        %1119 = vmatpush1.msra.mxu0 0.0
        %1120 = vmatprep.subr.mxu0 0.0
        %1121 = vmatpush1.msra.mxu0 0.0
        %1122 = vmatprep.subr.mxu0 0.0
        %1123 = vmatpush1.msra.mxu0 0.0
        %1124 = vmatprep.subr.mxu0 0.0
        %1125 = vmatpush1.msra.mxu0 0.0
        %1126 = vmatprep.subr.mxu0 0.0
        %1127 = vmatpush1.msra.mxu0 0.0
        %1128 = vmatprep.subr.mxu0 0.0
        %1129 = vmatpush1.msra.mxu0 0.0
        %1130 = vmatprep.subr.mxu0 0.0
        %1131 = vmatpush1.msra.mxu0 0.0
        %1132 = vmatprep.subr.mxu0 0.0
        %1133 = vmatpush1.msra.mxu0 0.0
        %1134 = vmatprep.subr.mxu0 0.0
        %1135 = vmatpush1.msra.mxu0 0.0
        %1136 = vmatprep.subr.mxu0 0.0
        %1137 = vmatpush1.msra.mxu0 0.0
        %1138 = vmatprep.subr.mxu0 0.0
        %1139 = vmatpush1.msra.mxu0 0.0
        %1140 = vmatprep.subr.mxu0 0.0
        %1141 = vmatpush1.msra.mxu0 0.0
        %1142 = vmatprep.subr.mxu0 0.0
        %1143 = vmatpush1.msra.mxu0 0.0
        %1144 = vmatprep.subr.mxu0 0.0
        %1145 = vmatpush1.msra.mxu0 0.0
        %1146 = vmatprep.subr.mxu0 0.0
        %1147 = vmatpush1.msra.mxu0 0.0
        %1148 = vmatprep.subr.mxu0 0.0
        %1149 = vmatpush1.msra.mxu0 0.0
        %1150 = vmatprep.subr.mxu0 0.0
        %1151 = vmatpush1.msra.mxu0 0.0
        %1152 = vmatprep.subr.mxu0 0.0
        %1153 = vmatpush1.msra.mxu0 0.0
        %1154 = vmatprep.subr.mxu0 0.0
        %1155 = vmatpush1.msra.mxu0 0.0
        %1156 = vmatprep.subr.mxu0 0.0
        %1157 = vmatpush1.msra.mxu0 0.0
        %1158 = vmatprep.subr.mxu0 0.0
        %1159 = vmatpush1.msra.mxu0 0.0
        %1160 = vmatprep.mubr.f32.mxu0 0.0
        %v1161 = vand.u32 %v347, 4294901760
        %v1162 = vsub.f32 %v347, %v1161
        %1163 = vmatmul.mubr.f32.gmra.mrb[0].mxu0 %v1162
        %v1164 = vpop.f32.mrb[0].mxu0
        %v1165 = vadd.f32 %v905, %v1164
        %v1166 = vpop.f32.mrb[0].mxu0
        %1167 = vmatprep.mubr.f32.mxu0 0.0
        %v1168 = vand.u32 %v350, 4294901760
        %v1169 = vsub.f32 %v350, %v1168
        %1170 = vmatmul.mubr.f32.gmra.mrb[0].mxu0 %v1169
        %v1171 = vpop.f32.mrb[0].mxu0
        %v1172 = vadd.f32 %v911, %v1171
        %v1173 = vpop.f32.mrb[0].mxu0
        %1174 = vmatprep.mubr.f32.mxu0 0.0
        %v1175 = vand.u32 %v353, 4294901760
        %v1176 = vsub.f32 %v353, %v1175
        %1177 = vmatmul.mubr.f32.gmra.mrb[0].mxu0 %v1176
        %v1178 = vpop.f32.mrb[0].mxu0
        %v1179 = vadd.f32 %v917, %v1178
        %v1180 = vpop.f32.mrb[0].mxu0
        %1181 = vmatprep.mubr.f32.mxu0 0.0
        %v1182 = vand.u32 %v356, 4294901760
        %v1183 = vsub.f32 %v356, %v1182
        %1184 = vmatmul.mubr.f32.gmra.mrb[0].mxu0 %v1183
        %v1185 = vpop.f32.mrb[0].mxu0
        %v1186 = vadd.f32 %v923, %v1185
        %v1187 = vpop.f32.mrb[0].mxu0
        %1188 = vmatprep.mubr.f32.mxu0 0.0
        %v1189 = vand.u32 %v359, 4294901760
        %v1190 = vsub.f32 %v359, %v1189
        %1191 = vmatmul.mubr.f32.gmra.mrb[0].mxu0 %v1190
        %v1192 = vpop.f32.mrb[0].mxu0
        %v1193 = vadd.f32 %v929, %v1192
        %v1194 = vpop.f32.mrb[0].mxu0
        %1195 = vmatprep.mubr.f32.mxu0 0.0
        %v1196 = vand.u32 %v362, 4294901760
        %v1197 = vsub.f32 %v362, %v1196
        %1198 = vmatmul.mubr.f32.gmra.mrb[0].mxu0 %v1197
        %v1199 = vpop.f32.mrb[0].mxu0
        %v1200 = vadd.f32 %v935, %v1199
        %v1201 = vpop.f32.mrb[0].mxu0
        %1202 = vmatprep.mubr.f32.mxu0 0.0
        %v1203 = vand.u32 %v365, 4294901760
        %v1204 = vsub.f32 %v365, %v1203
        %1205 = vmatmul.mubr.f32.gmra.mrb[0].mxu0 %v1204
        %v1206 = vpop.f32.mrb[0].mxu0
        %v1207 = vadd.f32 %v941, %v1206
        %v1208 = vpop.f32.mrb[0].mxu0
        %1209 = vmatprep.mubr.f32.mxu0 0.0
        %v1210 = vand.u32 %v368, 4294901760
        %v1211 = vsub.f32 %v368, %v1210
        %1212 = vmatmul.mubr.f32.gmra.mrb[0].mxu0 %v1211
        %v1213 = vpop.f32.mrb[0].mxu0
        %v1214 = vadd.f32 %v947, %v1213
        %v1215 = vpop.f32.mrb[0].mxu0
        %1216 = vmatprep.mubr.f32.mxu0 0.0
        %v1217 = vand.u32 %v371, 4294901760
        %v1218 = vsub.f32 %v371, %v1217
        %1219 = vmatmul.mubr.f32.gmra.mrb[0].mxu0 %v1218
        %v1220 = vpop.f32.mrb[0].mxu0
        %v1221 = vadd.f32 %v953, %v1220
        %v1222 = vpop.f32.mrb[0].mxu0
        %1223 = vmatprep.mubr.f32.mxu0 0.0
        %v1224 = vand.u32 %v374, 4294901760
        %v1225 = vsub.f32 %v374, %v1224
        %1226 = vmatmul.mubr.f32.gmra.mrb[0].mxu0 %v1225
        %v1227 = vpop.f32.mrb[0].mxu0
        %v1228 = vadd.f32 %v959, %v1227
        %v1229 = vpop.f32.mrb[0].mxu0
        %1230 = vmatprep.mubr.f32.mxu0 0.0
        %v1231 = vand.u32 %v377, 4294901760
        %v1232 = vsub.f32 %v377, %v1231
        %1233 = vmatmul.mubr.f32.gmra.mrb[0].mxu0 %v1232
        %v1234 = vpop.f32.mrb[0].mxu0
        %v1235 = vadd.f32 %v965, %v1234
        %v1236 = vpop.f32.mrb[0].mxu0
        %1237 = vmatprep.mubr.f32.mxu0 0.0
        %v1238 = vand.u32 %v380, 4294901760
        %v1239 = vsub.f32 %v380, %v1238
        %1240 = vmatmul.mubr.f32.gmra.mrb[0].mxu0 %v1239
        %v1241 = vpop.f32.mrb[0].mxu0
        %v1242 = vadd.f32 %v971, %v1241
        %v1243 = vpop.f32.mrb[0].mxu0
        %1244 = vmatprep.mubr.f32.mxu0 0.0
        %v1245 = vand.u32 %v383, 4294901760
        %v1246 = vsub.f32 %v383, %v1245
        %1247 = vmatmul.mubr.f32.gmra.mrb[0].mxu0 %v1246
        %v1248 = vpop.f32.mrb[0].mxu0
        %v1249 = vadd.f32 %v977, %v1248
        %v1250 = vpop.f32.mrb[0].mxu0
        %1251 = vmatprep.mubr.f32.mxu0 0.0
        %v1252 = vand.u32 %v386, 4294901760
        %v1253 = vsub.f32 %v386, %v1252
        %1254 = vmatmul.mubr.f32.gmra.mrb[0].mxu0 %v1253
        %v1255 = vpop.f32.mrb[0].mxu0
        %v1256 = vadd.f32 %v983, %v1255
        %v1257 = vpop.f32.mrb[0].mxu0
        %1258 = vmatprep.mubr.f32.mxu0 0.0
        %v1259 = vand.u32 %v389, 4294901760
        %v1260 = vsub.f32 %v389, %v1259
        %1261 = vmatmul.mubr.f32.gmra.mrb[0].mxu0 %v1260
        %v1262 = vpop.f32.mrb[0].mxu0
        %v1263 = vadd.f32 %v989, %v1262
        %v1264 = vpop.f32.mrb[0].mxu0
        %1265 = vmatprep.mubr.f32.mxu0 0.0
        %v1266 = vand.u32 %v392, 4294901760
        %v1267 = vsub.f32 %v392, %v1266
        %1268 = vmatmul.mubr.f32.gmra.mrb[0].mxu0 %v1267
        %v1269 = vpop.f32.mrb[0].mxu0
        %v1270 = vadd.f32 %v995, %v1269
        %v1271 = vpop.f32.mrb[0].mxu0
        %1272 = vmatprep.mubr.f32.mxu0 0.0
        %v1273 = vand.u32 %v395, 4294901760
        %v1274 = vsub.f32 %v395, %v1273
        %1275 = vmatmul.mubr.f32.gmra.mrb[0].mxu0 %v1274
        %v1276 = vpop.f32.mrb[0].mxu0
        %v1277 = vadd.f32 %v1001, %v1276
        %v1278 = vpop.f32.mrb[0].mxu0
        %1279 = vmatprep.mubr.f32.mxu0 0.0
        %v1280 = vand.u32 %v398, 4294901760
        %v1281 = vsub.f32 %v398, %v1280
        %1282 = vmatmul.mubr.f32.gmra.mrb[0].mxu0 %v1281
        %v1283 = vpop.f32.mrb[0].mxu0
        %v1284 = vadd.f32 %v1007, %v1283
        %v1285 = vpop.f32.mrb[0].mxu0
        %1286 = vmatprep.mubr.f32.mxu0 0.0
        %v1287 = vand.u32 %v401, 4294901760
        %v1288 = vsub.f32 %v401, %v1287
        %1289 = vmatmul.mubr.f32.gmra.mrb[0].mxu0 %v1288
        %v1290 = vpop.f32.mrb[0].mxu0
        %v1291 = vadd.f32 %v1013, %v1290
        %v1292 = vpop.f32.mrb[0].mxu0
        %1293 = vmatprep.mubr.f32.mxu0 0.0
        %v1294 = vand.u32 %v404, 4294901760
        %v1295 = vsub.f32 %v404, %v1294
        %1296 = vmatmul.mubr.f32.gmra.mrb[0].mxu0 %v1295
        %v1297 = vpop.f32.mrb[0].mxu0
        %v1298 = vadd.f32 %v1019, %v1297
        %v1299 = vpop.f32.mrb[0].mxu0
        %1300 = vmatprep.mubr.f32.mxu0 0.0
        %v1301 = vand.u32 %v407, 4294901760
        %v1302 = vsub.f32 %v407, %v1301
        %1303 = vmatmul.mubr.f32.gmra.mrb[0].mxu0 %v1302
        %v1304 = vpop.f32.mrb[0].mxu0
        %v1305 = vadd.f32 %v1025, %v1304
        %v1306 = vpop.f32.mrb[0].mxu0
        %1307 = vmatprep.mubr.f32.mxu0 0.0
        %v1308 = vand.u32 %v410, 4294901760
        %v1309 = vsub.f32 %v410, %v1308
        %1310 = vmatmul.mubr.f32.gmra.mrb[0].mxu0 %v1309
        %v1311 = vpop.f32.mrb[0].mxu0
        %v1312 = vadd.f32 %v1031, %v1311
        %v1313 = vpop.f32.mrb[0].mxu0
        %1314 = vmatprep.mubr.f32.mxu0 0.0
        %v1315 = vand.u32 %v413, 4294901760
        %v1316 = vsub.f32 %v413, %v1315
        %1317 = vmatmul.mubr.f32.gmra.mrb[0].mxu0 %v1316
        %v1318 = vpop.f32.mrb[0].mxu0
        %v1319 = vadd.f32 %v1037, %v1318
        %v1320 = vpop.f32.mrb[0].mxu0
        %1321 = vmatprep.mubr.f32.mxu0 0.0
        %v1322 = vand.u32 %v416, 4294901760
        %v1323 = vsub.f32 %v416, %v1322
        %1324 = vmatmul.mubr.f32.gmra.mrb[0].mxu0 %v1323
        %v1325 = vpop.f32.mrb[0].mxu0
        %v1326 = vadd.f32 %v1043, %v1325
        %v1327 = vpop.f32.mrb[0].mxu0
        %1328 = vmatprep.mubr.f32.mxu0 0.0
        %v1329 = vand.u32 %v419, 4294901760
        %v1330 = vsub.f32 %v419, %v1329
        %1331 = vmatmul.mubr.f32.gmra.mrb[0].mxu0 %v1330
        %v1332 = vpop.f32.mrb[0].mxu0
        %v1333 = vadd.f32 %v1049, %v1332
        %v1334 = vpop.f32.mrb[0].mxu0
        %1335 = vmatprep.mubr.f32.mxu0 0.0
        %v1336 = vand.u32 %v422, 4294901760
        %v1337 = vsub.f32 %v422, %v1336
        %1338 = vmatmul.mubr.f32.gmra.mrb[0].mxu0 %v1337
        %v1339 = vpop.f32.mrb[0].mxu0
        %v1340 = vadd.f32 %v1055, %v1339
        %v1341 = vpop.f32.mrb[0].mxu0
        %1342 = vmatprep.mubr.f32.mxu0 0.0
        %v1343 = vand.u32 %v425, 4294901760
        %v1344 = vsub.f32 %v425, %v1343
        %1345 = vmatmul.mubr.f32.gmra.mrb[0].mxu0 %v1344
        %v1346 = vpop.f32.mrb[0].mxu0
        %v1347 = vadd.f32 %v1061, %v1346
        %v1348 = vpop.f32.mrb[0].mxu0
        %1349 = vmatprep.mubr.f32.mxu0 0.0
        %v1350 = vand.u32 %v428, 4294901760
        %v1351 = vsub.f32 %v428, %v1350
        %1352 = vmatmul.mubr.f32.gmra.mrb[0].mxu0 %v1351
        %v1353 = vpop.f32.mrb[0].mxu0
        %v1354 = vadd.f32 %v1067, %v1353
        %v1355 = vpop.f32.mrb[0].mxu0
        %1356 = vmatprep.mubr.f32.mxu0 0.0
        %v1357 = vand.u32 %v431, 4294901760
        %v1358 = vsub.f32 %v431, %v1357
        %1359 = vmatmul.mubr.f32.gmra.mrb[0].mxu0 %v1358
        %v1360 = vpop.f32.mrb[0].mxu0
        %v1361 = vadd.f32 %v1073, %v1360
        %v1362 = vpop.f32.mrb[0].mxu0
        %1363 = vmatprep.mubr.f32.mxu0 0.0
        %v1364 = vand.u32 %v434, 4294901760
        %v1365 = vsub.f32 %v434, %v1364
        %1366 = vmatmul.mubr.f32.gmra.mrb[0].mxu0 %v1365
        %v1367 = vpop.f32.mrb[0].mxu0
        %v1368 = vadd.f32 %v1079, %v1367
        %v1369 = vpop.f32.mrb[0].mxu0
        %1370 = vmatprep.mubr.f32.mxu0 0.0
        %v1371 = vand.u32 %v437, 4294901760
        %v1372 = vsub.f32 %v437, %v1371
        %1373 = vmatmul.mubr.f32.gmra.mrb[0].mxu0 %v1372
        %v1374 = vpop.f32.mrb[0].mxu0
        %v1375 = vadd.f32 %v1085, %v1374
        %v1376 = vpop.f32.mrb[0].mxu0
        %1377 = vmatprep.mubr.f32.mxu0 0.0
        %v1378 = vand.u32 %v440, 4294901760
        %v1379 = vsub.f32 %v440, %v1378
        %1380 = vmatmul.mubr.f32.gmra.mrb[0].mxu0 %v1379
        %v1381 = vpop.f32.mrb[0].mxu0
        %v1382 = vadd.f32 %v1091, %v1381
        %v1383 = vpop.f32.mrb[0].mxu0
        %1384 = vdwg.mxu0
        %1385 = vmatprep.subr.mxu0 0.0
        %v1386 = vand.u32 %v444, 4294901760
        %1387 = vmatpush1.msra.mxu0 %v1386
        %1388 = vmatprep.subr.mxu0 0.0
        %1389 = vmatpush1.msra.mxu0 0.0
        %1390 = vmatprep.subr.mxu0 0.0
        %1391 = vmatpush1.msra.mxu0 0.0
        %1392 = vmatprep.subr.mxu0 0.0
        %1393 = vmatpush1.msra.mxu0 0.0
        %1394 = vmatprep.subr.mxu0 0.0
        %1395 = vmatpush1.msra.mxu0 0.0
        %1396 = vmatprep.subr.mxu0 0.0
        %1397 = vmatpush1.msra.mxu0 0.0
        %1398 = vmatprep.subr.mxu0 0.0
        %1399 = vmatpush1.msra.mxu0 0.0
        %1400 = vmatprep.subr.mxu0 0.0
        %1401 = vmatpush1.msra.mxu0 0.0
        %1402 = vmatprep.subr.mxu0 0.0
        %1403 = vmatpush1.msra.mxu0 0.0
        %1404 = vmatprep.subr.mxu0 0.0
        %1405 = vmatpush1.msra.mxu0 0.0
        %1406 = vmatprep.subr.mxu0 0.0
        %1407 = vmatpush1.msra.mxu0 0.0
        %1408 = vmatprep.subr.mxu0 0.0
        %1409 = vmatpush1.msra.mxu0 0.0
        %1410 = vmatprep.subr.mxu0 0.0
        %1411 = vmatpush1.msra.mxu0 0.0
        %1412 = vmatprep.subr.mxu0 0.0
        %1413 = vmatpush1.msra.mxu0 0.0
        %1414 = vmatprep.subr.mxu0 0.0
        %1415 = vmatpush1.msra.mxu0 0.0
        %1416 = vmatprep.subr.mxu0 0.0
        %1417 = vmatpush1.msra.mxu0 0.0
        %1418 = vmatprep.subr.mxu0 0.0
        %1419 = vmatpush1.msra.mxu0 0.0
        %1420 = vmatprep.subr.mxu0 0.0
        %1421 = vmatpush1.msra.mxu0 0.0
        %1422 = vmatprep.subr.mxu0 0.0
        %1423 = vmatpush1.msra.mxu0 0.0
        %1424 = vmatprep.subr.mxu0 0.0
        %1425 = vmatpush1.msra.mxu0 0.0
        %1426 = vmatprep.subr.mxu0 0.0
        %1427 = vmatpush1.msra.mxu0 0.0
        %1428 = vmatprep.subr.mxu0 0.0
        %1429 = vmatpush1.msra.mxu0 0.0
        %1430 = vmatprep.subr.mxu0 0.0
        %1431 = vmatpush1.msra.mxu0 0.0
        %1432 = vmatprep.subr.mxu0 0.0
        %1433 = vmatpush1.msra.mxu0 0.0
        %1434 = vmatprep.subr.mxu0 0.0
        %1435 = vmatpush1.msra.mxu0 0.0
        %1436 = vmatprep.subr.mxu0 0.0
        %1437 = vmatpush1.msra.mxu0 0.0
        %1438 = vmatprep.subr.mxu0 0.0
        %1439 = vmatpush1.msra.mxu0 0.0
        %1440 = vmatprep.subr.mxu0 0.0
        %1441 = vmatpush1.msra.mxu0 0.0
        %1442 = vmatprep.subr.mxu0 0.0
        %1443 = vmatpush1.msra.mxu0 0.0
        %1444 = vmatprep.subr.mxu0 0.0
        %1445 = vmatpush1.msra.mxu0 0.0
        %1446 = vmatprep.subr.mxu0 0.0
        %1447 = vmatpush1.msra.mxu0 0.0
        %1448 = vmatprep.subr.mxu0 0.0
        %1449 = vmatpush1.msra.mxu0 0.0
        %1450 = vmatprep.mubr.f32.mxu0 0.0
        %v1451 = vand.u32 %v347, 4294901760
        %v1452 = vsub.f32 %v347, %v1451
        %v1453 = vand.u32 %v1452, 4294901760
        %1454 = vmatmul.mubr.f32.gmra.mrb[0].mxu0 %v1453
        %v1455 = vpop.f32.mrb[0].mxu0
        %v1456 = vadd.f32 %v1165, %v1455
        %v1457 = vpop.f32.mrb[0].mxu0
        %1458 = vmatprep.mubr.f32.mxu0 0.0
        %v1459 = vand.u32 %v350, 4294901760
        %v1460 = vsub.f32 %v350, %v1459
        %v1461 = vand.u32 %v1460, 4294901760
        %1462 = vmatmul.mubr.f32.gmra.mrb[0].mxu0 %v1461
        %v1463 = vpop.f32.mrb[0].mxu0
        %v1464 = vadd.f32 %v1172, %v1463
        %v1465 = vpop.f32.mrb[0].mxu0
        %1466 = vmatprep.mubr.f32.mxu0 0.0
        %v1467 = vand.u32 %v353, 4294901760
        %v1468 = vsub.f32 %v353, %v1467
        %v1469 = vand.u32 %v1468, 4294901760
        %1470 = vmatmul.mubr.f32.gmra.mrb[0].mxu0 %v1469
        %v1471 = vpop.f32.mrb[0].mxu0
        %v1472 = vadd.f32 %v1179, %v1471
        %v1473 = vpop.f32.mrb[0].mxu0
        %1474 = vmatprep.mubr.f32.mxu0 0.0
        %v1475 = vand.u32 %v356, 4294901760
        %v1476 = vsub.f32 %v356, %v1475
        %v1477 = vand.u32 %v1476, 4294901760
        %1478 = vmatmul.mubr.f32.gmra.mrb[0].mxu0 %v1477
        %v1479 = vpop.f32.mrb[0].mxu0
        %v1480 = vadd.f32 %v1186, %v1479
        %v1481 = vpop.f32.mrb[0].mxu0
        %1482 = vmatprep.mubr.f32.mxu0 0.0
        %v1483 = vand.u32 %v359, 4294901760
        %v1484 = vsub.f32 %v359, %v1483
        %v1485 = vand.u32 %v1484, 4294901760
        %1486 = vmatmul.mubr.f32.gmra.mrb[0].mxu0 %v1485
        %v1487 = vpop.f32.mrb[0].mxu0
        %v1488 = vadd.f32 %v1193, %v1487
        %v1489 = vpop.f32.mrb[0].mxu0
        %1490 = vmatprep.mubr.f32.mxu0 0.0
        %v1491 = vand.u32 %v362, 4294901760
        %v1492 = vsub.f32 %v362, %v1491
        %v1493 = vand.u32 %v1492, 4294901760
        %1494 = vmatmul.mubr.f32.gmra.mrb[0].mxu0 %v1493
        %v1495 = vpop.f32.mrb[0].mxu0
        %v1496 = vadd.f32 %v1200, %v1495
        %v1497 = vpop.f32.mrb[0].mxu0
        %1498 = vmatprep.mubr.f32.mxu0 0.0
        %v1499 = vand.u32 %v365, 4294901760
        %v1500 = vsub.f32 %v365, %v1499
        %v1501 = vand.u32 %v1500, 4294901760
        %1502 = vmatmul.mubr.f32.gmra.mrb[0].mxu0 %v1501
        %v1503 = vpop.f32.mrb[0].mxu0
        %v1504 = vadd.f32 %v1207, %v1503
        %v1505 = vpop.f32.mrb[0].mxu0
        %1506 = vmatprep.mubr.f32.mxu0 0.0
        %v1507 = vand.u32 %v368, 4294901760
        %v1508 = vsub.f32 %v368, %v1507
        %v1509 = vand.u32 %v1508, 4294901760
        %1510 = vmatmul.mubr.f32.gmra.mrb[0].mxu0 %v1509
        %v1511 = vpop.f32.mrb[0].mxu0
        %v1512 = vadd.f32 %v1214, %v1511
        %v1513 = vpop.f32.mrb[0].mxu0
        %1514 = vmatprep.mubr.f32.mxu0 0.0
        %v1515 = vand.u32 %v371, 4294901760
        %v1516 = vsub.f32 %v371, %v1515
        %v1517 = vand.u32 %v1516, 4294901760
        %1518 = vmatmul.mubr.f32.gmra.mrb[0].mxu0 %v1517
        %v1519 = vpop.f32.mrb[0].mxu0
        %v1520 = vadd.f32 %v1221, %v1519
        %v1521 = vpop.f32.mrb[0].mxu0
        %1522 = vmatprep.mubr.f32.mxu0 0.0
        %v1523 = vand.u32 %v374, 4294901760
        %v1524 = vsub.f32 %v374, %v1523
        %v1525 = vand.u32 %v1524, 4294901760
        %1526 = vmatmul.mubr.f32.gmra.mrb[0].mxu0 %v1525
        %v1527 = vpop.f32.mrb[0].mxu0
        %v1528 = vadd.f32 %v1228, %v1527
        %v1529 = vpop.f32.mrb[0].mxu0
        %1530 = vmatprep.mubr.f32.mxu0 0.0
        %v1531 = vand.u32 %v377, 4294901760
        %v1532 = vsub.f32 %v377, %v1531
        %v1533 = vand.u32 %v1532, 4294901760
        %1534 = vmatmul.mubr.f32.gmra.mrb[0].mxu0 %v1533
        %v1535 = vpop.f32.mrb[0].mxu0
        %v1536 = vadd.f32 %v1235, %v1535
        %v1537 = vpop.f32.mrb[0].mxu0
        %1538 = vmatprep.mubr.f32.mxu0 0.0
        %v1539 = vand.u32 %v380, 4294901760
        %v1540 = vsub.f32 %v380, %v1539
        %v1541 = vand.u32 %v1540, 4294901760
        %1542 = vmatmul.mubr.f32.gmra.mrb[0].mxu0 %v1541
        %v1543 = vpop.f32.mrb[0].mxu0
        %v1544 = vadd.f32 %v1242, %v1543
        %v1545 = vpop.f32.mrb[0].mxu0
        %1546 = vmatprep.mubr.f32.mxu0 0.0
        %v1547 = vand.u32 %v383, 4294901760
        %v1548 = vsub.f32 %v383, %v1547
        %v1549 = vand.u32 %v1548, 4294901760
        %1550 = vmatmul.mubr.f32.gmra.mrb[0].mxu0 %v1549
        %v1551 = vpop.f32.mrb[0].mxu0
        %v1552 = vadd.f32 %v1249, %v1551
        %v1553 = vpop.f32.mrb[0].mxu0
        %1554 = vmatprep.mubr.f32.mxu0 0.0
        %v1555 = vand.u32 %v386, 4294901760
        %v1556 = vsub.f32 %v386, %v1555
        %v1557 = vand.u32 %v1556, 4294901760
        %1558 = vmatmul.mubr.f32.gmra.mrb[0].mxu0 %v1557
        %v1559 = vpop.f32.mrb[0].mxu0
        %v1560 = vadd.f32 %v1256, %v1559
        %v1561 = vpop.f32.mrb[0].mxu0
        %1562 = vmatprep.mubr.f32.mxu0 0.0
        %v1563 = vand.u32 %v389, 4294901760
        %v1564 = vsub.f32 %v389, %v1563
        %v1565 = vand.u32 %v1564, 4294901760
        %1566 = vmatmul.mubr.f32.gmra.mrb[0].mxu0 %v1565
        %v1567 = vpop.f32.mrb[0].mxu0
        %v1568 = vadd.f32 %v1263, %v1567
        %v1569 = vpop.f32.mrb[0].mxu0
        %1570 = vmatprep.mubr.f32.mxu0 0.0
        %v1571 = vand.u32 %v392, 4294901760
        %v1572 = vsub.f32 %v392, %v1571
        %v1573 = vand.u32 %v1572, 4294901760
        %1574 = vmatmul.mubr.f32.gmra.mrb[0].mxu0 %v1573
        %v1575 = vpop.f32.mrb[0].mxu0
        %v1576 = vadd.f32 %v1270, %v1575
        %v1577 = vpop.f32.mrb[0].mxu0
        %1578 = vmatprep.mubr.f32.mxu0 0.0
        %v1579 = vand.u32 %v395, 4294901760
        %v1580 = vsub.f32 %v395, %v1579
        %v1581 = vand.u32 %v1580, 4294901760
        %1582 = vmatmul.mubr.f32.gmra.mrb[0].mxu0 %v1581
        %v1583 = vpop.f32.mrb[0].mxu0
        %v1584 = vadd.f32 %v1277, %v1583
        %v1585 = vpop.f32.mrb[0].mxu0
        %1586 = vmatprep.mubr.f32.mxu0 0.0
        %v1587 = vand.u32 %v398, 4294901760
        %v1588 = vsub.f32 %v398, %v1587
        %v1589 = vand.u32 %v1588, 4294901760
        %1590 = vmatmul.mubr.f32.gmra.mrb[0].mxu0 %v1589
        %v1591 = vpop.f32.mrb[0].mxu0
        %v1592 = vadd.f32 %v1284, %v1591
        %v1593 = vpop.f32.mrb[0].mxu0
        %1594 = vmatprep.mubr.f32.mxu0 0.0
        %v1595 = vand.u32 %v401, 4294901760
        %v1596 = vsub.f32 %v401, %v1595
        %v1597 = vand.u32 %v1596, 4294901760
        %1598 = vmatmul.mubr.f32.gmra.mrb[0].mxu0 %v1597
        %v1599 = vpop.f32.mrb[0].mxu0
        %v1600 = vadd.f32 %v1291, %v1599
        %v1601 = vpop.f32.mrb[0].mxu0
        %1602 = vmatprep.mubr.f32.mxu0 0.0
        %v1603 = vand.u32 %v404, 4294901760
        %v1604 = vsub.f32 %v404, %v1603
        %v1605 = vand.u32 %v1604, 4294901760
        %1606 = vmatmul.mubr.f32.gmra.mrb[0].mxu0 %v1605
        %v1607 = vpop.f32.mrb[0].mxu0
        %v1608 = vadd.f32 %v1298, %v1607
        %v1609 = vpop.f32.mrb[0].mxu0
        %1610 = vmatprep.mubr.f32.mxu0 0.0
        %v1611 = vand.u32 %v407, 4294901760
        %v1612 = vsub.f32 %v407, %v1611
        %v1613 = vand.u32 %v1612, 4294901760
        %1614 = vmatmul.mubr.f32.gmra.mrb[0].mxu0 %v1613
        %v1615 = vpop.f32.mrb[0].mxu0
        %v1616 = vadd.f32 %v1305, %v1615
        %v1617 = vpop.f32.mrb[0].mxu0
        %1618 = vmatprep.mubr.f32.mxu0 0.0
        %v1619 = vand.u32 %v410, 4294901760
        %v1620 = vsub.f32 %v410, %v1619
        %v1621 = vand.u32 %v1620, 4294901760
        %1622 = vmatmul.mubr.f32.gmra.mrb[0].mxu0 %v1621
        %v1623 = vpop.f32.mrb[0].mxu0
        %v1624 = vadd.f32 %v1312, %v1623
        %v1625 = vpop.f32.mrb[0].mxu0
        %1626 = vmatprep.mubr.f32.mxu0 0.0
        %v1627 = vand.u32 %v413, 4294901760
        %v1628 = vsub.f32 %v413, %v1627
        %v1629 = vand.u32 %v1628, 4294901760
        %1630 = vmatmul.mubr.f32.gmra.mrb[0].mxu0 %v1629
        %v1631 = vpop.f32.mrb[0].mxu0
        %v1632 = vadd.f32 %v1319, %v1631
        %v1633 = vpop.f32.mrb[0].mxu0
        %1634 = vmatprep.mubr.f32.mxu0 0.0
        %v1635 = vand.u32 %v416, 4294901760
        %v1636 = vsub.f32 %v416, %v1635
        %v1637 = vand.u32 %v1636, 4294901760
        %1638 = vmatmul.mubr.f32.gmra.mrb[0].mxu0 %v1637
        %v1639 = vpop.f32.mrb[0].mxu0
        %v1640 = vadd.f32 %v1326, %v1639
        %v1641 = vpop.f32.mrb[0].mxu0
        %1642 = vmatprep.mubr.f32.mxu0 0.0
        %v1643 = vand.u32 %v419, 4294901760
        %v1644 = vsub.f32 %v419, %v1643
        %v1645 = vand.u32 %v1644, 4294901760
        %1646 = vmatmul.mubr.f32.gmra.mrb[0].mxu0 %v1645
        %v1647 = vpop.f32.mrb[0].mxu0
        %v1648 = vadd.f32 %v1333, %v1647
        %v1649 = vpop.f32.mrb[0].mxu0
        %1650 = vmatprep.mubr.f32.mxu0 0.0
        %v1651 = vand.u32 %v422, 4294901760
        %v1652 = vsub.f32 %v422, %v1651
        %v1653 = vand.u32 %v1652, 4294901760
        %1654 = vmatmul.mubr.f32.gmra.mrb[0].mxu0 %v1653
        %v1655 = vpop.f32.mrb[0].mxu0
        %v1656 = vadd.f32 %v1340, %v1655
        %v1657 = vpop.f32.mrb[0].mxu0
        %1658 = vmatprep.mubr.f32.mxu0 0.0
        %v1659 = vand.u32 %v425, 4294901760
        %v1660 = vsub.f32 %v425, %v1659
        %v1661 = vand.u32 %v1660, 4294901760
        %1662 = vmatmul.mubr.f32.gmra.mrb[0].mxu0 %v1661
        %v1663 = vpop.f32.mrb[0].mxu0
        %v1664 = vadd.f32 %v1347, %v1663
        %v1665 = vpop.f32.mrb[0].mxu0
        %1666 = vmatprep.mubr.f32.mxu0 0.0
        %v1667 = vand.u32 %v428, 4294901760
        %v1668 = vsub.f32 %v428, %v1667
        %v1669 = vand.u32 %v1668, 4294901760
        %1670 = vmatmul.mubr.f32.gmra.mrb[0].mxu0 %v1669
        %v1671 = vpop.f32.mrb[0].mxu0
        %v1672 = vadd.f32 %v1354, %v1671
        %v1673 = vpop.f32.mrb[0].mxu0
        %1674 = vmatprep.mubr.f32.mxu0 0.0
        %v1675 = vand.u32 %v431, 4294901760
        %v1676 = vsub.f32 %v431, %v1675
        %v1677 = vand.u32 %v1676, 4294901760
        %1678 = vmatmul.mubr.f32.gmra.mrb[0].mxu0 %v1677
        %v1679 = vpop.f32.mrb[0].mxu0
        %v1680 = vadd.f32 %v1361, %v1679
        %v1681 = vpop.f32.mrb[0].mxu0
        %1682 = vmatprep.mubr.f32.mxu0 0.0
        %v1683 = vand.u32 %v434, 4294901760
        %v1684 = vsub.f32 %v434, %v1683
        %v1685 = vand.u32 %v1684, 4294901760
        %1686 = vmatmul.mubr.f32.gmra.mrb[0].mxu0 %v1685
        %v1687 = vpop.f32.mrb[0].mxu0
        %v1688 = vadd.f32 %v1368, %v1687
        %v1689 = vpop.f32.mrb[0].mxu0
        %1690 = vmatprep.mubr.f32.mxu0 0.0
        %v1691 = vand.u32 %v437, 4294901760
        %v1692 = vsub.f32 %v437, %v1691
        %v1693 = vand.u32 %v1692, 4294901760
        %1694 = vmatmul.mubr.f32.gmra.mrb[0].mxu0 %v1693
        %v1695 = vpop.f32.mrb[0].mxu0
        %v1696 = vadd.f32 %v1375, %v1695
        %v1697 = vpop.f32.mrb[0].mxu0
        %1698 = vmatprep.mubr.f32.mxu0 0.0
        %v1699 = vand.u32 %v440, 4294901760
        %v1700 = vsub.f32 %v440, %v1699
        %v1701 = vand.u32 %v1700, 4294901760
        %1702 = vmatmul.mubr.f32.gmra.mrb[0].mxu0 %v1701
        %v1703 = vpop.f32.mrb[0].mxu0
        %v1704 = vadd.f32 %v1382, %v1703
        %v1705 = vpop.f32.mrb[0].mxu0
        %1706 = vdwg.mxu0
        %1707 = vmatprep.subr.mxu0 0.0
        %v1708 = vand.u32 %v444, 4294901760
        %v1709 = vsub.f32 %v444, %v1708
        %v1710 = vand.u32 %v1709, 4294901760
        %1711 = vmatpush1.msra.mxu0 %v1710
        %1712 = vmatprep.subr.mxu0 0.0
        %1713 = vmatpush1.msra.mxu0 0.0
        %1714 = vmatprep.subr.mxu0 0.0
        %1715 = vmatpush1.msra.mxu0 0.0
        %1716 = vmatprep.subr.mxu0 0.0
        %1717 = vmatpush1.msra.mxu0 0.0
        %1718 = vmatprep.subr.mxu0 0.0
        %1719 = vmatpush1.msra.mxu0 0.0
        %1720 = vmatprep.subr.mxu0 0.0
        %1721 = vmatpush1.msra.mxu0 0.0
        %1722 = vmatprep.subr.mxu0 0.0
        %1723 = vmatpush1.msra.mxu0 0.0
        %1724 = vmatprep.subr.mxu0 0.0
        %1725 = vmatpush1.msra.mxu0 0.0
        %1726 = vmatprep.subr.mxu0 0.0
        %1727 = vmatpush1.msra.mxu0 0.0
        %1728 = vmatprep.subr.mxu0 0.0
        %1729 = vmatpush1.msra.mxu0 0.0
        %1730 = vmatprep.subr.mxu0 0.0
        %1731 = vmatpush1.msra.mxu0 0.0
        %1732 = vmatprep.subr.mxu0 0.0
        %1733 = vmatpush1.msra.mxu0 0.0
        %1734 = vmatprep.subr.mxu0 0.0
        %1735 = vmatpush1.msra.mxu0 0.0
        %1736 = vmatprep.subr.mxu0 0.0
        %1737 = vmatpush1.msra.mxu0 0.0
        %1738 = vmatprep.subr.mxu0 0.0
        %1739 = vmatpush1.msra.mxu0 0.0
        %1740 = vmatprep.subr.mxu0 0.0
        %1741 = vmatpush1.msra.mxu0 0.0
        %1742 = vmatprep.subr.mxu0 0.0
        %1743 = vmatpush1.msra.mxu0 0.0
        %1744 = vmatprep.subr.mxu0 0.0
        %1745 = vmatpush1.msra.mxu0 0.0
        %1746 = vmatprep.subr.mxu0 0.0
        %1747 = vmatpush1.msra.mxu0 0.0
        %1748 = vmatprep.subr.mxu0 0.0
        %1749 = vmatpush1.msra.mxu0 0.0
        %1750 = vmatprep.subr.mxu0 0.0
        %1751 = vmatpush1.msra.mxu0 0.0
        %1752 = vmatprep.subr.mxu0 0.0
        %1753 = vmatpush1.msra.mxu0 0.0
        %1754 = vmatprep.subr.mxu0 0.0
        %1755 = vmatpush1.msra.mxu0 0.0
        %1756 = vmatprep.subr.mxu0 0.0
        %1757 = vmatpush1.msra.mxu0 0.0
        %1758 = vmatprep.subr.mxu0 0.0
        %1759 = vmatpush1.msra.mxu0 0.0
        %1760 = vmatprep.subr.mxu0 0.0
        %1761 = vmatpush1.msra.mxu0 0.0
        %1762 = vmatprep.subr.mxu0 0.0
        %1763 = vmatpush1.msra.mxu0 0.0
        %1764 = vmatprep.subr.mxu0 0.0
        %1765 = vmatpush1.msra.mxu0 0.0
        %1766 = vmatprep.subr.mxu0 0.0
        %1767 = vmatpush1.msra.mxu0 0.0
        %1768 = vmatprep.subr.mxu0 0.0
        %1769 = vmatpush1.msra.mxu0 0.0
        %1770 = vmatprep.subr.mxu0 0.0
        %1771 = vmatpush1.msra.mxu0 0.0
        %1772 = vmatprep.subr.mxu0 0.0
        %1773 = vmatpush1.msra.mxu0 0.0
        %1774 = vmatprep.mubr.f32.mxu0 0.0
        %v1775 = vand.u32 %v347, 4294901760
        %1776 = vmatmul.mubr.f32.gmra.mrb[0].mxu0 %v1775
        %v1777 = vpop.f32.mrb[0].mxu0
        %v1778 = vadd.f32 %v1456, %v1777
        %v1779 = vpop.f32.mrb[0].mxu0
        %1780 = vmatprep.mubr.f32.mxu0 0.0
        %v1781 = vand.u32 %v350, 4294901760
        %1782 = vmatmul.mubr.f32.gmra.mrb[0].mxu0 %v1781
        %v1783 = vpop.f32.mrb[0].mxu0
        %v1784 = vadd.f32 %v1464, %v1783
        %v1785 = vpop.f32.mrb[0].mxu0
        %1786 = vmatprep.mubr.f32.mxu0 0.0
        %v1787 = vand.u32 %v353, 4294901760
        %1788 = vmatmul.mubr.f32.gmra.mrb[0].mxu0 %v1787
        %v1789 = vpop.f32.mrb[0].mxu0
        %v1790 = vadd.f32 %v1472, %v1789
        %v1791 = vpop.f32.mrb[0].mxu0
        %1792 = vmatprep.mubr.f32.mxu0 0.0
        %v1793 = vand.u32 %v356, 4294901760
        %1794 = vmatmul.mubr.f32.gmra.mrb[0].mxu0 %v1793
        %v1795 = vpop.f32.mrb[0].mxu0
        %v1796 = vadd.f32 %v1480, %v1795
        %v1797 = vpop.f32.mrb[0].mxu0
        %1798 = vmatprep.mubr.f32.mxu0 0.0
        %v1799 = vand.u32 %v359, 4294901760
        %1800 = vmatmul.mubr.f32.gmra.mrb[0].mxu0 %v1799
        %v1801 = vpop.f32.mrb[0].mxu0
        %v1802 = vadd.f32 %v1488, %v1801
        %v1803 = vpop.f32.mrb[0].mxu0
        %1804 = vmatprep.mubr.f32.mxu0 0.0
        %v1805 = vand.u32 %v362, 4294901760
        %1806 = vmatmul.mubr.f32.gmra.mrb[0].mxu0 %v1805
        %v1807 = vpop.f32.mrb[0].mxu0
        %v1808 = vadd.f32 %v1496, %v1807
        %v1809 = vpop.f32.mrb[0].mxu0
        %1810 = vmatprep.mubr.f32.mxu0 0.0
        %v1811 = vand.u32 %v365, 4294901760
        %1812 = vmatmul.mubr.f32.gmra.mrb[0].mxu0 %v1811
        %v1813 = vpop.f32.mrb[0].mxu0
        %v1814 = vadd.f32 %v1504, %v1813
        %v1815 = vpop.f32.mrb[0].mxu0
        %1816 = vmatprep.mubr.f32.mxu0 0.0
        %v1817 = vand.u32 %v368, 4294901760
        %1818 = vmatmul.mubr.f32.gmra.mrb[0].mxu0 %v1817
        %v1819 = vpop.f32.mrb[0].mxu0
        %v1820 = vadd.f32 %v1512, %v1819
        %v1821 = vpop.f32.mrb[0].mxu0
        %1822 = vmatprep.mubr.f32.mxu0 0.0
        %v1823 = vand.u32 %v371, 4294901760
        %1824 = vmatmul.mubr.f32.gmra.mrb[0].mxu0 %v1823
        %v1825 = vpop.f32.mrb[0].mxu0
        %v1826 = vadd.f32 %v1520, %v1825
        %v1827 = vpop.f32.mrb[0].mxu0
        %1828 = vmatprep.mubr.f32.mxu0 0.0
        %v1829 = vand.u32 %v374, 4294901760
        %1830 = vmatmul.mubr.f32.gmra.mrb[0].mxu0 %v1829
        %v1831 = vpop.f32.mrb[0].mxu0
        %v1832 = vadd.f32 %v1528, %v1831
        %v1833 = vpop.f32.mrb[0].mxu0
        %1834 = vmatprep.mubr.f32.mxu0 0.0
        %v1835 = vand.u32 %v377, 4294901760
        %1836 = vmatmul.mubr.f32.gmra.mrb[0].mxu0 %v1835
        %v1837 = vpop.f32.mrb[0].mxu0
        %v1838 = vadd.f32 %v1536, %v1837
        %v1839 = vpop.f32.mrb[0].mxu0
        %1840 = vmatprep.mubr.f32.mxu0 0.0
        %v1841 = vand.u32 %v380, 4294901760
        %1842 = vmatmul.mubr.f32.gmra.mrb[0].mxu0 %v1841
        %v1843 = vpop.f32.mrb[0].mxu0
        %v1844 = vadd.f32 %v1544, %v1843
        %v1845 = vpop.f32.mrb[0].mxu0
        %1846 = vmatprep.mubr.f32.mxu0 0.0
        %v1847 = vand.u32 %v383, 4294901760
        %1848 = vmatmul.mubr.f32.gmra.mrb[0].mxu0 %v1847
        %v1849 = vpop.f32.mrb[0].mxu0
        %v1850 = vadd.f32 %v1552, %v1849
        %v1851 = vpop.f32.mrb[0].mxu0
        %1852 = vmatprep.mubr.f32.mxu0 0.0
        %v1853 = vand.u32 %v386, 4294901760
        %1854 = vmatmul.mubr.f32.gmra.mrb[0].mxu0 %v1853
        %v1855 = vpop.f32.mrb[0].mxu0
        %v1856 = vadd.f32 %v1560, %v1855
        %v1857 = vpop.f32.mrb[0].mxu0
        %1858 = vmatprep.mubr.f32.mxu0 0.0
        %v1859 = vand.u32 %v389, 4294901760
        %1860 = vmatmul.mubr.f32.gmra.mrb[0].mxu0 %v1859
        %v1861 = vpop.f32.mrb[0].mxu0
        %v1862 = vadd.f32 %v1568, %v1861
        %v1863 = vpop.f32.mrb[0].mxu0
        %1864 = vmatprep.mubr.f32.mxu0 0.0
        %v1865 = vand.u32 %v392, 4294901760
        %1866 = vmatmul.mubr.f32.gmra.mrb[0].mxu0 %v1865
        %v1867 = vpop.f32.mrb[0].mxu0
        %v1868 = vadd.f32 %v1576, %v1867
        %v1869 = vpop.f32.mrb[0].mxu0
        %1870 = vmatprep.mubr.f32.mxu0 0.0
        %v1871 = vand.u32 %v395, 4294901760
        %1872 = vmatmul.mubr.f32.gmra.mrb[0].mxu0 %v1871
        %v1873 = vpop.f32.mrb[0].mxu0
        %v1874 = vadd.f32 %v1584, %v1873
        %v1875 = vpop.f32.mrb[0].mxu0
        %1876 = vmatprep.mubr.f32.mxu0 0.0
        %v1877 = vand.u32 %v398, 4294901760
        %1878 = vmatmul.mubr.f32.gmra.mrb[0].mxu0 %v1877
        %v1879 = vpop.f32.mrb[0].mxu0
        %v1880 = vadd.f32 %v1592, %v1879
        %v1881 = vpop.f32.mrb[0].mxu0
        %1882 = vmatprep.mubr.f32.mxu0 0.0
        %v1883 = vand.u32 %v401, 4294901760
        %1884 = vmatmul.mubr.f32.gmra.mrb[0].mxu0 %v1883
        %v1885 = vpop.f32.mrb[0].mxu0
        %v1886 = vadd.f32 %v1600, %v1885
        %v1887 = vpop.f32.mrb[0].mxu0
        %1888 = vmatprep.mubr.f32.mxu0 0.0
        %v1889 = vand.u32 %v404, 4294901760
        %1890 = vmatmul.mubr.f32.gmra.mrb[0].mxu0 %v1889
        %v1891 = vpop.f32.mrb[0].mxu0
        %v1892 = vadd.f32 %v1608, %v1891
        %v1893 = vpop.f32.mrb[0].mxu0
        %1894 = vmatprep.mubr.f32.mxu0 0.0
        %v1895 = vand.u32 %v407, 4294901760
        %1896 = vmatmul.mubr.f32.gmra.mrb[0].mxu0 %v1895
        %v1897 = vpop.f32.mrb[0].mxu0
        %v1898 = vadd.f32 %v1616, %v1897
        %v1899 = vpop.f32.mrb[0].mxu0
        %1900 = vmatprep.mubr.f32.mxu0 0.0
        %v1901 = vand.u32 %v410, 4294901760
        %1902 = vmatmul.mubr.f32.gmra.mrb[0].mxu0 %v1901
        %v1903 = vpop.f32.mrb[0].mxu0
        %v1904 = vadd.f32 %v1624, %v1903
        %v1905 = vpop.f32.mrb[0].mxu0
        %1906 = vmatprep.mubr.f32.mxu0 0.0
        %v1907 = vand.u32 %v413, 4294901760
        %1908 = vmatmul.mubr.f32.gmra.mrb[0].mxu0 %v1907
        %v1909 = vpop.f32.mrb[0].mxu0
        %v1910 = vadd.f32 %v1632, %v1909
        %v1911 = vpop.f32.mrb[0].mxu0
        %1912 = vmatprep.mubr.f32.mxu0 0.0
        %v1913 = vand.u32 %v416, 4294901760
        %1914 = vmatmul.mubr.f32.gmra.mrb[0].mxu0 %v1913
        %v1915 = vpop.f32.mrb[0].mxu0
        %v1916 = vadd.f32 %v1640, %v1915
        %v1917 = vpop.f32.mrb[0].mxu0
        %1918 = vmatprep.mubr.f32.mxu0 0.0
        %v1919 = vand.u32 %v419, 4294901760
        %1920 = vmatmul.mubr.f32.gmra.mrb[0].mxu0 %v1919
        %v1921 = vpop.f32.mrb[0].mxu0
        %v1922 = vadd.f32 %v1648, %v1921
        %v1923 = vpop.f32.mrb[0].mxu0
        %1924 = vmatprep.mubr.f32.mxu0 0.0
        %v1925 = vand.u32 %v422, 4294901760
        %1926 = vmatmul.mubr.f32.gmra.mrb[0].mxu0 %v1925
        %v1927 = vpop.f32.mrb[0].mxu0
        %v1928 = vadd.f32 %v1656, %v1927
        %v1929 = vpop.f32.mrb[0].mxu0
        %1930 = vmatprep.mubr.f32.mxu0 0.0
        %v1931 = vand.u32 %v425, 4294901760
        %1932 = vmatmul.mubr.f32.gmra.mrb[0].mxu0 %v1931
        %v1933 = vpop.f32.mrb[0].mxu0
        %v1934 = vadd.f32 %v1664, %v1933
        %v1935 = vpop.f32.mrb[0].mxu0
        %1936 = vmatprep.mubr.f32.mxu0 0.0
        %v1937 = vand.u32 %v428, 4294901760
        %1938 = vmatmul.mubr.f32.gmra.mrb[0].mxu0 %v1937
        %v1939 = vpop.f32.mrb[0].mxu0
        %v1940 = vadd.f32 %v1672, %v1939
        %v1941 = vpop.f32.mrb[0].mxu0
        %1942 = vmatprep.mubr.f32.mxu0 0.0
        %v1943 = vand.u32 %v431, 4294901760
        %1944 = vmatmul.mubr.f32.gmra.mrb[0].mxu0 %v1943
        %v1945 = vpop.f32.mrb[0].mxu0
        %v1946 = vadd.f32 %v1680, %v1945
        %v1947 = vpop.f32.mrb[0].mxu0
        %1948 = vmatprep.mubr.f32.mxu0 0.0
        %v1949 = vand.u32 %v434, 4294901760
        %1950 = vmatmul.mubr.f32.gmra.mrb[0].mxu0 %v1949
        %v1951 = vpop.f32.mrb[0].mxu0
        %v1952 = vadd.f32 %v1688, %v1951
        %v1953 = vpop.f32.mrb[0].mxu0
        %1954 = vmatprep.mubr.f32.mxu0 0.0
        %v1955 = vand.u32 %v437, 4294901760
        %1956 = vmatmul.mubr.f32.gmra.mrb[0].mxu0 %v1955
        %v1957 = vpop.f32.mrb[0].mxu0
        %v1958 = vadd.f32 %v1696, %v1957
        %v1959 = vpop.f32.mrb[0].mxu0
        %1960 = vmatprep.mubr.f32.mxu0 0.0
        %v1961 = vand.u32 %v440, 4294901760
        %1962 = vmatmul.mubr.f32.gmra.mrb[0].mxu0 %v1961
        %v1963 = vpop.f32.mrb[0].mxu0
        %v1964 = vadd.f32 %v1704, %v1963
        %v1965 = vpop.f32.mrb[0].mxu0
        %1966 = vdwg.mxu0
        %1967 = vmatprep.subr.mxu0 0.0
        %v1968 = vand.u32 %v444, 4294901760
        %1969 = vmatpush1.msra.mxu0 %v1968
        %1970 = vmatprep.subr.mxu0 0.0
        %1971 = vmatpush1.msra.mxu0 0.0
        %1972 = vmatprep.subr.mxu0 0.0
        %1973 = vmatpush1.msra.mxu0 0.0
        %1974 = vmatprep.subr.mxu0 0.0
        %1975 = vmatpush1.msra.mxu0 0.0
        %1976 = vmatprep.subr.mxu0 0.0
        %1977 = vmatpush1.msra.mxu0 0.0
        %1978 = vmatprep.subr.mxu0 0.0
        %1979 = vmatpush1.msra.mxu0 0.0
        %1980 = vmatprep.subr.mxu0 0.0
        %1981 = vmatpush1.msra.mxu0 0.0
        %1982 = vmatprep.subr.mxu0 0.0
        %1983 = vmatpush1.msra.mxu0 0.0
        %1984 = vmatprep.subr.mxu0 0.0
        %1985 = vmatpush1.msra.mxu0 0.0
        %1986 = vmatprep.subr.mxu0 0.0
        %1987 = vmatpush1.msra.mxu0 0.0
        %1988 = vmatprep.subr.mxu0 0.0
        %1989 = vmatpush1.msra.mxu0 0.0
        %1990 = vmatprep.subr.mxu0 0.0
        %1991 = vmatpush1.msra.mxu0 0.0
        %1992 = vmatprep.subr.mxu0 0.0
        %1993 = vmatpush1.msra.mxu0 0.0
        %1994 = vmatprep.subr.mxu0 0.0
        %1995 = vmatpush1.msra.mxu0 0.0
        %1996 = vmatprep.subr.mxu0 0.0
        %1997 = vmatpush1.msra.mxu0 0.0
        %1998 = vmatprep.subr.mxu0 0.0
        %1999 = vmatpush1.msra.mxu0 0.0
        %2000 = vmatprep.subr.mxu0 0.0
        %2001 = vmatpush1.msra.mxu0 0.0
        %2002 = vmatprep.subr.mxu0 0.0
        %2003 = vmatpush1.msra.mxu0 0.0
        %2004 = vmatprep.subr.mxu0 0.0
        %2005 = vmatpush1.msra.mxu0 0.0
        %2006 = vmatprep.subr.mxu0 0.0
        %2007 = vmatpush1.msra.mxu0 0.0
        %2008 = vmatprep.subr.mxu0 0.0
        %2009 = vmatpush1.msra.mxu0 0.0
        %2010 = vmatprep.subr.mxu0 0.0
        %2011 = vmatpush1.msra.mxu0 0.0
        %2012 = vmatprep.subr.mxu0 0.0
        %2013 = vmatpush1.msra.mxu0 0.0
        %2014 = vmatprep.subr.mxu0 0.0
        %2015 = vmatpush1.msra.mxu0 0.0
        %2016 = vmatprep.subr.mxu0 0.0
        %2017 = vmatpush1.msra.mxu0 0.0
        %2018 = vmatprep.subr.mxu0 0.0
        %2019 = vmatpush1.msra.mxu0 0.0
        %2020 = vmatprep.subr.mxu0 0.0
        %2021 = vmatpush1.msra.mxu0 0.0
        %2022 = vmatprep.subr.mxu0 0.0
        %2023 = vmatpush1.msra.mxu0 0.0
        %2024 = vmatprep.subr.mxu0 0.0
        %2025 = vmatpush1.msra.mxu0 0.0
        %2026 = vmatprep.subr.mxu0 0.0
        %2027 = vmatpush1.msra.mxu0 0.0
        %2028 = vmatprep.subr.mxu0 0.0
        %2029 = vmatpush1.msra.mxu0 0.0
        %2030 = vmatprep.subr.mxu0 0.0
        %2031 = vmatpush1.msra.mxu0 0.0
        %2032 = vmatprep.mubr.f32.mxu0 0.0
        %v2033 = vand.u32 %v347, 4294901760
        %2034 = vmatmul.mubr.f32.gmra.mrb[0].mxu0 %v2033
        %v2035 = vpop.f32.mrb[0].mxu0
        %v2036 = vadd.f32 %v1778, %v2035
        %v2037 = vpop.f32.mrb[0].mxu0
        %2038 = vmatprep.mubr.f32.mxu0 0.0
        %v2039 = vand.u32 %v350, 4294901760
        %2040 = vmatmul.mubr.f32.gmra.mrb[0].mxu0 %v2039
        %v2041 = vpop.f32.mrb[0].mxu0
        %v2042 = vadd.f32 %v1784, %v2041
        %v2043 = vpop.f32.mrb[0].mxu0
        %2044 = vmatprep.mubr.f32.mxu0 0.0
        %v2045 = vand.u32 %v353, 4294901760
        %2046 = vmatmul.mubr.f32.gmra.mrb[0].mxu0 %v2045
        %v2047 = vpop.f32.mrb[0].mxu0
        %v2048 = vadd.f32 %v1790, %v2047
        %v2049 = vpop.f32.mrb[0].mxu0
        %2050 = vmatprep.mubr.f32.mxu0 0.0
        %v2051 = vand.u32 %v356, 4294901760
        %2052 = vmatmul.mubr.f32.gmra.mrb[0].mxu0 %v2051
        %v2053 = vpop.f32.mrb[0].mxu0
        %v2054 = vadd.f32 %v1796, %v2053
        %v2055 = vpop.f32.mrb[0].mxu0
        %2056 = vmatprep.mubr.f32.mxu0 0.0
        %v2057 = vand.u32 %v359, 4294901760
        %2058 = vmatmul.mubr.f32.gmra.mrb[0].mxu0 %v2057
        %v2059 = vpop.f32.mrb[0].mxu0
        %v2060 = vadd.f32 %v1802, %v2059
        %v2061 = vpop.f32.mrb[0].mxu0
        %2062 = vmatprep.mubr.f32.mxu0 0.0
        %v2063 = vand.u32 %v362, 4294901760
        %2064 = vmatmul.mubr.f32.gmra.mrb[0].mxu0 %v2063
        %v2065 = vpop.f32.mrb[0].mxu0
        %v2066 = vadd.f32 %v1808, %v2065
        %v2067 = vpop.f32.mrb[0].mxu0
        %2068 = vmatprep.mubr.f32.mxu0 0.0
        %v2069 = vand.u32 %v365, 4294901760
        %2070 = vmatmul.mubr.f32.gmra.mrb[0].mxu0 %v2069
        %v2071 = vpop.f32.mrb[0].mxu0
        %v2072 = vadd.f32 %v1814, %v2071
        %v2073 = vpop.f32.mrb[0].mxu0
        %2074 = vmatprep.mubr.f32.mxu0 0.0
        %v2075 = vand.u32 %v368, 4294901760
        %2076 = vmatmul.mubr.f32.gmra.mrb[0].mxu0 %v2075
        %v2077 = vpop.f32.mrb[0].mxu0
        %v2078 = vadd.f32 %v1820, %v2077
        %v2079 = vpop.f32.mrb[0].mxu0
        %2080 = vmatprep.mubr.f32.mxu0 0.0
        %v2081 = vand.u32 %v371, 4294901760
        %2082 = vmatmul.mubr.f32.gmra.mrb[0].mxu0 %v2081
        %v2083 = vpop.f32.mrb[0].mxu0
        %v2084 = vadd.f32 %v1826, %v2083
        %v2085 = vpop.f32.mrb[0].mxu0
        %2086 = vmatprep.mubr.f32.mxu0 0.0
        %v2087 = vand.u32 %v374, 4294901760
        %2088 = vmatmul.mubr.f32.gmra.mrb[0].mxu0 %v2087
        %v2089 = vpop.f32.mrb[0].mxu0
        %v2090 = vadd.f32 %v1832, %v2089
        %v2091 = vpop.f32.mrb[0].mxu0
        %2092 = vmatprep.mubr.f32.mxu0 0.0
        %v2093 = vand.u32 %v377, 4294901760
        %2094 = vmatmul.mubr.f32.gmra.mrb[0].mxu0 %v2093
        %v2095 = vpop.f32.mrb[0].mxu0
        %v2096 = vadd.f32 %v1838, %v2095
        %v2097 = vpop.f32.mrb[0].mxu0
        %2098 = vmatprep.mubr.f32.mxu0 0.0
        %v2099 = vand.u32 %v380, 4294901760
        %2100 = vmatmul.mubr.f32.gmra.mrb[0].mxu0 %v2099
        %v2101 = vpop.f32.mrb[0].mxu0
        %v2102 = vadd.f32 %v1844, %v2101
        %v2103 = vpop.f32.mrb[0].mxu0
        %2104 = vmatprep.mubr.f32.mxu0 0.0
        %v2105 = vand.u32 %v383, 4294901760
        %2106 = vmatmul.mubr.f32.gmra.mrb[0].mxu0 %v2105
        %v2107 = vpop.f32.mrb[0].mxu0
        %v2108 = vadd.f32 %v1850, %v2107
        %v2109 = vpop.f32.mrb[0].mxu0
        %2110 = vmatprep.mubr.f32.mxu0 0.0
        %v2111 = vand.u32 %v386, 4294901760
        %2112 = vmatmul.mubr.f32.gmra.mrb[0].mxu0 %v2111
        %v2113 = vpop.f32.mrb[0].mxu0
        %v2114 = vadd.f32 %v1856, %v2113
        %v2115 = vpop.f32.mrb[0].mxu0
        %2116 = vmatprep.mubr.f32.mxu0 0.0
        %v2117 = vand.u32 %v389, 4294901760
        %2118 = vmatmul.mubr.f32.gmra.mrb[0].mxu0 %v2117
        %v2119 = vpop.f32.mrb[0].mxu0
        %v2120 = vadd.f32 %v1862, %v2119
        %v2121 = vpop.f32.mrb[0].mxu0
        %2122 = vmatprep.mubr.f32.mxu0 0.0
        %v2123 = vand.u32 %v392, 4294901760
        %2124 = vmatmul.mubr.f32.gmra.mrb[0].mxu0 %v2123
        %v2125 = vpop.f32.mrb[0].mxu0
        %v2126 = vadd.f32 %v1868, %v2125
        %v2127 = vpop.f32.mrb[0].mxu0
        %2128 = vmatprep.mubr.f32.mxu0 0.0
        %v2129 = vand.u32 %v395, 4294901760
        %2130 = vmatmul.mubr.f32.gmra.mrb[0].mxu0 %v2129
        %v2131 = vpop.f32.mrb[0].mxu0
        %v2132 = vadd.f32 %v1874, %v2131
        %v2133 = vpop.f32.mrb[0].mxu0
        %2134 = vmatprep.mubr.f32.mxu0 0.0
        %v2135 = vand.u32 %v398, 4294901760
        %2136 = vmatmul.mubr.f32.gmra.mrb[0].mxu0 %v2135
        %v2137 = vpop.f32.mrb[0].mxu0
        %v2138 = vadd.f32 %v1880, %v2137
        %v2139 = vpop.f32.mrb[0].mxu0
        %2140 = vmatprep.mubr.f32.mxu0 0.0
        %v2141 = vand.u32 %v401, 4294901760
        %2142 = vmatmul.mubr.f32.gmra.mrb[0].mxu0 %v2141
        %v2143 = vpop.f32.mrb[0].mxu0
        %v2144 = vadd.f32 %v1886, %v2143
        %v2145 = vpop.f32.mrb[0].mxu0
        %2146 = vmatprep.mubr.f32.mxu0 0.0
        %v2147 = vand.u32 %v404, 4294901760
        %2148 = vmatmul.mubr.f32.gmra.mrb[0].mxu0 %v2147
        %v2149 = vpop.f32.mrb[0].mxu0
        %v2150 = vadd.f32 %v1892, %v2149
        %v2151 = vpop.f32.mrb[0].mxu0
        %2152 = vmatprep.mubr.f32.mxu0 0.0
        %v2153 = vand.u32 %v407, 4294901760
        %2154 = vmatmul.mubr.f32.gmra.mrb[0].mxu0 %v2153
        %v2155 = vpop.f32.mrb[0].mxu0
        %v2156 = vadd.f32 %v1898, %v2155
        %v2157 = vpop.f32.mrb[0].mxu0
        %2158 = vmatprep.mubr.f32.mxu0 0.0
        %v2159 = vand.u32 %v410, 4294901760
        %2160 = vmatmul.mubr.f32.gmra.mrb[0].mxu0 %v2159
        %v2161 = vpop.f32.mrb[0].mxu0
        %v2162 = vadd.f32 %v1904, %v2161
        %v2163 = vpop.f32.mrb[0].mxu0
        %2164 = vmatprep.mubr.f32.mxu0 0.0
        %v2165 = vand.u32 %v413, 4294901760
        %2166 = vmatmul.mubr.f32.gmra.mrb[0].mxu0 %v2165
        %v2167 = vpop.f32.mrb[0].mxu0
        %v2168 = vadd.f32 %v1910, %v2167
        %v2169 = vpop.f32.mrb[0].mxu0
        %2170 = vmatprep.mubr.f32.mxu0 0.0
        %v2171 = vand.u32 %v416, 4294901760
        %2172 = vmatmul.mubr.f32.gmra.mrb[0].mxu0 %v2171
        %v2173 = vpop.f32.mrb[0].mxu0
        %v2174 = vadd.f32 %v1916, %v2173
        %v2175 = vpop.f32.mrb[0].mxu0
        %2176 = vmatprep.mubr.f32.mxu0 0.0
        %v2177 = vand.u32 %v419, 4294901760
        %2178 = vmatmul.mubr.f32.gmra.mrb[0].mxu0 %v2177
        %v2179 = vpop.f32.mrb[0].mxu0
        %v2180 = vadd.f32 %v1922, %v2179
        %v2181 = vpop.f32.mrb[0].mxu0
        %2182 = vmatprep.mubr.f32.mxu0 0.0
        %v2183 = vand.u32 %v422, 4294901760
        %2184 = vmatmul.mubr.f32.gmra.mrb[0].mxu0 %v2183
        %v2185 = vpop.f32.mrb[0].mxu0
        %v2186 = vadd.f32 %v1928, %v2185
        %v2187 = vpop.f32.mrb[0].mxu0
        %2188 = vmatprep.mubr.f32.mxu0 0.0
        %v2189 = vand.u32 %v425, 4294901760
        %2190 = vmatmul.mubr.f32.gmra.mrb[0].mxu0 %v2189
        %v2191 = vpop.f32.mrb[0].mxu0
        %v2192 = vadd.f32 %v1934, %v2191
        %v2193 = vpop.f32.mrb[0].mxu0
        %2194 = vmatprep.mubr.f32.mxu0 0.0
        %v2195 = vand.u32 %v428, 4294901760
        %2196 = vmatmul.mubr.f32.gmra.mrb[0].mxu0 %v2195
        %v2197 = vpop.f32.mrb[0].mxu0
        %v2198 = vadd.f32 %v1940, %v2197
        %v2199 = vpop.f32.mrb[0].mxu0
        %2200 = vmatprep.mubr.f32.mxu0 0.0
        %v2201 = vand.u32 %v431, 4294901760
        %2202 = vmatmul.mubr.f32.gmra.mrb[0].mxu0 %v2201
        %v2203 = vpop.f32.mrb[0].mxu0
        %v2204 = vadd.f32 %v1946, %v2203
        %v2205 = vpop.f32.mrb[0].mxu0
        %2206 = vmatprep.mubr.f32.mxu0 0.0
        %v2207 = vand.u32 %v434, 4294901760
        %2208 = vmatmul.mubr.f32.gmra.mrb[0].mxu0 %v2207
        %v2209 = vpop.f32.mrb[0].mxu0
        %v2210 = vadd.f32 %v1952, %v2209
        %v2211 = vpop.f32.mrb[0].mxu0
        %2212 = vmatprep.mubr.f32.mxu0 0.0
        %v2213 = vand.u32 %v437, 4294901760
        %2214 = vmatmul.mubr.f32.gmra.mrb[0].mxu0 %v2213
        %v2215 = vpop.f32.mrb[0].mxu0
        %v2216 = vadd.f32 %v1958, %v2215
        %v2217 = vpop.f32.mrb[0].mxu0
        %2218 = vmatprep.mubr.f32.mxu0 0.0
        %v2219 = vand.u32 %v440, 4294901760
        %2220 = vmatmul.mubr.f32.gmra.mrb[0].mxu0 %v2219
        %v2221 = vpop.f32.mrb[0].mxu0
        %v2222 = vadd.f32 %v1964, %v2221
        %v2223 = vpop.f32.mrb[0].mxu0
        %2224 = vdwg.mxu0
        %v2225 = vmax.f32 %v2036, 0.0
        %v2226 = vmax.f32 %v2042, 0.0
        %v2227 = vmax.f32 %v2048, 0.0
        %v2228 = vmax.f32 %v2054, 0.0
        %v2229 = vmax.f32 %v2060, 0.0
        %v2230 = vmax.f32 %v2066, 0.0
        %v2231 = vmax.f32 %v2072, 0.0
        %v2232 = vmax.f32 %v2078, 0.0
        %v2233 = vmax.f32 %v2084, 0.0
        %v2234 = vmax.f32 %v2090, 0.0
        %v2235 = vmax.f32 %v2096, 0.0
        %v2236 = vmax.f32 %v2102, 0.0
        %v2237 = vmax.f32 %v2108, 0.0
        %v2238 = vmax.f32 %v2114, 0.0
        %v2239 = vmax.f32 %v2120, 0.0
        %v2240 = vmax.f32 %v2126, 0.0
        %v2241 = vmax.f32 %v2132, 0.0
        %v2242 = vmax.f32 %v2138, 0.0
        %v2243 = vmax.f32 %v2144, 0.0
        %v2244 = vmax.f32 %v2150, 0.0
        %v2245 = vmax.f32 %v2156, 0.0
        %v2246 = vmax.f32 %v2162, 0.0
        %v2247 = vmax.f32 %v2168, 0.0
        %v2248 = vmax.f32 %v2174, 0.0
        %v2249 = vmax.f32 %v2180, 0.0
        %v2250 = vmax.f32 %v2186, 0.0
        %v2251 = vmax.f32 %v2192, 0.0
        %v2252 = vmax.f32 %v2198, 0.0
        %v2253 = vmax.f32 %v2204, 0.0
        %v2254 = vmax.f32 %v2210, 0.0
        %v2255 = vmax.f32 %v2216, 0.0
        %v2256 = vmax.f32 %v2222, 0.0
        %2257 = vst.msk [vmem:[#allocation2] sm:$0xff] %vm345, 0.0
        %vm2258 = vcmask 24576
        %2259 = vst.msk [vmem:[#allocation2 + $0x8] sm:$0x1] %vm2258, 0.0
        %2260 = vst.msk [vmem:[#allocation2 + $0x90] sm:$0xff] %vm345, 0.0
        %2261 = vst.msk [vmem:[#allocation2 + $0x98] sm:$0x1] %vm2258, 0.0
        %2262 = vst.msk [vmem:[#allocation2 + $0x120] sm:$0xff] %vm345, 0.0
        %2263 = vst.msk [vmem:[#allocation2 + $0x128] sm:$0x1] %vm2258, 0.0
        %2264 = vst.msk [vmem:[#allocation2 + $0x1b0] sm:$0xff] %vm345, 0.0
        %2265 = vst.msk [vmem:[#allocation2 + $0x1b8] sm:$0x1] %vm2258, 0.0
        %2266 = vst.msk [vmem:[#allocation2] sm:$0x1] %vm2258, 0.0
        %2267 = vst.msk [vmem:[#allocation2 + $0x10] sm:$0x1] %vm2258, 0.0
        %2268 = vst.msk [vmem:[#allocation2 + $0x20] sm:$0x1] %vm2258, 0.0
        %2269 = vst.msk [vmem:[#allocation2 + $0x30] sm:$0x1] %vm2258, 0.0
        %2270 = vst.msk [vmem:[#allocation2 + $0x40] sm:$0x1] %vm2258, 0.0
        %2271 = vst.msk [vmem:[#allocation2 + $0x50] sm:$0x1] %vm2258, 0.0
        %2272 = vst.msk [vmem:[#allocation2 + $0x60] sm:$0x1] %vm2258, 0.0
        %2273 = vst.msk [vmem:[#allocation2 + $0x70] sm:$0x1] %vm2258, 0.0
        %2274 = vst.msk [vmem:[#allocation2 + $0x80] sm:$0x1] %vm2258, 0.0
        %2275 = vst.msk [vmem:[#allocation2 + $0x90] sm:$0x1] %vm2258, 0.0
        %2276 = vst.msk [vmem:[#allocation2 + $0xa0] sm:$0x1] %vm2258, 0.0
        %2277 = vst.msk [vmem:[#allocation2 + $0xb0] sm:$0x1] %vm2258, 0.0
        %2278 = vst.msk [vmem:[#allocation2 + $0xc0] sm:$0x1] %vm2258, 0.0
        %2279 = vst.msk [vmem:[#allocation2 + $0xd0] sm:$0x1] %vm2258, 0.0
        %2280 = vst.msk [vmem:[#allocation2 + $0xe0] sm:$0x1] %vm2258, 0.0
        %2281 = vst.msk [vmem:[#allocation2 + $0xf0] sm:$0x1] %vm2258, 0.0
        %2282 = vst.msk [vmem:[#allocation2 + $0x100] sm:$0x1] %vm2258, 0.0
        %2283 = vst.msk [vmem:[#allocation2 + $0x110] sm:$0x1] %vm2258, 0.0
        %2284 = vst.msk [vmem:[#allocation2 + $0x120] sm:$0x1] %vm2258, 0.0
        %2285 = vst.msk [vmem:[#allocation2 + $0x130] sm:$0x1] %vm2258, 0.0
        %2286 = vst.msk [vmem:[#allocation2 + $0x140] sm:$0x1] %vm2258, 0.0
        %2287 = vst.msk [vmem:[#allocation2 + $0x150] sm:$0x1] %vm2258, 0.0
        %2288 = vst.msk [vmem:[#allocation2 + $0x160] sm:$0x1] %vm2258, 0.0
        %2289 = vst.msk [vmem:[#allocation2 + $0x170] sm:$0x1] %vm2258, 0.0
        %2290 = vst.msk [vmem:[#allocation2 + $0x180] sm:$0x1] %vm2258, 0.0
        %2291 = vst.msk [vmem:[#allocation2 + $0x190] sm:$0x1] %vm2258, 0.0
        %2292 = vst.msk [vmem:[#allocation2 + $0x1a0] sm:$0x1] %vm2258, 0.0
        %2293 = vst.msk [vmem:[#allocation2 + $0x1b0] sm:$0x1] %vm2258, 0.0
        %2294 = vst.msk [vmem:[#allocation2 + $0x1c0] sm:$0x1] %vm2258, 0.0
        %2295 = vst.msk [vmem:[#allocation2 + $0x1d0] sm:$0x1] %vm2258, 0.0
        %2296 = vst.msk [vmem:[#allocation2 + $0x1e0] sm:$0x1] %vm2258, 0.0
        %2297 = vst.msk [vmem:[#allocation2 + $0x1f0] sm:$0x1] %vm2258, 0.0
        %2298 = vst.msk [vmem:[#allocation2 + $0x200] sm:$0x1] %vm2258, 0.0
        %2299 = vst.msk [vmem:[#allocation2 + $0x210] sm:$0x1] %vm2258, 0.0
        %2300 = vst.msk [vmem:[#allocation2 + $0x220] sm:$0x1] %vm2258, 0.0
        %2301 = vst.msk [vmem:[#allocation2 + $0x230] sm:$0x1] %vm2258, 0.0
        %s2302 = scalar_lea.vmem [#allocation2], 16
        %2303 = vst.msk [vmem:[%s2302 + $0x1] sm:$0xff] %vm345, %v2225
        %2304 = vst.msk [vmem:[%s2302 + $0x11] sm:$0xff] %vm345, %v2226
        %2305 = vst.msk [vmem:[%s2302 + $0x21] sm:$0xff] %vm345, %v2227
        %2306 = vst.msk [vmem:[%s2302 + $0x31] sm:$0xff] %vm345, %v2228
        %2307 = vst.msk [vmem:[%s2302 + $0x41] sm:$0xff] %vm345, %v2229
        %2308 = vst.msk [vmem:[%s2302 + $0x51] sm:$0xff] %vm345, %v2230
        %2309 = vst.msk [vmem:[%s2302 + $0x61] sm:$0xff] %vm345, %v2231
        %2310 = vst.msk [vmem:[%s2302 + $0x71] sm:$0xff] %vm345, %v2232
        %2311 = vst.msk [vmem:[%s2302 + $0x91] sm:$0xff] %vm345, %v2233
        %2312 = vst.msk [vmem:[%s2302 + $0xa1] sm:$0xff] %vm345, %v2234
        %2313 = vst.msk [vmem:[%s2302 + $0xb1] sm:$0xff] %vm345, %v2235
        %2314 = vst.msk [vmem:[%s2302 + $0xc1] sm:$0xff] %vm345, %v2236
        %2315 = vst.msk [vmem:[%s2302 + $0xd1] sm:$0xff] %vm345, %v2237
        %2316 = vst.msk [vmem:[%s2302 + $0xe1] sm:$0xff] %vm345, %v2238
        %2317 = vst.msk [vmem:[%s2302 + $0xf1] sm:$0xff] %vm345, %v2239
        %2318 = vst.msk [vmem:[%s2302 + $0x101] sm:$0xff] %vm345, %v2240
        %2319 = vst.msk [vmem:[%s2302 + $0x121] sm:$0xff] %vm345, %v2241
        %2320 = vst.msk [vmem:[%s2302 + $0x131] sm:$0xff] %vm345, %v2242
        %2321 = vst.msk [vmem:[%s2302 + $0x141] sm:$0xff] %vm345, %v2243
        %2322 = vst.msk [vmem:[%s2302 + $0x151] sm:$0xff] %vm345, %v2244
        %2323 = vst.msk [vmem:[%s2302 + $0x161] sm:$0xff] %vm345, %v2245
        %2324 = vst.msk [vmem:[%s2302 + $0x171] sm:$0xff] %vm345, %v2246
        %2325 = vst.msk [vmem:[%s2302 + $0x181] sm:$0xff] %vm345, %v2247
        %2326 = vst.msk [vmem:[%s2302 + $0x191] sm:$0xff] %vm345, %v2248
        %2327 = vst.msk [vmem:[%s2302 + $0x1b1] sm:$0xff] %vm345, %v2249
        %2328 = vst.msk [vmem:[%s2302 + $0x1c1] sm:$0xff] %vm345, %v2250
        %2329 = vst.msk [vmem:[%s2302 + $0x1d1] sm:$0xff] %vm345, %v2251
        %2330 = vst.msk [vmem:[%s2302 + $0x1e1] sm:$0xff] %vm345, %v2252
        %2331 = vst.msk [vmem:[%s2302 + $0x1f1] sm:$0xff] %vm345, %v2253
        %2332 = vst.msk [vmem:[%s2302 + $0x201] sm:$0xff] %vm345, %v2254
        %2333 = vst.msk [vmem:[%s2302 + $0x211] sm:$0xff] %vm345, %v2255
        %2334 = vst.msk [vmem:[%s2302 + $0x221] sm:$0xff] %vm345, %v2256
        %s2335 = scalar_lea.vmem %s303, 432
        %v2336 = vld [vmem:[%s2335] sm:$0xff]
        %v2337 = vld [vmem:[%s2335 + $0x10] sm:$0xff]
        %v2338 = vld [vmem:[%s2335 + $0x20] sm:$0xff]
        %v2339 = vld [vmem:[%s2335 + $0x30] sm:$0xff]
        %v2340 = vld [vmem:[%s2335 + $0x40] sm:$0xff]
        %v2341 = vld [vmem:[%s2335 + $0x50] sm:$0xff]
        %v2342 = vld [vmem:[%s2335 + $0x60] sm:$0xff]
        %v2343 = vld [vmem:[%s2335 + $0x70] sm:$0xff]
        %v2344 = vld [vmem:[%s1] sm:$0x1]
        %v2345 = vlaneseq
        %v2346 = vshrl.u32 %v2345, 7
        %v2347 = vsub.s32 0, %v2346
        %v2348 = vrot.slane %v2344, %v2347
        %v2349 = vmul.f32 %v2336, %v2348
        %v2350 = vmul.f32 %v2337, %v2348
        %v2351 = vmul.f32 %v2338, %v2348
        %v2352 = vmul.f32 %v2339, %v2348
        %v2353 = vmul.f32 %v2340, %v2348
        %v2354 = vmul.f32 %v2341, %v2348
        %v2355 = vmul.f32 %v2342, %v2348
        %v2356 = vmul.f32 %v2343, %v2348
        %v2357 = vadd.f32 %v2349, 0.0
        %v2358 = vadd.f32 %v2350, 0.0
        %v2359 = vadd.f32 %v2351, 0.0
        %v2360 = vadd.f32 %v2352, 0.0
        %v2361 = vadd.f32 %v2353, 0.0
        %v2362 = vadd.f32 %v2354, 0.0
        %v2363 = vadd.f32 %v2355, 0.0
        %v2364 = vadd.f32 %v2356, 0.0
        %s2365 = scalar_lea.vmem %s303, 288
        %v2366 = vld [vmem:[%s2365 + $0x1] sm:$0xff]
        %v2367 = vld [vmem:[%s2365 + $0x11] sm:$0xff]
        %v2368 = vld [vmem:[%s2365 + $0x21] sm:$0xff]
        %v2369 = vld [vmem:[%s2365 + $0x31] sm:$0xff]
        %v2370 = vld [vmem:[%s2365 + $0x41] sm:$0xff]
        %v2371 = vld [vmem:[%s2365 + $0x51] sm:$0xff]
        %v2372 = vld [vmem:[%s2365 + $0x61] sm:$0xff]
        %v2373 = vld [vmem:[%s2365 + $0x71] sm:$0xff]
        %v2374 = vld [vmem:[%s1 + $0x1] sm:$0x1]
        %v2375 = vlaneseq
        %v2376 = vshrl.u32 %v2375, 7
        %v2377 = vsub.s32 0, %v2376
        %v2378 = vrot.slane %v2374, %v2377
        %v2379 = vmul.f32 %v2366, %v2378
        %v2380 = vmul.f32 %v2367, %v2378
        %v2381 = vmul.f32 %v2368, %v2378
        %v2382 = vmul.f32 %v2369, %v2378
        %v2383 = vmul.f32 %v2370, %v2378
        %v2384 = vmul.f32 %v2371, %v2378
        %v2385 = vmul.f32 %v2372, %v2378
        %v2386 = vmul.f32 %v2373, %v2378
        %v2387 = vadd.f32 %v2357, %v2379
        %v2388 = vadd.f32 %v2358, %v2380
        %v2389 = vadd.f32 %v2359, %v2381
        %v2390 = vadd.f32 %v2360, %v2382
        %v2391 = vadd.f32 %v2361, %v2383
        %v2392 = vadd.f32 %v2362, %v2384
        %v2393 = vadd.f32 %v2363, %v2385
        %v2394 = vadd.f32 %v2364, %v2386
        %v2395 = vld [vmem:[%s2335 + $0x1] sm:$0xff]
        %v2396 = vld [vmem:[%s2335 + $0x11] sm:$0xff]
        %v2397 = vld [vmem:[%s2335 + $0x21] sm:$0xff]
        %v2398 = vld [vmem:[%s2335 + $0x31] sm:$0xff]
        %v2399 = vld [vmem:[%s2335 + $0x41] sm:$0xff]
        %v2400 = vld [vmem:[%s2335 + $0x51] sm:$0xff]
        %v2401 = vld [vmem:[%s2335 + $0x61] sm:$0xff]
        %v2402 = vld [vmem:[%s2335 + $0x71] sm:$0xff]
        %v2403 = vld [vmem:[%s1 + $0x2] sm:$0x1]
        %v2404 = vlaneseq
        %v2405 = vshrl.u32 %v2404, 7
        %v2406 = vsub.s32 0, %v2405
        %v2407 = vrot.slane %v2403, %v2406
        %v2408 = vmul.f32 %v2395, %v2407
        %v2409 = vmul.f32 %v2396, %v2407
        %v2410 = vmul.f32 %v2397, %v2407
        %v2411 = vmul.f32 %v2398, %v2407
        %v2412 = vmul.f32 %v2399, %v2407
        %v2413 = vmul.f32 %v2400, %v2407
        %v2414 = vmul.f32 %v2401, %v2407
        %v2415 = vmul.f32 %v2402, %v2407
        %v2416 = vadd.f32 %v2387, %v2408
        %v2417 = vadd.f32 %v2388, %v2409
        %v2418 = vadd.f32 %v2389, %v2410
        %v2419 = vadd.f32 %v2390, %v2411
        %v2420 = vadd.f32 %v2391, %v2412
        %v2421 = vadd.f32 %v2392, %v2413
        %v2422 = vadd.f32 %v2393, %v2414
        %v2423 = vadd.f32 %v2394, %v2415
        %s2424 = scalar_lea.vmem %s303, 160
        %v2425 = vld [vmem:[%s2424] sm:$0xff]
        %v2426 = vld [vmem:[%s2424 + $0x10] sm:$0xff]
        %v2427 = vld [vmem:[%s2424 + $0x20] sm:$0xff]
        %v2428 = vld [vmem:[%s2424 + $0x30] sm:$0xff]
        %v2429 = vld [vmem:[%s2424 + $0x40] sm:$0xff]
        %v2430 = vld [vmem:[%s2424 + $0x50] sm:$0xff]
        %v2431 = vld [vmem:[%s2424 + $0x60] sm:$0xff]
        %v2432 = vld [vmem:[%s2424 + $0x70] sm:$0xff]
        %s2433 = scalar_lea.vmem %s1, 4
        %v2434 = vld [vmem:[%s2433] sm:$0x1]
        %v2435 = vlaneseq
        %v2436 = vshrl.u32 %v2435, 7
        %v2437 = vsub.s32 0, %v2436
        %v2438 = vrot.slane %v2434, %v2437
        %v2439 = vmul.f32 %v2425, %v2438
        %v2440 = vmul.f32 %v2426, %v2438
        %v2441 = vmul.f32 %v2427, %v2438
        %v2442 = vmul.f32 %v2428, %v2438
        %v2443 = vmul.f32 %v2429, %v2438
        %v2444 = vmul.f32 %v2430, %v2438
        %v2445 = vmul.f32 %v2431, %v2438
        %v2446 = vmul.f32 %v2432, %v2438
        %v2447 = vadd.f32 %v2416, %v2439
        %v2448 = vadd.f32 %v2417, %v2440
        %v2449 = vadd.f32 %v2418, %v2441
        %v2450 = vadd.f32 %v2419, %v2442
        %v2451 = vadd.f32 %v2420, %v2443
        %v2452 = vadd.f32 %v2421, %v2444
        %v2453 = vadd.f32 %v2422, %v2445
        %v2454 = vadd.f32 %v2423, %v2446
        %v2455 = vld [vmem:[%s304 + $0x1] sm:$0xff]
        %v2456 = vld [vmem:[%s304 + $0x11] sm:$0xff]
        %v2457 = vld [vmem:[%s304 + $0x21] sm:$0xff]
        %v2458 = vld [vmem:[%s304 + $0x31] sm:$0xff]
        %v2459 = vld [vmem:[%s304 + $0x41] sm:$0xff]
        %v2460 = vld [vmem:[%s304 + $0x51] sm:$0xff]
        %v2461 = vld [vmem:[%s304 + $0x61] sm:$0xff]
        %v2462 = vld [vmem:[%s304 + $0x71] sm:$0xff]
        %v2463 = vld [vmem:[%s2433 + $0x1] sm:$0x1]
        %v2464 = vlaneseq
        %v2465 = vshrl.u32 %v2464, 7
        %v2466 = vsub.s32 0, %v2465
        %v2467 = vrot.slane %v2463, %v2466
        %v2468 = vmul.f32 %v2455, %v2467
        %v2469 = vmul.f32 %v2456, %v2467
        %v2470 = vmul.f32 %v2457, %v2467
        %v2471 = vmul.f32 %v2458, %v2467
        %v2472 = vmul.f32 %v2459, %v2467
        %v2473 = vmul.f32 %v2460, %v2467
        %v2474 = vmul.f32 %v2461, %v2467
        %v2475 = vmul.f32 %v2462, %v2467
        %v2476 = vadd.f32 %v2447, %v2468
        %v2477 = vadd.f32 %v2448, %v2469
        %v2478 = vadd.f32 %v2449, %v2470
        %v2479 = vadd.f32 %v2450, %v2471
        %v2480 = vadd.f32 %v2451, %v2472
        %v2481 = vadd.f32 %v2452, %v2473
        %v2482 = vadd.f32 %v2453, %v2474
        %v2483 = vadd.f32 %v2454, %v2475
        %v2484 = vld [vmem:[%s2424 + $0x1] sm:$0xff]
        %v2485 = vld [vmem:[%s2424 + $0x11] sm:$0xff]
        %v2486 = vld [vmem:[%s2424 + $0x21] sm:$0xff]
        %v2487 = vld [vmem:[%s2424 + $0x31] sm:$0xff]
        %v2488 = vld [vmem:[%s2424 + $0x41] sm:$0xff]
        %v2489 = vld [vmem:[%s2424 + $0x51] sm:$0xff]
        %v2490 = vld [vmem:[%s2424 + $0x61] sm:$0xff]
        %v2491 = vld [vmem:[%s2424 + $0x71] sm:$0xff]
        %v2492 = vld [vmem:[%s2433 + $0x2] sm:$0x1]
        %v2493 = vlaneseq
        %v2494 = vshrl.u32 %v2493, 7
        %v2495 = vsub.s32 0, %v2494
        %v2496 = vrot.slane %v2492, %v2495
        %v2497 = vmul.f32 %v2484, %v2496
        %v2498 = vmul.f32 %v2485, %v2496
        %v2499 = vmul.f32 %v2486, %v2496
        %v2500 = vmul.f32 %v2487, %v2496
        %v2501 = vmul.f32 %v2488, %v2496
        %v2502 = vmul.f32 %v2489, %v2496
        %v2503 = vmul.f32 %v2490, %v2496
        %v2504 = vmul.f32 %v2491, %v2496
        %v2505 = vadd.f32 %v2476, %v2497
        %v2506 = vadd.f32 %v2477, %v2498
        %v2507 = vadd.f32 %v2478, %v2499
        %v2508 = vadd.f32 %v2479, %v2500
        %v2509 = vadd.f32 %v2480, %v2501
        %v2510 = vadd.f32 %v2481, %v2502
        %v2511 = vadd.f32 %v2482, %v2503
        %v2512 = vadd.f32 %v2483, %v2504
        %s2513 = scalar_lea.vmem %s303, 448
        %v2514 = vld [vmem:[%s2513] sm:$0xff]
        %v2515 = vld [vmem:[%s2513 + $0x10] sm:$0xff]
        %v2516 = vld [vmem:[%s2513 + $0x20] sm:$0xff]
        %v2517 = vld [vmem:[%s2513 + $0x30] sm:$0xff]
        %v2518 = vld [vmem:[%s2513 + $0x40] sm:$0xff]
        %v2519 = vld [vmem:[%s2513 + $0x50] sm:$0xff]
        %v2520 = vld [vmem:[%s2513 + $0x60] sm:$0xff]
        %v2521 = vld [vmem:[%s2513 + $0x70] sm:$0xff]
        %s2522 = scalar_lea.vmem %s1, 8
        %v2523 = vld [vmem:[%s2522] sm:$0x1]
        %v2524 = vlaneseq
        %v2525 = vshrl.u32 %v2524, 7
        %v2526 = vsub.s32 0, %v2525
        %v2527 = vrot.slane %v2523, %v2526
        %v2528 = vmul.f32 %v2514, %v2527
        %v2529 = vmul.f32 %v2515, %v2527
        %v2530 = vmul.f32 %v2516, %v2527
        %v2531 = vmul.f32 %v2517, %v2527
        %v2532 = vmul.f32 %v2518, %v2527
        %v2533 = vmul.f32 %v2519, %v2527
        %v2534 = vmul.f32 %v2520, %v2527
        %v2535 = vmul.f32 %v2521, %v2527
        %v2536 = vadd.f32 %v2505, %v2528
        %v2537 = vadd.f32 %v2506, %v2529
        %v2538 = vadd.f32 %v2507, %v2530
        %v2539 = vadd.f32 %v2508, %v2531
        %v2540 = vadd.f32 %v2509, %v2532
        %v2541 = vadd.f32 %v2510, %v2533
        %v2542 = vadd.f32 %v2511, %v2534
        %v2543 = vadd.f32 %v2512, %v2535
        %s2544 = scalar_lea.vmem %s303, 304
        %v2545 = vld [vmem:[%s2544 + $0x1] sm:$0xff]
        %v2546 = vld [vmem:[%s2544 + $0x11] sm:$0xff]
        %v2547 = vld [vmem:[%s2544 + $0x21] sm:$0xff]
        %v2548 = vld [vmem:[%s2544 + $0x31] sm:$0xff]
        %v2549 = vld [vmem:[%s2544 + $0x41] sm:$0xff]
        %v2550 = vld [vmem:[%s2544 + $0x51] sm:$0xff]
        %v2551 = vld [vmem:[%s2544 + $0x61] sm:$0xff]
        %v2552 = vld [vmem:[%s2544 + $0x71] sm:$0xff]
        %v2553 = vld [vmem:[%s2522 + $0x1] sm:$0x1]
        %v2554 = vlaneseq
        %v2555 = vshrl.u32 %v2554, 7
        %v2556 = vsub.s32 0, %v2555
        %v2557 = vrot.slane %v2553, %v2556
        %v2558 = vmul.f32 %v2545, %v2557
        %v2559 = vmul.f32 %v2546, %v2557
        %v2560 = vmul.f32 %v2547, %v2557
        %v2561 = vmul.f32 %v2548, %v2557
        %v2562 = vmul.f32 %v2549, %v2557
        %v2563 = vmul.f32 %v2550, %v2557
        %v2564 = vmul.f32 %v2551, %v2557
        %v2565 = vmul.f32 %v2552, %v2557
        %v2566 = vadd.f32 %v2536, %v2558
        %v2567 = vadd.f32 %v2537, %v2559
        %v2568 = vadd.f32 %v2538, %v2560
        %v2569 = vadd.f32 %v2539, %v2561
        %v2570 = vadd.f32 %v2540, %v2562
        %v2571 = vadd.f32 %v2541, %v2563
        %v2572 = vadd.f32 %v2542, %v2564
        %v2573 = vadd.f32 %v2543, %v2565
        %v2574 = vld [vmem:[%s2513 + $0x1] sm:$0xff]
        %v2575 = vld [vmem:[%s2513 + $0x11] sm:$0xff]
        %v2576 = vld [vmem:[%s2513 + $0x21] sm:$0xff]
        %v2577 = vld [vmem:[%s2513 + $0x31] sm:$0xff]
        %v2578 = vld [vmem:[%s2513 + $0x41] sm:$0xff]
        %v2579 = vld [vmem:[%s2513 + $0x51] sm:$0xff]
        %v2580 = vld [vmem:[%s2513 + $0x61] sm:$0xff]
        %v2581 = vld [vmem:[%s2513 + $0x71] sm:$0xff]
        %v2582 = vld [vmem:[%s2522 + $0x2] sm:$0x1]
        %v2583 = vlaneseq
        %v2584 = vshrl.u32 %v2583, 7
        %v2585 = vsub.s32 0, %v2584
        %v2586 = vrot.slane %v2582, %v2585
        %v2587 = vmul.f32 %v2574, %v2586
        %v2588 = vmul.f32 %v2575, %v2586
        %v2589 = vmul.f32 %v2576, %v2586
        %v2590 = vmul.f32 %v2577, %v2586
        %v2591 = vmul.f32 %v2578, %v2586
        %v2592 = vmul.f32 %v2579, %v2586
        %v2593 = vmul.f32 %v2580, %v2586
        %v2594 = vmul.f32 %v2581, %v2586
        %v2595 = vadd.f32 %v2566, %v2587
        %v2596 = vadd.f32 %v2567, %v2588
        %v2597 = vadd.f32 %v2568, %v2589
        %v2598 = vadd.f32 %v2569, %v2590
        %v2599 = vadd.f32 %v2570, %v2591
        %v2600 = vadd.f32 %v2571, %v2592
        %v2601 = vadd.f32 %v2572, %v2593
        %v2602 = vadd.f32 %v2573, %v2594
        %s2603 = scalar_lea.vmem [#allocation2], 432
        %v2604 = vld [vmem:[%s2603] sm:$0xff]
        %v2605 = vld [vmem:[%s2603 + $0x10] sm:$0xff]
        %v2606 = vld [vmem:[%s2603 + $0x20] sm:$0xff]
        %v2607 = vld [vmem:[%s2603 + $0x30] sm:$0xff]
        %v2608 = vld [vmem:[%s2603 + $0x40] sm:$0xff]
        %v2609 = vld [vmem:[%s2603 + $0x50] sm:$0xff]
        %v2610 = vld [vmem:[%s2603 + $0x60] sm:$0xff]
        %v2611 = vld [vmem:[%s2603 + $0x70] sm:$0xff]
        %v2612 = vld [vmem:[%s2] sm:$0x1]
        %v2613 = vlaneseq
        %v2614 = vshrl.u32 %v2613, 7
        %v2615 = vsub.s32 0, %v2614
        %v2616 = vrot.slane %v2612, %v2615
        %v2617 = vmul.f32 %v2604, %v2616
        %v2618 = vmul.f32 %v2605, %v2616
        %v2619 = vmul.f32 %v2606, %v2616
        %v2620 = vmul.f32 %v2607, %v2616
        %v2621 = vmul.f32 %v2608, %v2616
        %v2622 = vmul.f32 %v2609, %v2616
        %v2623 = vmul.f32 %v2610, %v2616
        %v2624 = vmul.f32 %v2611, %v2616
        %v2625 = vadd.f32 %v2617, 0.0
        %v2626 = vadd.f32 %v2618, 0.0
        %v2627 = vadd.f32 %v2619, 0.0
        %v2628 = vadd.f32 %v2620, 0.0
        %v2629 = vadd.f32 %v2621, 0.0
        %v2630 = vadd.f32 %v2622, 0.0
        %v2631 = vadd.f32 %v2623, 0.0
        %v2632 = vadd.f32 %v2624, 0.0
        %s2633 = scalar_lea.vmem [#allocation2], 288
        %v2634 = vld [vmem:[%s2633 + $0x1] sm:$0xff]
        %v2635 = vld [vmem:[%s2633 + $0x11] sm:$0xff]
        %v2636 = vld [vmem:[%s2633 + $0x21] sm:$0xff]
        %v2637 = vld [vmem:[%s2633 + $0x31] sm:$0xff]
        %v2638 = vld [vmem:[%s2633 + $0x41] sm:$0xff]
        %v2639 = vld [vmem:[%s2633 + $0x51] sm:$0xff]
        %v2640 = vld [vmem:[%s2633 + $0x61] sm:$0xff]
        %v2641 = vld [vmem:[%s2633 + $0x71] sm:$0xff]
        %v2642 = vld [vmem:[%s2 + $0x1] sm:$0x1]
        %v2643 = vlaneseq
        %v2644 = vshrl.u32 %v2643, 7
        %v2645 = vsub.s32 0, %v2644
        %v2646 = vrot.slane %v2642, %v2645
        %v2647 = vmul.f32 %v2634, %v2646
        %v2648 = vmul.f32 %v2635, %v2646
        %v2649 = vmul.f32 %v2636, %v2646
        %v2650 = vmul.f32 %v2637, %v2646
        %v2651 = vmul.f32 %v2638, %v2646
        %v2652 = vmul.f32 %v2639, %v2646
        %v2653 = vmul.f32 %v2640, %v2646
        %v2654 = vmul.f32 %v2641, %v2646
        %v2655 = vadd.f32 %v2625, %v2647
        %v2656 = vadd.f32 %v2626, %v2648
        %v2657 = vadd.f32 %v2627, %v2649
        %v2658 = vadd.f32 %v2628, %v2650
        %v2659 = vadd.f32 %v2629, %v2651
        %v2660 = vadd.f32 %v2630, %v2652
        %v2661 = vadd.f32 %v2631, %v2653
        %v2662 = vadd.f32 %v2632, %v2654
        %v2663 = vld [vmem:[%s2603 + $0x1] sm:$0xff]
        %v2664 = vld [vmem:[%s2603 + $0x11] sm:$0xff]
        %v2665 = vld [vmem:[%s2603 + $0x21] sm:$0xff]
        %v2666 = vld [vmem:[%s2603 + $0x31] sm:$0xff]
        %v2667 = vld [vmem:[%s2603 + $0x41] sm:$0xff]
        %v2668 = vld [vmem:[%s2603 + $0x51] sm:$0xff]
        %v2669 = vld [vmem:[%s2603 + $0x61] sm:$0xff]
        %v2670 = vld [vmem:[%s2603 + $0x71] sm:$0xff]
        %v2671 = vld [vmem:[%s2 + $0x2] sm:$0x1]
        %v2672 = vlaneseq
        %v2673 = vshrl.u32 %v2672, 7
        %v2674 = vsub.s32 0, %v2673
        %v2675 = vrot.slane %v2671, %v2674
        %v2676 = vmul.f32 %v2663, %v2675
        %v2677 = vmul.f32 %v2664, %v2675
        %v2678 = vmul.f32 %v2665, %v2675
        %v2679 = vmul.f32 %v2666, %v2675
        %v2680 = vmul.f32 %v2667, %v2675
        %v2681 = vmul.f32 %v2668, %v2675
        %v2682 = vmul.f32 %v2669, %v2675
        %v2683 = vmul.f32 %v2670, %v2675
        %v2684 = vadd.f32 %v2655, %v2676
        %v2685 = vadd.f32 %v2656, %v2677
        %v2686 = vadd.f32 %v2657, %v2678
        %v2687 = vadd.f32 %v2658, %v2679
        %v2688 = vadd.f32 %v2659, %v2680
        %v2689 = vadd.f32 %v2660, %v2681
        %v2690 = vadd.f32 %v2661, %v2682
        %v2691 = vadd.f32 %v2662, %v2683
        %s2692 = scalar_lea.vmem [#allocation2], 160
        %v2693 = vld [vmem:[%s2692] sm:$0xff]
        %v2694 = vld [vmem:[%s2692 + $0x10] sm:$0xff]
        %v2695 = vld [vmem:[%s2692 + $0x20] sm:$0xff]
        %v2696 = vld [vmem:[%s2692 + $0x30] sm:$0xff]
        %v2697 = vld [vmem:[%s2692 + $0x40] sm:$0xff]
        %v2698 = vld [vmem:[%s2692 + $0x50] sm:$0xff]
        %v2699 = vld [vmem:[%s2692 + $0x60] sm:$0xff]
        %v2700 = vld [vmem:[%s2692 + $0x70] sm:$0xff]
        %s2701 = scalar_lea.vmem %s2, 4
        %v2702 = vld [vmem:[%s2701] sm:$0x1]
        %v2703 = vlaneseq
        %v2704 = vshrl.u32 %v2703, 7
        %v2705 = vsub.s32 0, %v2704
        %v2706 = vrot.slane %v2702, %v2705
        %v2707 = vmul.f32 %v2693, %v2706
        %v2708 = vmul.f32 %v2694, %v2706
        %v2709 = vmul.f32 %v2695, %v2706
        %v2710 = vmul.f32 %v2696, %v2706
        %v2711 = vmul.f32 %v2697, %v2706
        %v2712 = vmul.f32 %v2698, %v2706
        %v2713 = vmul.f32 %v2699, %v2706
        %v2714 = vmul.f32 %v2700, %v2706
        %v2715 = vadd.f32 %v2684, %v2707
        %v2716 = vadd.f32 %v2685, %v2708
        %v2717 = vadd.f32 %v2686, %v2709
        %v2718 = vadd.f32 %v2687, %v2710
        %v2719 = vadd.f32 %v2688, %v2711
        %v2720 = vadd.f32 %v2689, %v2712
        %v2721 = vadd.f32 %v2690, %v2713
        %v2722 = vadd.f32 %v2691, %v2714
        %v2723 = vld [vmem:[%s2302 + $0x1] sm:$0xff]
        %v2724 = vld [vmem:[%s2302 + $0x11] sm:$0xff]
        %v2725 = vld [vmem:[%s2302 + $0x21] sm:$0xff]
        %v2726 = vld [vmem:[%s2302 + $0x31] sm:$0xff]
        %v2727 = vld [vmem:[%s2302 + $0x41] sm:$0xff]
        %v2728 = vld [vmem:[%s2302 + $0x51] sm:$0xff]
        %v2729 = vld [vmem:[%s2302 + $0x61] sm:$0xff]
        %v2730 = vld [vmem:[%s2302 + $0x71] sm:$0xff]
        %v2731 = vld [vmem:[%s2701 + $0x1] sm:$0x1]
        %v2732 = vlaneseq
        %v2733 = vshrl.u32 %v2732, 7
        %v2734 = vsub.s32 0, %v2733
        %v2735 = vrot.slane %v2731, %v2734
        %v2736 = vmul.f32 %v2723, %v2735
        %v2737 = vmul.f32 %v2724, %v2735
        %v2738 = vmul.f32 %v2725, %v2735
        %v2739 = vmul.f32 %v2726, %v2735
        %v2740 = vmul.f32 %v2727, %v2735
        %v2741 = vmul.f32 %v2728, %v2735
        %v2742 = vmul.f32 %v2729, %v2735
        %v2743 = vmul.f32 %v2730, %v2735
        %v2744 = vadd.f32 %v2715, %v2736
        %v2745 = vadd.f32 %v2716, %v2737
        %v2746 = vadd.f32 %v2717, %v2738
        %v2747 = vadd.f32 %v2718, %v2739
        %v2748 = vadd.f32 %v2719, %v2740
        %v2749 = vadd.f32 %v2720, %v2741
        %v2750 = vadd.f32 %v2721, %v2742
        %v2751 = vadd.f32 %v2722, %v2743
        %v2752 = vld [vmem:[%s2692 + $0x1] sm:$0xff]
        %v2753 = vld [vmem:[%s2692 + $0x11] sm:$0xff]
        %v2754 = vld [vmem:[%s2692 + $0x21] sm:$0xff]
        %v2755 = vld [vmem:[%s2692 + $0x31] sm:$0xff]
        %v2756 = vld [vmem:[%s2692 + $0x41] sm:$0xff]
        %v2757 = vld [vmem:[%s2692 + $0x51] sm:$0xff]
        %v2758 = vld [vmem:[%s2692 + $0x61] sm:$0xff]
        %v2759 = vld [vmem:[%s2692 + $0x71] sm:$0xff]
        %v2760 = vld [vmem:[%s2701 + $0x2] sm:$0x1]
        %v2761 = vlaneseq
        %v2762 = vshrl.u32 %v2761, 7
        %v2763 = vsub.s32 0, %v2762
        %v2764 = vrot.slane %v2760, %v2763
        %v2765 = vmul.f32 %v2752, %v2764
        %v2766 = vmul.f32 %v2753, %v2764
        %v2767 = vmul.f32 %v2754, %v2764
        %v2768 = vmul.f32 %v2755, %v2764
        %v2769 = vmul.f32 %v2756, %v2764
        %v2770 = vmul.f32 %v2757, %v2764
        %v2771 = vmul.f32 %v2758, %v2764
        %v2772 = vmul.f32 %v2759, %v2764
        %v2773 = vadd.f32 %v2744, %v2765
        %v2774 = vadd.f32 %v2745, %v2766
        %v2775 = vadd.f32 %v2746, %v2767
        %v2776 = vadd.f32 %v2747, %v2768
        %v2777 = vadd.f32 %v2748, %v2769
        %v2778 = vadd.f32 %v2749, %v2770
        %v2779 = vadd.f32 %v2750, %v2771
        %v2780 = vadd.f32 %v2751, %v2772
        %s2781 = scalar_lea.vmem [#allocation2], 448
        %v2782 = vld [vmem:[%s2781] sm:$0xff]
        %v2783 = vld [vmem:[%s2781 + $0x10] sm:$0xff]
        %v2784 = vld [vmem:[%s2781 + $0x20] sm:$0xff]
        %v2785 = vld [vmem:[%s2781 + $0x30] sm:$0xff]
        %v2786 = vld [vmem:[%s2781 + $0x40] sm:$0xff]
        %v2787 = vld [vmem:[%s2781 + $0x50] sm:$0xff]
        %v2788 = vld [vmem:[%s2781 + $0x60] sm:$0xff]
        %v2789 = vld [vmem:[%s2781 + $0x70] sm:$0xff]
        %s2790 = scalar_lea.vmem %s2, 8
        %v2791 = vld [vmem:[%s2790] sm:$0x1]
        %v2792 = vlaneseq
        %v2793 = vshrl.u32 %v2792, 7
        %v2794 = vsub.s32 0, %v2793
        %v2795 = vrot.slane %v2791, %v2794
        %v2796 = vmul.f32 %v2782, %v2795
        %v2797 = vmul.f32 %v2783, %v2795
        %v2798 = vmul.f32 %v2784, %v2795
        %v2799 = vmul.f32 %v2785, %v2795
        %v2800 = vmul.f32 %v2786, %v2795
        %v2801 = vmul.f32 %v2787, %v2795
        %v2802 = vmul.f32 %v2788, %v2795
        %v2803 = vmul.f32 %v2789, %v2795
        %v2804 = vadd.f32 %v2773, %v2796
        %v2805 = vadd.f32 %v2774, %v2797
        %v2806 = vadd.f32 %v2775, %v2798
        %v2807 = vadd.f32 %v2776, %v2799
        %v2808 = vadd.f32 %v2777, %v2800
        %v2809 = vadd.f32 %v2778, %v2801
        %v2810 = vadd.f32 %v2779, %v2802
        %v2811 = vadd.f32 %v2780, %v2803
        %s2812 = scalar_lea.vmem [#allocation2], 304
        %v2813 = vld [vmem:[%s2812 + $0x1] sm:$0xff]
        %v2814 = vld [vmem:[%s2812 + $0x11] sm:$0xff]
        %v2815 = vld [vmem:[%s2812 + $0x21] sm:$0xff]
        %v2816 = vld [vmem:[%s2812 + $0x31] sm:$0xff]
        %v2817 = vld [vmem:[%s2812 + $0x41] sm:$0xff]
        %v2818 = vld [vmem:[%s2812 + $0x51] sm:$0xff]
        %v2819 = vld [vmem:[%s2812 + $0x61] sm:$0xff]
        %v2820 = vld [vmem:[%s2812 + $0x71] sm:$0xff]
        %v2821 = vld [vmem:[%s2790 + $0x1] sm:$0x1]
        %v2822 = vlaneseq
        %v2823 = vshrl.u32 %v2822, 7
        %v2824 = vsub.s32 0, %v2823
        %v2825 = vrot.slane %v2821, %v2824
        %v2826 = vmul.f32 %v2813, %v2825
        %v2827 = vmul.f32 %v2814, %v2825
        %v2828 = vmul.f32 %v2815, %v2825
        %v2829 = vmul.f32 %v2816, %v2825
        %v2830 = vmul.f32 %v2817, %v2825
        %v2831 = vmul.f32 %v2818, %v2825
        %v2832 = vmul.f32 %v2819, %v2825
        %v2833 = vmul.f32 %v2820, %v2825
        %v2834 = vadd.f32 %v2804, %v2826
        %v2835 = vadd.f32 %v2805, %v2827
        %v2836 = vadd.f32 %v2806, %v2828
        %v2837 = vadd.f32 %v2807, %v2829
        %v2838 = vadd.f32 %v2808, %v2830
        %v2839 = vadd.f32 %v2809, %v2831
        %v2840 = vadd.f32 %v2810, %v2832
        %v2841 = vadd.f32 %v2811, %v2833
        %v2842 = vld [vmem:[%s2781 + $0x1] sm:$0xff]
        %v2843 = vld [vmem:[%s2781 + $0x11] sm:$0xff]
        %v2844 = vld [vmem:[%s2781 + $0x21] sm:$0xff]
        %v2845 = vld [vmem:[%s2781 + $0x31] sm:$0xff]
        %v2846 = vld [vmem:[%s2781 + $0x41] sm:$0xff]
        %v2847 = vld [vmem:[%s2781 + $0x51] sm:$0xff]
        %v2848 = vld [vmem:[%s2781 + $0x61] sm:$0xff]
        %v2849 = vld [vmem:[%s2781 + $0x71] sm:$0xff]
        %v2850 = vld [vmem:[%s2790 + $0x2] sm:$0x1]
        %v2851 = vlaneseq
        %v2852 = vshrl.u32 %v2851, 7
        %v2853 = vsub.s32 0, %v2852
        %v2854 = vrot.slane %v2850, %v2853
        %v2855 = vmul.f32 %v2842, %v2854
        %v2856 = vmul.f32 %v2843, %v2854
        %v2857 = vmul.f32 %v2844, %v2854
        %v2858 = vmul.f32 %v2845, %v2854
        %v2859 = vmul.f32 %v2846, %v2854
        %v2860 = vmul.f32 %v2847, %v2854
        %v2861 = vmul.f32 %v2848, %v2854
        %v2862 = vmul.f32 %v2849, %v2854
        %v2863 = vadd.f32 %v2834, %v2855
        %v2864 = vadd.f32 %v2835, %v2856
        %v2865 = vadd.f32 %v2836, %v2857
        %v2866 = vadd.f32 %v2837, %v2858
        %v2867 = vadd.f32 %v2838, %v2859
        %v2868 = vadd.f32 %v2839, %v2860
        %v2869 = vadd.f32 %v2840, %v2861
        %v2870 = vadd.f32 %v2841, %v2862
        %v2871 = vld [vmem:[%s5] sm:$0xf]
        %v2872 = vld [vmem:[%s6] sm:$0xf]
        %v2874 = vsel %vm345, %v2863, 0
        %v2877 = vsel %vm345, %v2864, 0
        %v2880 = vsel %vm345, %v2865, 0
        %v2883 = vsel %vm345, %v2866, 0
        %v2886 = vsel %vm345, %v2867, 0
        %v2889 = vsel %vm345, %v2868, 0
        %v2892 = vsel %vm345, %v2869, 0
        %v2895 = vsel %vm345, %v2870, 0
        %v2898 = vsel %vm442, %v2872, 0
        %2900 = vmatprep.subr.mxu0 0.0
        %v2901 = vand.u32 %v2898, 4294901760
        %2902 = vmatpush1.msra.mxu0 %v2901
        %2903 = vmatprep.subr.mxu0 0.0
        %2904 = vmatpush1.msra.mxu0 0.0
        %2905 = vmatprep.subr.mxu0 0.0
        %2906 = vmatpush1.msra.mxu0 0.0
        %2907 = vmatprep.subr.mxu0 0.0
        %2908 = vmatpush1.msra.mxu0 0.0
        %2909 = vmatprep.subr.mxu0 0.0
        %2910 = vmatpush1.msra.mxu0 0.0
        %2911 = vmatprep.subr.mxu0 0.0
        %2912 = vmatpush1.msra.mxu0 0.0
        %2913 = vmatprep.subr.mxu0 0.0
        %2914 = vmatpush1.msra.mxu0 0.0
        %2915 = vmatprep.subr.mxu0 0.0
        %2916 = vmatpush1.msra.mxu0 0.0
        %2917 = vmatprep.subr.mxu0 0.0
        %2918 = vmatpush1.msra.mxu0 0.0
        %2919 = vmatprep.subr.mxu0 0.0
        %2920 = vmatpush1.msra.mxu0 0.0
        %2921 = vmatprep.subr.mxu0 0.0
        %2922 = vmatpush1.msra.mxu0 0.0
        %2923 = vmatprep.subr.mxu0 0.0
        %2924 = vmatpush1.msra.mxu0 0.0
        %2925 = vmatprep.subr.mxu0 0.0
        %2926 = vmatpush1.msra.mxu0 0.0
        %2927 = vmatprep.subr.mxu0 0.0
        %2928 = vmatpush1.msra.mxu0 0.0
        %2929 = vmatprep.subr.mxu0 0.0
        %2930 = vmatpush1.msra.mxu0 0.0
        %2931 = vmatprep.subr.mxu0 0.0
        %2932 = vmatpush1.msra.mxu0 0.0
        %2933 = vmatprep.subr.mxu0 0.0
        %2934 = vmatpush1.msra.mxu0 0.0
        %2935 = vmatprep.subr.mxu0 0.0
        %2936 = vmatpush1.msra.mxu0 0.0
        %2937 = vmatprep.subr.mxu0 0.0
        %2938 = vmatpush1.msra.mxu0 0.0
        %2939 = vmatprep.subr.mxu0 0.0
        %2940 = vmatpush1.msra.mxu0 0.0
        %2941 = vmatprep.subr.mxu0 0.0
        %2942 = vmatpush1.msra.mxu0 0.0
        %2943 = vmatprep.subr.mxu0 0.0
        %2944 = vmatpush1.msra.mxu0 0.0
        %2945 = vmatprep.subr.mxu0 0.0
        %2946 = vmatpush1.msra.mxu0 0.0
        %2947 = vmatprep.subr.mxu0 0.0
        %2948 = vmatpush1.msra.mxu0 0.0
        %2949 = vmatprep.subr.mxu0 0.0
        %2950 = vmatpush1.msra.mxu0 0.0
        %2951 = vmatprep.subr.mxu0 0.0
        %2952 = vmatpush1.msra.mxu0 0.0
        %2953 = vmatprep.subr.mxu0 0.0
        %2954 = vmatpush1.msra.mxu0 0.0
        %2955 = vmatprep.subr.mxu0 0.0
        %2956 = vmatpush1.msra.mxu0 0.0
        %2957 = vmatprep.subr.mxu0 0.0
        %2958 = vmatpush1.msra.mxu0 0.0
        %2959 = vmatprep.subr.mxu0 0.0
        %2960 = vmatpush1.msra.mxu0 0.0
        %2961 = vmatprep.subr.mxu0 0.0
        %2962 = vmatpush1.msra.mxu0 0.0
        %2963 = vmatprep.subr.mxu0 0.0
        %2964 = vmatpush1.msra.mxu0 0.0
        %2965 = vmatprep.mubr.f32.mxu0 0.0
        %v2966 = vand.u32 %v2874, 4294901760
        %v2967 = vsub.f32 %v2874, %v2966
        %v2968 = vand.u32 %v2967, 4294901760
        %v2969 = vsub.f32 %v2967, %v2968
        %v2970 = vand.u32 %v2969, 4294901760
        %2971 = vmatmul.mubr.f32.gmra.mrb[0].mxu0 %v2970
        %v2972 = vpop.f32.mrb[0].mxu0
        %v2973 = vadd.f32 0.0, %v2972
        %v2974 = vpop.f32.mrb[0].mxu0
        %2975 = vmatprep.mubr.f32.mxu0 0.0
        %v2976 = vand.u32 %v2877, 4294901760
        %v2977 = vsub.f32 %v2877, %v2976
        %v2978 = vand.u32 %v2977, 4294901760
        %v2979 = vsub.f32 %v2977, %v2978
        %v2980 = vand.u32 %v2979, 4294901760
        %2981 = vmatmul.mubr.f32.gmra.mrb[0].mxu0 %v2980
        %v2982 = vpop.f32.mrb[0].mxu0
        %v2983 = vadd.f32 0.0, %v2982
        %v2984 = vpop.f32.mrb[0].mxu0
        %2985 = vmatprep.mubr.f32.mxu0 0.0
        %v2986 = vand.u32 %v2880, 4294901760
        %v2987 = vsub.f32 %v2880, %v2986
        %v2988 = vand.u32 %v2987, 4294901760
        %v2989 = vsub.f32 %v2987, %v2988
        %v2990 = vand.u32 %v2989, 4294901760
        %2991 = vmatmul.mubr.f32.gmra.mrb[0].mxu0 %v2990
        %v2992 = vpop.f32.mrb[0].mxu0
        %v2993 = vadd.f32 0.0, %v2992
        %v2994 = vpop.f32.mrb[0].mxu0
        %2995 = vmatprep.mubr.f32.mxu0 0.0
        %v2996 = vand.u32 %v2883, 4294901760
        %v2997 = vsub.f32 %v2883, %v2996
        %v2998 = vand.u32 %v2997, 4294901760
        %v2999 = vsub.f32 %v2997, %v2998
        %v3000 = vand.u32 %v2999, 4294901760
        %3001 = vmatmul.mubr.f32.gmra.mrb[0].mxu0 %v3000
        %v3002 = vpop.f32.mrb[0].mxu0
        %v3003 = vadd.f32 0.0, %v3002
        %v3004 = vpop.f32.mrb[0].mxu0
        %3005 = vmatprep.mubr.f32.mxu0 0.0
        %v3006 = vand.u32 %v2886, 4294901760
        %v3007 = vsub.f32 %v2886, %v3006
        %v3008 = vand.u32 %v3007, 4294901760
        %v3009 = vsub.f32 %v3007, %v3008
        %v3010 = vand.u32 %v3009, 4294901760
        %3011 = vmatmul.mubr.f32.gmra.mrb[0].mxu0 %v3010
        %v3012 = vpop.f32.mrb[0].mxu0
        %v3013 = vadd.f32 0.0, %v3012
        %v3014 = vpop.f32.mrb[0].mxu0
        %3015 = vmatprep.mubr.f32.mxu0 0.0
        %v3016 = vand.u32 %v2889, 4294901760
        %v3017 = vsub.f32 %v2889, %v3016
        %v3018 = vand.u32 %v3017, 4294901760
        %v3019 = vsub.f32 %v3017, %v3018
        %v3020 = vand.u32 %v3019, 4294901760
        %3021 = vmatmul.mubr.f32.gmra.mrb[0].mxu0 %v3020
        %v3022 = vpop.f32.mrb[0].mxu0
        %v3023 = vadd.f32 0.0, %v3022
        %v3024 = vpop.f32.mrb[0].mxu0
        %3025 = vmatprep.mubr.f32.mxu0 0.0
        %v3026 = vand.u32 %v2892, 4294901760
        %v3027 = vsub.f32 %v2892, %v3026
        %v3028 = vand.u32 %v3027, 4294901760
        %v3029 = vsub.f32 %v3027, %v3028
        %v3030 = vand.u32 %v3029, 4294901760
        %3031 = vmatmul.mubr.f32.gmra.mrb[0].mxu0 %v3030
        %v3032 = vpop.f32.mrb[0].mxu0
        %v3033 = vadd.f32 0.0, %v3032
        %v3034 = vpop.f32.mrb[0].mxu0
        %3035 = vmatprep.mubr.f32.mxu0 0.0
        %v3036 = vand.u32 %v2895, 4294901760
        %v3037 = vsub.f32 %v2895, %v3036
        %v3038 = vand.u32 %v3037, 4294901760
        %v3039 = vsub.f32 %v3037, %v3038
        %v3040 = vand.u32 %v3039, 4294901760
        %3041 = vmatmul.mubr.f32.gmra.mrb[0].mxu0 %v3040
        %v3042 = vpop.f32.mrb[0].mxu0
        %v3043 = vadd.f32 0.0, %v3042
        %v3044 = vpop.f32.mrb[0].mxu0
        %3045 = vdwg.mxu0
        %3046 = vmatprep.subr.mxu0 0.0
        %v3047 = vand.u32 %v2898, 4294901760
        %v3048 = vsub.f32 %v2898, %v3047
        %v3049 = vand.u32 %v3048, 4294901760
        %v3050 = vsub.f32 %v3048, %v3049
        %v3051 = vand.u32 %v3050, 4294901760
        %3052 = vmatpush1.msra.mxu0 %v3051
        %3053 = vmatprep.subr.mxu0 0.0
        %3054 = vmatpush1.msra.mxu0 0.0
        %3055 = vmatprep.subr.mxu0 0.0
        %3056 = vmatpush1.msra.mxu0 0.0
        %3057 = vmatprep.subr.mxu0 0.0
        %3058 = vmatpush1.msra.mxu0 0.0
        %3059 = vmatprep.subr.mxu0 0.0
        %3060 = vmatpush1.msra.mxu0 0.0
        %3061 = vmatprep.subr.mxu0 0.0
        %3062 = vmatpush1.msra.mxu0 0.0
        %3063 = vmatprep.subr.mxu0 0.0
        %3064 = vmatpush1.msra.mxu0 0.0
        %3065 = vmatprep.subr.mxu0 0.0
        %3066 = vmatpush1.msra.mxu0 0.0
        %3067 = vmatprep.subr.mxu0 0.0
        %3068 = vmatpush1.msra.mxu0 0.0
        %3069 = vmatprep.subr.mxu0 0.0
        %3070 = vmatpush1.msra.mxu0 0.0
        %3071 = vmatprep.subr.mxu0 0.0
        %3072 = vmatpush1.msra.mxu0 0.0
        %3073 = vmatprep.subr.mxu0 0.0
        %3074 = vmatpush1.msra.mxu0 0.0
        %3075 = vmatprep.subr.mxu0 0.0
        %3076 = vmatpush1.msra.mxu0 0.0
        %3077 = vmatprep.subr.mxu0 0.0
        %3078 = vmatpush1.msra.mxu0 0.0
        %3079 = vmatprep.subr.mxu0 0.0
        %3080 = vmatpush1.msra.mxu0 0.0
        %3081 = vmatprep.subr.mxu0 0.0
        %3082 = vmatpush1.msra.mxu0 0.0
        %3083 = vmatprep.subr.mxu0 0.0
        %3084 = vmatpush1.msra.mxu0 0.0
        %3085 = vmatprep.subr.mxu0 0.0
        %3086 = vmatpush1.msra.mxu0 0.0
        %3087 = vmatprep.subr.mxu0 0.0
        %3088 = vmatpush1.msra.mxu0 0.0
        %3089 = vmatprep.subr.mxu0 0.0
        %3090 = vmatpush1.msra.mxu0 0.0
        %3091 = vmatprep.subr.mxu0 0.0
        %3092 = vmatpush1.msra.mxu0 0.0
        %3093 = vmatprep.subr.mxu0 0.0
        %3094 = vmatpush1.msra.mxu0 0.0
        %3095 = vmatprep.subr.mxu0 0.0
        %3096 = vmatpush1.msra.mxu0 0.0
        %3097 = vmatprep.subr.mxu0 0.0
        %3098 = vmatpush1.msra.mxu0 0.0
        %3099 = vmatprep.subr.mxu0 0.0
        %3100 = vmatpush1.msra.mxu0 0.0
        %3101 = vmatprep.subr.mxu0 0.0
        %3102 = vmatpush1.msra.mxu0 0.0
        %3103 = vmatprep.subr.mxu0 0.0
        %3104 = vmatpush1.msra.mxu0 0.0
        %3105 = vmatprep.subr.mxu0 0.0
        %3106 = vmatpush1.msra.mxu0 0.0
        %3107 = vmatprep.subr.mxu0 0.0
        %3108 = vmatpush1.msra.mxu0 0.0
        %3109 = vmatprep.subr.mxu0 0.0
        %3110 = vmatpush1.msra.mxu0 0.0
        %3111 = vmatprep.subr.mxu0 0.0
        %3112 = vmatpush1.msra.mxu0 0.0
        %3113 = vmatprep.subr.mxu0 0.0
        %3114 = vmatpush1.msra.mxu0 0.0
        %3115 = vmatprep.mubr.f32.mxu0 0.0
        %v3116 = vand.u32 %v2874, 4294901760
        %3117 = vmatmul.mubr.f32.gmra.mrb[0].mxu0 %v3116
        %v3118 = vpop.f32.mrb[0].mxu0
        %v3119 = vadd.f32 %v2973, %v3118
        %v3120 = vpop.f32.mrb[0].mxu0
        %3121 = vmatprep.mubr.f32.mxu0 0.0
        %v3122 = vand.u32 %v2877, 4294901760
        %3123 = vmatmul.mubr.f32.gmra.mrb[0].mxu0 %v3122
        %v3124 = vpop.f32.mrb[0].mxu0
        %v3125 = vadd.f32 %v2983, %v3124
        %v3126 = vpop.f32.mrb[0].mxu0
        %3127 = vmatprep.mubr.f32.mxu0 0.0
        %v3128 = vand.u32 %v2880, 4294901760
        %3129 = vmatmul.mubr.f32.gmra.mrb[0].mxu0 %v3128
        %v3130 = vpop.f32.mrb[0].mxu0
        %v3131 = vadd.f32 %v2993, %v3130
        %v3132 = vpop.f32.mrb[0].mxu0
        %3133 = vmatprep.mubr.f32.mxu0 0.0
        %v3134 = vand.u32 %v2883, 4294901760
        %3135 = vmatmul.mubr.f32.gmra.mrb[0].mxu0 %v3134
        %v3136 = vpop.f32.mrb[0].mxu0
        %v3137 = vadd.f32 %v3003, %v3136
        %v3138 = vpop.f32.mrb[0].mxu0
        %3139 = vmatprep.mubr.f32.mxu0 0.0
        %v3140 = vand.u32 %v2886, 4294901760
        %3141 = vmatmul.mubr.f32.gmra.mrb[0].mxu0 %v3140
        %v3142 = vpop.f32.mrb[0].mxu0
        %v3143 = vadd.f32 %v3013, %v3142
        %v3144 = vpop.f32.mrb[0].mxu0
        %3145 = vmatprep.mubr.f32.mxu0 0.0
        %v3146 = vand.u32 %v2889, 4294901760
        %3147 = vmatmul.mubr.f32.gmra.mrb[0].mxu0 %v3146
        %v3148 = vpop.f32.mrb[0].mxu0
        %v3149 = vadd.f32 %v3023, %v3148
        %v3150 = vpop.f32.mrb[0].mxu0
        %3151 = vmatprep.mubr.f32.mxu0 0.0
        %v3152 = vand.u32 %v2892, 4294901760
        %3153 = vmatmul.mubr.f32.gmra.mrb[0].mxu0 %v3152
        %v3154 = vpop.f32.mrb[0].mxu0
        %v3155 = vadd.f32 %v3033, %v3154
        %v3156 = vpop.f32.mrb[0].mxu0
        %3157 = vmatprep.mubr.f32.mxu0 0.0
        %v3158 = vand.u32 %v2895, 4294901760
        %3159 = vmatmul.mubr.f32.gmra.mrb[0].mxu0 %v3158
        %v3160 = vpop.f32.mrb[0].mxu0
        %v3161 = vadd.f32 %v3043, %v3160
        %v3162 = vpop.f32.mrb[0].mxu0
        %3163 = vdwg.mxu0
        %3164 = vmatprep.subr.mxu0 0.0
        %v3165 = vand.u32 %v2898, 4294901760
        %v3166 = vsub.f32 %v2898, %v3165
        %3167 = vmatpush1.msra.mxu0 %v3166
        %3168 = vmatprep.subr.mxu0 0.0
        %3169 = vmatpush1.msra.mxu0 0.0
        %3170 = vmatprep.subr.mxu0 0.0
        %3171 = vmatpush1.msra.mxu0 0.0
        %3172 = vmatprep.subr.mxu0 0.0
        %3173 = vmatpush1.msra.mxu0 0.0
        %3174 = vmatprep.subr.mxu0 0.0
        %3175 = vmatpush1.msra.mxu0 0.0
        %3176 = vmatprep.subr.mxu0 0.0
        %3177 = vmatpush1.msra.mxu0 0.0
        %3178 = vmatprep.subr.mxu0 0.0
        %3179 = vmatpush1.msra.mxu0 0.0
        %3180 = vmatprep.subr.mxu0 0.0
        %3181 = vmatpush1.msra.mxu0 0.0
        %3182 = vmatprep.subr.mxu0 0.0
        %3183 = vmatpush1.msra.mxu0 0.0
        %3184 = vmatprep.subr.mxu0 0.0
        %3185 = vmatpush1.msra.mxu0 0.0
        %3186 = vmatprep.subr.mxu0 0.0
        %3187 = vmatpush1.msra.mxu0 0.0
        %3188 = vmatprep.subr.mxu0 0.0
        %3189 = vmatpush1.msra.mxu0 0.0
        %3190 = vmatprep.subr.mxu0 0.0
        %3191 = vmatpush1.msra.mxu0 0.0
        %3192 = vmatprep.subr.mxu0 0.0
        %3193 = vmatpush1.msra.mxu0 0.0
        %3194 = vmatprep.subr.mxu0 0.0
        %3195 = vmatpush1.msra.mxu0 0.0
        %3196 = vmatprep.subr.mxu0 0.0
        %3197 = vmatpush1.msra.mxu0 0.0
        %3198 = vmatprep.subr.mxu0 0.0
        %3199 = vmatpush1.msra.mxu0 0.0
        %3200 = vmatprep.subr.mxu0 0.0
        %3201 = vmatpush1.msra.mxu0 0.0
        %3202 = vmatprep.subr.mxu0 0.0
        %3203 = vmatpush1.msra.mxu0 0.0
        %3204 = vmatprep.subr.mxu0 0.0
        %3205 = vmatpush1.msra.mxu0 0.0
        %3206 = vmatprep.subr.mxu0 0.0
        %3207 = vmatpush1.msra.mxu0 0.0
        %3208 = vmatprep.subr.mxu0 0.0
        %3209 = vmatpush1.msra.mxu0 0.0
        %3210 = vmatprep.subr.mxu0 0.0
        %3211 = vmatpush1.msra.mxu0 0.0
        %3212 = vmatprep.subr.mxu0 0.0
        %3213 = vmatpush1.msra.mxu0 0.0
        %3214 = vmatprep.subr.mxu0 0.0
        %3215 = vmatpush1.msra.mxu0 0.0
        %3216 = vmatprep.subr.mxu0 0.0
        %3217 = vmatpush1.msra.mxu0 0.0
        %3218 = vmatprep.subr.mxu0 0.0
        %3219 = vmatpush1.msra.mxu0 0.0
        %3220 = vmatprep.subr.mxu0 0.0
        %3221 = vmatpush1.msra.mxu0 0.0
        %3222 = vmatprep.subr.mxu0 0.0
        %3223 = vmatpush1.msra.mxu0 0.0
        %3224 = vmatprep.subr.mxu0 0.0
        %3225 = vmatpush1.msra.mxu0 0.0
        %3226 = vmatprep.subr.mxu0 0.0
        %3227 = vmatpush1.msra.mxu0 0.0
        %3228 = vmatprep.subr.mxu0 0.0
        %3229 = vmatpush1.msra.mxu0 0.0
        %3230 = vmatprep.mubr.f32.mxu0 0.0
        %v3231 = vand.u32 %v2874, 4294901760
        %v3232 = vsub.f32 %v2874, %v3231
        %3233 = vmatmul.mubr.f32.gmra.mrb[0].mxu0 %v3232
        %v3234 = vpop.f32.mrb[0].mxu0
        %v3235 = vadd.f32 %v3119, %v3234
        %v3236 = vpop.f32.mrb[0].mxu0
        %3237 = vmatprep.mubr.f32.mxu0 0.0
        %v3238 = vand.u32 %v2877, 4294901760
        %v3239 = vsub.f32 %v2877, %v3238
        %3240 = vmatmul.mubr.f32.gmra.mrb[0].mxu0 %v3239
        %v3241 = vpop.f32.mrb[0].mxu0
        %v3242 = vadd.f32 %v3125, %v3241
        %v3243 = vpop.f32.mrb[0].mxu0
        %3244 = vmatprep.mubr.f32.mxu0 0.0
        %v3245 = vand.u32 %v2880, 4294901760
        %v3246 = vsub.f32 %v2880, %v3245
        %3247 = vmatmul.mubr.f32.gmra.mrb[0].mxu0 %v3246
        %v3248 = vpop.f32.mrb[0].mxu0
        %v3249 = vadd.f32 %v3131, %v3248
        %v3250 = vpop.f32.mrb[0].mxu0
        %3251 = vmatprep.mubr.f32.mxu0 0.0
        %v3252 = vand.u32 %v2883, 4294901760
        %v3253 = vsub.f32 %v2883, %v3252
        %3254 = vmatmul.mubr.f32.gmra.mrb[0].mxu0 %v3253
        %v3255 = vpop.f32.mrb[0].mxu0
        %v3256 = vadd.f32 %v3137, %v3255
        %v3257 = vpop.f32.mrb[0].mxu0
        %3258 = vmatprep.mubr.f32.mxu0 0.0
        %v3259 = vand.u32 %v2886, 4294901760
        %v3260 = vsub.f32 %v2886, %v3259
        %3261 = vmatmul.mubr.f32.gmra.mrb[0].mxu0 %v3260
        %v3262 = vpop.f32.mrb[0].mxu0
        %v3263 = vadd.f32 %v3143, %v3262
        %v3264 = vpop.f32.mrb[0].mxu0
        %3265 = vmatprep.mubr.f32.mxu0 0.0
        %v3266 = vand.u32 %v2889, 4294901760
        %v3267 = vsub.f32 %v2889, %v3266
        %3268 = vmatmul.mubr.f32.gmra.mrb[0].mxu0 %v3267
        %v3269 = vpop.f32.mrb[0].mxu0
        %v3270 = vadd.f32 %v3149, %v3269
        %v3271 = vpop.f32.mrb[0].mxu0
        %3272 = vmatprep.mubr.f32.mxu0 0.0
        %v3273 = vand.u32 %v2892, 4294901760
        %v3274 = vsub.f32 %v2892, %v3273
        %3275 = vmatmul.mubr.f32.gmra.mrb[0].mxu0 %v3274
        %v3276 = vpop.f32.mrb[0].mxu0
        %v3277 = vadd.f32 %v3155, %v3276
        %v3278 = vpop.f32.mrb[0].mxu0
        %3279 = vmatprep.mubr.f32.mxu0 0.0
        %v3280 = vand.u32 %v2895, 4294901760
        %v3281 = vsub.f32 %v2895, %v3280
        %3282 = vmatmul.mubr.f32.gmra.mrb[0].mxu0 %v3281
        %v3283 = vpop.f32.mrb[0].mxu0
        %v3284 = vadd.f32 %v3161, %v3283
        %v3285 = vpop.f32.mrb[0].mxu0
        %3286 = vdwg.mxu0
        %3287 = vmatprep.subr.mxu0 0.0
        %v3288 = vand.u32 %v2898, 4294901760
        %3289 = vmatpush1.msra.mxu0 %v3288
        %3290 = vmatprep.subr.mxu0 0.0
        %3291 = vmatpush1.msra.mxu0 0.0
        %3292 = vmatprep.subr.mxu0 0.0
        %3293 = vmatpush1.msra.mxu0 0.0
        %3294 = vmatprep.subr.mxu0 0.0
        %3295 = vmatpush1.msra.mxu0 0.0
        %3296 = vmatprep.subr.mxu0 0.0
        %3297 = vmatpush1.msra.mxu0 0.0
        %3298 = vmatprep.subr.mxu0 0.0
        %3299 = vmatpush1.msra.mxu0 0.0
        %3300 = vmatprep.subr.mxu0 0.0
        %3301 = vmatpush1.msra.mxu0 0.0
        %3302 = vmatprep.subr.mxu0 0.0
        %3303 = vmatpush1.msra.mxu0 0.0
        %3304 = vmatprep.subr.mxu0 0.0
        %3305 = vmatpush1.msra.mxu0 0.0
        %3306 = vmatprep.subr.mxu0 0.0
        %3307 = vmatpush1.msra.mxu0 0.0
        %3308 = vmatprep.subr.mxu0 0.0
        %3309 = vmatpush1.msra.mxu0 0.0
        %3310 = vmatprep.subr.mxu0 0.0
        %3311 = vmatpush1.msra.mxu0 0.0
        %3312 = vmatprep.subr.mxu0 0.0
        %3313 = vmatpush1.msra.mxu0 0.0
        %3314 = vmatprep.subr.mxu0 0.0
        %3315 = vmatpush1.msra.mxu0 0.0
        %3316 = vmatprep.subr.mxu0 0.0
        %3317 = vmatpush1.msra.mxu0 0.0
        %3318 = vmatprep.subr.mxu0 0.0
        %3319 = vmatpush1.msra.mxu0 0.0
        %3320 = vmatprep.subr.mxu0 0.0
        %3321 = vmatpush1.msra.mxu0 0.0
        %3322 = vmatprep.subr.mxu0 0.0
        %3323 = vmatpush1.msra.mxu0 0.0
        %3324 = vmatprep.subr.mxu0 0.0
        %3325 = vmatpush1.msra.mxu0 0.0
        %3326 = vmatprep.subr.mxu0 0.0
        %3327 = vmatpush1.msra.mxu0 0.0
        %3328 = vmatprep.subr.mxu0 0.0
        %3329 = vmatpush1.msra.mxu0 0.0
        %3330 = vmatprep.subr.mxu0 0.0
        %3331 = vmatpush1.msra.mxu0 0.0
        %3332 = vmatprep.subr.mxu0 0.0
        %3333 = vmatpush1.msra.mxu0 0.0
        %3334 = vmatprep.subr.mxu0 0.0
        %3335 = vmatpush1.msra.mxu0 0.0
        %3336 = vmatprep.subr.mxu0 0.0
        %3337 = vmatpush1.msra.mxu0 0.0
        %3338 = vmatprep.subr.mxu0 0.0
        %3339 = vmatpush1.msra.mxu0 0.0
        %3340 = vmatprep.subr.mxu0 0.0
        %3341 = vmatpush1.msra.mxu0 0.0
        %3342 = vmatprep.subr.mxu0 0.0
        %3343 = vmatpush1.msra.mxu0 0.0
        %3344 = vmatprep.subr.mxu0 0.0
        %3345 = vmatpush1.msra.mxu0 0.0
        %3346 = vmatprep.subr.mxu0 0.0
        %3347 = vmatpush1.msra.mxu0 0.0
        %3348 = vmatprep.subr.mxu0 0.0
        %3349 = vmatpush1.msra.mxu0 0.0
        %3350 = vmatprep.subr.mxu0 0.0
        %3351 = vmatpush1.msra.mxu0 0.0
        %3352 = vmatprep.mubr.f32.mxu0 0.0
        %v3353 = vand.u32 %v2874, 4294901760
        %v3354 = vsub.f32 %v2874, %v3353
        %v3355 = vand.u32 %v3354, 4294901760
        %3356 = vmatmul.mubr.f32.gmra.mrb[0].mxu0 %v3355
        %v3357 = vpop.f32.mrb[0].mxu0
        %v3358 = vadd.f32 %v3235, %v3357
        %v3359 = vpop.f32.mrb[0].mxu0
        %3360 = vmatprep.mubr.f32.mxu0 0.0
        %v3361 = vand.u32 %v2877, 4294901760
        %v3362 = vsub.f32 %v2877, %v3361
        %v3363 = vand.u32 %v3362, 4294901760
        %3364 = vmatmul.mubr.f32.gmra.mrb[0].mxu0 %v3363
        %v3365 = vpop.f32.mrb[0].mxu0
        %v3366 = vadd.f32 %v3242, %v3365
        %v3367 = vpop.f32.mrb[0].mxu0
        %3368 = vmatprep.mubr.f32.mxu0 0.0
        %v3369 = vand.u32 %v2880, 4294901760
        %v3370 = vsub.f32 %v2880, %v3369
        %v3371 = vand.u32 %v3370, 4294901760
        %3372 = vmatmul.mubr.f32.gmra.mrb[0].mxu0 %v3371
        %v3373 = vpop.f32.mrb[0].mxu0
        %v3374 = vadd.f32 %v3249, %v3373
        %v3375 = vpop.f32.mrb[0].mxu0
        %3376 = vmatprep.mubr.f32.mxu0 0.0
        %v3377 = vand.u32 %v2883, 4294901760
        %v3378 = vsub.f32 %v2883, %v3377
        %v3379 = vand.u32 %v3378, 4294901760
        %3380 = vmatmul.mubr.f32.gmra.mrb[0].mxu0 %v3379
        %v3381 = vpop.f32.mrb[0].mxu0
        %v3382 = vadd.f32 %v3256, %v3381
        %v3383 = vpop.f32.mrb[0].mxu0
        %3384 = vmatprep.mubr.f32.mxu0 0.0
        %v3385 = vand.u32 %v2886, 4294901760
        %v3386 = vsub.f32 %v2886, %v3385
        %v3387 = vand.u32 %v3386, 4294901760
        %3388 = vmatmul.mubr.f32.gmra.mrb[0].mxu0 %v3387
        %v3389 = vpop.f32.mrb[0].mxu0
        %v3390 = vadd.f32 %v3263, %v3389
        %v3391 = vpop.f32.mrb[0].mxu0
        %3392 = vmatprep.mubr.f32.mxu0 0.0
        %v3393 = vand.u32 %v2889, 4294901760
        %v3394 = vsub.f32 %v2889, %v3393
        %v3395 = vand.u32 %v3394, 4294901760
        %3396 = vmatmul.mubr.f32.gmra.mrb[0].mxu0 %v3395
        %v3397 = vpop.f32.mrb[0].mxu0
        %v3398 = vadd.f32 %v3270, %v3397
        %v3399 = vpop.f32.mrb[0].mxu0
        %3400 = vmatprep.mubr.f32.mxu0 0.0
        %v3401 = vand.u32 %v2892, 4294901760
        %v3402 = vsub.f32 %v2892, %v3401
        %v3403 = vand.u32 %v3402, 4294901760
        %3404 = vmatmul.mubr.f32.gmra.mrb[0].mxu0 %v3403
        %v3405 = vpop.f32.mrb[0].mxu0
        %v3406 = vadd.f32 %v3277, %v3405
        %v3407 = vpop.f32.mrb[0].mxu0
        %3408 = vmatprep.mubr.f32.mxu0 0.0
        %v3409 = vand.u32 %v2895, 4294901760
        %v3410 = vsub.f32 %v2895, %v3409
        %v3411 = vand.u32 %v3410, 4294901760
        %3412 = vmatmul.mubr.f32.gmra.mrb[0].mxu0 %v3411
        %v3413 = vpop.f32.mrb[0].mxu0
        %v3414 = vadd.f32 %v3284, %v3413
        %v3415 = vpop.f32.mrb[0].mxu0
        %3416 = vdwg.mxu0
        %3417 = vmatprep.subr.mxu0 0.0
        %v3418 = vand.u32 %v2898, 4294901760
        %v3419 = vsub.f32 %v2898, %v3418
        %v3420 = vand.u32 %v3419, 4294901760
        %3421 = vmatpush1.msra.mxu0 %v3420
        %3422 = vmatprep.subr.mxu0 0.0
        %3423 = vmatpush1.msra.mxu0 0.0
        %3424 = vmatprep.subr.mxu0 0.0
        %3425 = vmatpush1.msra.mxu0 0.0
        %3426 = vmatprep.subr.mxu0 0.0
        %3427 = vmatpush1.msra.mxu0 0.0
        %3428 = vmatprep.subr.mxu0 0.0
        %3429 = vmatpush1.msra.mxu0 0.0
        %3430 = vmatprep.subr.mxu0 0.0
        %3431 = vmatpush1.msra.mxu0 0.0
        %3432 = vmatprep.subr.mxu0 0.0
        %3433 = vmatpush1.msra.mxu0 0.0
        %3434 = vmatprep.subr.mxu0 0.0
        %3435 = vmatpush1.msra.mxu0 0.0
        %3436 = vmatprep.subr.mxu0 0.0
        %3437 = vmatpush1.msra.mxu0 0.0
        %3438 = vmatprep.subr.mxu0 0.0
        %3439 = vmatpush1.msra.mxu0 0.0
        %3440 = vmatprep.subr.mxu0 0.0
        %3441 = vmatpush1.msra.mxu0 0.0
        %3442 = vmatprep.subr.mxu0 0.0
        %3443 = vmatpush1.msra.mxu0 0.0
        %3444 = vmatprep.subr.mxu0 0.0
        %3445 = vmatpush1.msra.mxu0 0.0
        %3446 = vmatprep.subr.mxu0 0.0
        %3447 = vmatpush1.msra.mxu0 0.0
        %3448 = vmatprep.subr.mxu0 0.0
        %3449 = vmatpush1.msra.mxu0 0.0
        %3450 = vmatprep.subr.mxu0 0.0
        %3451 = vmatpush1.msra.mxu0 0.0
        %3452 = vmatprep.subr.mxu0 0.0
        %3453 = vmatpush1.msra.mxu0 0.0
        %3454 = vmatprep.subr.mxu0 0.0
        %3455 = vmatpush1.msra.mxu0 0.0
        %3456 = vmatprep.subr.mxu0 0.0
        %3457 = vmatpush1.msra.mxu0 0.0
        %3458 = vmatprep.subr.mxu0 0.0
        %3459 = vmatpush1.msra.mxu0 0.0
        %3460 = vmatprep.subr.mxu0 0.0
        %3461 = vmatpush1.msra.mxu0 0.0
        %3462 = vmatprep.subr.mxu0 0.0
        %3463 = vmatpush1.msra.mxu0 0.0
        %3464 = vmatprep.subr.mxu0 0.0
        %3465 = vmatpush1.msra.mxu0 0.0
        %3466 = vmatprep.subr.mxu0 0.0
        %3467 = vmatpush1.msra.mxu0 0.0
        %3468 = vmatprep.subr.mxu0 0.0
        %3469 = vmatpush1.msra.mxu0 0.0
        %3470 = vmatprep.subr.mxu0 0.0
        %3471 = vmatpush1.msra.mxu0 0.0
        %3472 = vmatprep.subr.mxu0 0.0
        %3473 = vmatpush1.msra.mxu0 0.0
        %3474 = vmatprep.subr.mxu0 0.0
        %3475 = vmatpush1.msra.mxu0 0.0
        %3476 = vmatprep.subr.mxu0 0.0
        %3477 = vmatpush1.msra.mxu0 0.0
        %3478 = vmatprep.subr.mxu0 0.0
        %3479 = vmatpush1.msra.mxu0 0.0
        %3480 = vmatprep.subr.mxu0 0.0
        %3481 = vmatpush1.msra.mxu0 0.0
        %3482 = vmatprep.subr.mxu0 0.0
        %3483 = vmatpush1.msra.mxu0 0.0
        %3484 = vmatprep.mubr.f32.mxu0 0.0
        %v3485 = vand.u32 %v2874, 4294901760
        %3486 = vmatmul.mubr.f32.gmra.mrb[0].mxu0 %v3485
        %v3487 = vpop.f32.mrb[0].mxu0
        %v3488 = vadd.f32 %v3358, %v3487
        %v3489 = vpop.f32.mrb[0].mxu0
        %3490 = vmatprep.mubr.f32.mxu0 0.0
        %v3491 = vand.u32 %v2877, 4294901760
        %3492 = vmatmul.mubr.f32.gmra.mrb[0].mxu0 %v3491
        %v3493 = vpop.f32.mrb[0].mxu0
        %v3494 = vadd.f32 %v3366, %v3493
        %v3495 = vpop.f32.mrb[0].mxu0
        %3496 = vmatprep.mubr.f32.mxu0 0.0
        %v3497 = vand.u32 %v2880, 4294901760
        %3498 = vmatmul.mubr.f32.gmra.mrb[0].mxu0 %v3497
        %v3499 = vpop.f32.mrb[0].mxu0
        %v3500 = vadd.f32 %v3374, %v3499
        %v3501 = vpop.f32.mrb[0].mxu0
        %3502 = vmatprep.mubr.f32.mxu0 0.0
        %v3503 = vand.u32 %v2883, 4294901760
        %3504 = vmatmul.mubr.f32.gmra.mrb[0].mxu0 %v3503
        %v3505 = vpop.f32.mrb[0].mxu0
        %v3506 = vadd.f32 %v3382, %v3505
        %v3507 = vpop.f32.mrb[0].mxu0
        %3508 = vmatprep.mubr.f32.mxu0 0.0
        %v3509 = vand.u32 %v2886, 4294901760
        %3510 = vmatmul.mubr.f32.gmra.mrb[0].mxu0 %v3509
        %v3511 = vpop.f32.mrb[0].mxu0
        %v3512 = vadd.f32 %v3390, %v3511
        %v3513 = vpop.f32.mrb[0].mxu0
        %3514 = vmatprep.mubr.f32.mxu0 0.0
        %v3515 = vand.u32 %v2889, 4294901760
        %3516 = vmatmul.mubr.f32.gmra.mrb[0].mxu0 %v3515
        %v3517 = vpop.f32.mrb[0].mxu0
        %v3518 = vadd.f32 %v3398, %v3517
        %v3519 = vpop.f32.mrb[0].mxu0
        %3520 = vmatprep.mubr.f32.mxu0 0.0
        %v3521 = vand.u32 %v2892, 4294901760
        %3522 = vmatmul.mubr.f32.gmra.mrb[0].mxu0 %v3521
        %v3523 = vpop.f32.mrb[0].mxu0
        %v3524 = vadd.f32 %v3406, %v3523
        %v3525 = vpop.f32.mrb[0].mxu0
        %3526 = vmatprep.mubr.f32.mxu0 0.0
        %v3527 = vand.u32 %v2895, 4294901760
        %3528 = vmatmul.mubr.f32.gmra.mrb[0].mxu0 %v3527
        %v3529 = vpop.f32.mrb[0].mxu0
        %v3530 = vadd.f32 %v3414, %v3529
        %v3531 = vpop.f32.mrb[0].mxu0
        %3532 = vdwg.mxu0
        %3533 = vmatprep.subr.mxu0 0.0
        %v3534 = vand.u32 %v2898, 4294901760
        %3535 = vmatpush1.msra.mxu0 %v3534
        %3536 = vmatprep.subr.mxu0 0.0
        %3537 = vmatpush1.msra.mxu0 0.0
        %3538 = vmatprep.subr.mxu0 0.0
        %3539 = vmatpush1.msra.mxu0 0.0
        %3540 = vmatprep.subr.mxu0 0.0
        %3541 = vmatpush1.msra.mxu0 0.0
        %3542 = vmatprep.subr.mxu0 0.0
        %3543 = vmatpush1.msra.mxu0 0.0
        %3544 = vmatprep.subr.mxu0 0.0
        %3545 = vmatpush1.msra.mxu0 0.0
        %3546 = vmatprep.subr.mxu0 0.0
        %3547 = vmatpush1.msra.mxu0 0.0
        %3548 = vmatprep.subr.mxu0 0.0
        %3549 = vmatpush1.msra.mxu0 0.0
        %3550 = vmatprep.subr.mxu0 0.0
        %3551 = vmatpush1.msra.mxu0 0.0
        %3552 = vmatprep.subr.mxu0 0.0
        %3553 = vmatpush1.msra.mxu0 0.0
        %3554 = vmatprep.subr.mxu0 0.0
        %3555 = vmatpush1.msra.mxu0 0.0
        %3556 = vmatprep.subr.mxu0 0.0
        %3557 = vmatpush1.msra.mxu0 0.0
        %3558 = vmatprep.subr.mxu0 0.0
        %3559 = vmatpush1.msra.mxu0 0.0
        %3560 = vmatprep.subr.mxu0 0.0
        %3561 = vmatpush1.msra.mxu0 0.0
        %3562 = vmatprep.subr.mxu0 0.0
        %3563 = vmatpush1.msra.mxu0 0.0
        %3564 = vmatprep.subr.mxu0 0.0
        %3565 = vmatpush1.msra.mxu0 0.0
        %3566 = vmatprep.subr.mxu0 0.0
        %3567 = vmatpush1.msra.mxu0 0.0
        %3568 = vmatprep.subr.mxu0 0.0
        %3569 = vmatpush1.msra.mxu0 0.0
        %3570 = vmatprep.subr.mxu0 0.0
        %3571 = vmatpush1.msra.mxu0 0.0
        %3572 = vmatprep.subr.mxu0 0.0
        %3573 = vmatpush1.msra.mxu0 0.0
        %3574 = vmatprep.subr.mxu0 0.0
        %3575 = vmatpush1.msra.mxu0 0.0
        %3576 = vmatprep.subr.mxu0 0.0
        %3577 = vmatpush1.msra.mxu0 0.0
        %3578 = vmatprep.subr.mxu0 0.0
        %3579 = vmatpush1.msra.mxu0 0.0
        %3580 = vmatprep.subr.mxu0 0.0
        %3581 = vmatpush1.msra.mxu0 0.0
        %3582 = vmatprep.subr.mxu0 0.0
        %3583 = vmatpush1.msra.mxu0 0.0
        %3584 = vmatprep.subr.mxu0 0.0
        %3585 = vmatpush1.msra.mxu0 0.0
        %3586 = vmatprep.subr.mxu0 0.0
        %3587 = vmatpush1.msra.mxu0 0.0
        %3588 = vmatprep.subr.mxu0 0.0
        %3589 = vmatpush1.msra.mxu0 0.0
        %3590 = vmatprep.subr.mxu0 0.0
        %3591 = vmatpush1.msra.mxu0 0.0
        %3592 = vmatprep.subr.mxu0 0.0
        %3593 = vmatpush1.msra.mxu0 0.0
        %3594 = vmatprep.subr.mxu0 0.0
        %3595 = vmatpush1.msra.mxu0 0.0
        %3596 = vmatprep.subr.mxu0 0.0
        %3597 = vmatpush1.msra.mxu0 0.0
        %3598 = vmatprep.mubr.f32.mxu0 0.0
        %v3599 = vand.u32 %v2874, 4294901760
        %3600 = vmatmul.mubr.f32.gmra.mrb[0].mxu0 %v3599
        %v3601 = vpop.f32.mrb[0].mxu0
        %v3602 = vadd.f32 %v3488, %v3601
        %v3603 = vpop.f32.mrb[0].mxu0
        %3604 = vmatprep.mubr.f32.mxu0 0.0
        %v3605 = vand.u32 %v2877, 4294901760
        %3606 = vmatmul.mubr.f32.gmra.mrb[0].mxu0 %v3605
        %v3607 = vpop.f32.mrb[0].mxu0
        %v3608 = vadd.f32 %v3494, %v3607
        %v3609 = vpop.f32.mrb[0].mxu0
        %3610 = vmatprep.mubr.f32.mxu0 0.0
        %v3611 = vand.u32 %v2880, 4294901760
        %3612 = vmatmul.mubr.f32.gmra.mrb[0].mxu0 %v3611
        %v3613 = vpop.f32.mrb[0].mxu0
        %v3614 = vadd.f32 %v3500, %v3613
        %v3615 = vpop.f32.mrb[0].mxu0
        %3616 = vmatprep.mubr.f32.mxu0 0.0
        %v3617 = vand.u32 %v2883, 4294901760
        %3618 = vmatmul.mubr.f32.gmra.mrb[0].mxu0 %v3617
        %v3619 = vpop.f32.mrb[0].mxu0
        %v3620 = vadd.f32 %v3506, %v3619
        %v3621 = vpop.f32.mrb[0].mxu0
        %3622 = vmatprep.mubr.f32.mxu0 0.0
        %v3623 = vand.u32 %v2886, 4294901760
        %3624 = vmatmul.mubr.f32.gmra.mrb[0].mxu0 %v3623
        %v3625 = vpop.f32.mrb[0].mxu0
        %v3626 = vadd.f32 %v3512, %v3625
        %v3627 = vpop.f32.mrb[0].mxu0
        %3628 = vmatprep.mubr.f32.mxu0 0.0
        %v3629 = vand.u32 %v2889, 4294901760
        %3630 = vmatmul.mubr.f32.gmra.mrb[0].mxu0 %v3629
        %v3631 = vpop.f32.mrb[0].mxu0
        %v3632 = vadd.f32 %v3518, %v3631
        %v3633 = vpop.f32.mrb[0].mxu0
        %3634 = vmatprep.mubr.f32.mxu0 0.0
        %v3635 = vand.u32 %v2892, 4294901760
        %3636 = vmatmul.mubr.f32.gmra.mrb[0].mxu0 %v3635
        %v3637 = vpop.f32.mrb[0].mxu0
        %v3638 = vadd.f32 %v3524, %v3637
        %v3639 = vpop.f32.mrb[0].mxu0
        %3640 = vmatprep.mubr.f32.mxu0 0.0
        %v3641 = vand.u32 %v2895, 4294901760
        %3642 = vmatmul.mubr.f32.gmra.mrb[0].mxu0 %v3641
        %v3643 = vpop.f32.mrb[0].mxu0
        %v3644 = vadd.f32 %v3530, %v3643
        %v3645 = vpop.f32.mrb[0].mxu0
        %3646 = vdwg.mxu0
        %v3648 = vsel %vm345, %v2595, 0
        %v3651 = vsel %vm345, %v2596, 0
        %v3654 = vsel %vm345, %v2597, 0
        %v3657 = vsel %vm345, %v2598, 0
        %v3660 = vsel %vm345, %v2599, 0
        %v3663 = vsel %vm345, %v2600, 0
        %v3666 = vsel %vm345, %v2601, 0
        %v3669 = vsel %vm345, %v2602, 0
        %v3672 = vsel %vm442, %v2871, 0
        %3674 = vmatprep.subr.mxu0 0.0
        %v3675 = vand.u32 %v3672, 4294901760
        %3676 = vmatpush1.msra.mxu0 %v3675
        %3677 = vmatprep.subr.mxu0 0.0
        %3678 = vmatpush1.msra.mxu0 0.0
        %3679 = vmatprep.subr.mxu0 0.0
        %3680 = vmatpush1.msra.mxu0 0.0
        %3681 = vmatprep.subr.mxu0 0.0
        %3682 = vmatpush1.msra.mxu0 0.0
        %3683 = vmatprep.subr.mxu0 0.0
        %3684 = vmatpush1.msra.mxu0 0.0
        %3685 = vmatprep.subr.mxu0 0.0
        %3686 = vmatpush1.msra.mxu0 0.0
        %3687 = vmatprep.subr.mxu0 0.0
        %3688 = vmatpush1.msra.mxu0 0.0
        %3689 = vmatprep.subr.mxu0 0.0
        %3690 = vmatpush1.msra.mxu0 0.0
        %3691 = vmatprep.subr.mxu0 0.0
        %3692 = vmatpush1.msra.mxu0 0.0
        %3693 = vmatprep.subr.mxu0 0.0
        %3694 = vmatpush1.msra.mxu0 0.0
        %3695 = vmatprep.subr.mxu0 0.0
        %3696 = vmatpush1.msra.mxu0 0.0
        %3697 = vmatprep.subr.mxu0 0.0
        %3698 = vmatpush1.msra.mxu0 0.0
        %3699 = vmatprep.subr.mxu0 0.0
        %3700 = vmatpush1.msra.mxu0 0.0
        %3701 = vmatprep.subr.mxu0 0.0
        %3702 = vmatpush1.msra.mxu0 0.0
        %3703 = vmatprep.subr.mxu0 0.0
        %3704 = vmatpush1.msra.mxu0 0.0
        %3705 = vmatprep.subr.mxu0 0.0
        %3706 = vmatpush1.msra.mxu0 0.0
        %3707 = vmatprep.subr.mxu0 0.0
        %3708 = vmatpush1.msra.mxu0 0.0
        %3709 = vmatprep.subr.mxu0 0.0
        %3710 = vmatpush1.msra.mxu0 0.0
        %3711 = vmatprep.subr.mxu0 0.0
        %3712 = vmatpush1.msra.mxu0 0.0
        %3713 = vmatprep.subr.mxu0 0.0
        %3714 = vmatpush1.msra.mxu0 0.0
        %3715 = vmatprep.subr.mxu0 0.0
        %3716 = vmatpush1.msra.mxu0 0.0
        %3717 = vmatprep.subr.mxu0 0.0
        %3718 = vmatpush1.msra.mxu0 0.0
        %3719 = vmatprep.subr.mxu0 0.0
        %3720 = vmatpush1.msra.mxu0 0.0
        %3721 = vmatprep.subr.mxu0 0.0
        %3722 = vmatpush1.msra.mxu0 0.0
        %3723 = vmatprep.subr.mxu0 0.0
        %3724 = vmatpush1.msra.mxu0 0.0
        %3725 = vmatprep.subr.mxu0 0.0
        %3726 = vmatpush1.msra.mxu0 0.0
        %3727 = vmatprep.subr.mxu0 0.0
        %3728 = vmatpush1.msra.mxu0 0.0
        %3729 = vmatprep.subr.mxu0 0.0
        %3730 = vmatpush1.msra.mxu0 0.0
        %3731 = vmatprep.subr.mxu0 0.0
        %3732 = vmatpush1.msra.mxu0 0.0
        %3733 = vmatprep.subr.mxu0 0.0
        %3734 = vmatpush1.msra.mxu0 0.0
        %3735 = vmatprep.subr.mxu0 0.0
        %3736 = vmatpush1.msra.mxu0 0.0
        %3737 = vmatprep.subr.mxu0 0.0
        %3738 = vmatpush1.msra.mxu0 0.0
        %3739 = vmatprep.mubr.f32.mxu0 0.0
        %v3740 = vand.u32 %v3648, 4294901760
        %v3741 = vsub.f32 %v3648, %v3740
        %v3742 = vand.u32 %v3741, 4294901760
        %v3743 = vsub.f32 %v3741, %v3742
        %v3744 = vand.u32 %v3743, 4294901760
        %3745 = vmatmul.mubr.f32.gmra.mrb[0].mxu0 %v3744
        %v3746 = vpop.f32.mrb[0].mxu0
        %v3747 = vadd.f32 %v3602, %v3746
        %v3748 = vpop.f32.mrb[0].mxu0
        %3749 = vmatprep.mubr.f32.mxu0 0.0
        %v3750 = vand.u32 %v3651, 4294901760
        %v3751 = vsub.f32 %v3651, %v3750
        %v3752 = vand.u32 %v3751, 4294901760
        %v3753 = vsub.f32 %v3751, %v3752
        %v3754 = vand.u32 %v3753, 4294901760
        %3755 = vmatmul.mubr.f32.gmra.mrb[0].mxu0 %v3754
        %v3756 = vpop.f32.mrb[0].mxu0
        %v3757 = vadd.f32 %v3608, %v3756
        %v3758 = vpop.f32.mrb[0].mxu0
        %3759 = vmatprep.mubr.f32.mxu0 0.0
        %v3760 = vand.u32 %v3654, 4294901760
        %v3761 = vsub.f32 %v3654, %v3760
        %v3762 = vand.u32 %v3761, 4294901760
        %v3763 = vsub.f32 %v3761, %v3762
        %v3764 = vand.u32 %v3763, 4294901760
        %3765 = vmatmul.mubr.f32.gmra.mrb[0].mxu0 %v3764
        %v3766 = vpop.f32.mrb[0].mxu0
        %v3767 = vadd.f32 %v3614, %v3766
        %v3768 = vpop.f32.mrb[0].mxu0
        %3769 = vmatprep.mubr.f32.mxu0 0.0
        %v3770 = vand.u32 %v3657, 4294901760
        %v3771 = vsub.f32 %v3657, %v3770
        %v3772 = vand.u32 %v3771, 4294901760
        %v3773 = vsub.f32 %v3771, %v3772
        %v3774 = vand.u32 %v3773, 4294901760
        %3775 = vmatmul.mubr.f32.gmra.mrb[0].mxu0 %v3774
        %v3776 = vpop.f32.mrb[0].mxu0
        %v3777 = vadd.f32 %v3620, %v3776
        %v3778 = vpop.f32.mrb[0].mxu0
        %3779 = vmatprep.mubr.f32.mxu0 0.0
        %v3780 = vand.u32 %v3660, 4294901760
        %v3781 = vsub.f32 %v3660, %v3780
        %v3782 = vand.u32 %v3781, 4294901760
        %v3783 = vsub.f32 %v3781, %v3782
        %v3784 = vand.u32 %v3783, 4294901760
        %3785 = vmatmul.mubr.f32.gmra.mrb[0].mxu0 %v3784
        %v3786 = vpop.f32.mrb[0].mxu0
        %v3787 = vadd.f32 %v3626, %v3786
        %v3788 = vpop.f32.mrb[0].mxu0
        %3789 = vmatprep.mubr.f32.mxu0 0.0
        %v3790 = vand.u32 %v3663, 4294901760
        %v3791 = vsub.f32 %v3663, %v3790
        %v3792 = vand.u32 %v3791, 4294901760
        %v3793 = vsub.f32 %v3791, %v3792
        %v3794 = vand.u32 %v3793, 4294901760
        %3795 = vmatmul.mubr.f32.gmra.mrb[0].mxu0 %v3794
        %v3796 = vpop.f32.mrb[0].mxu0
        %v3797 = vadd.f32 %v3632, %v3796
        %v3798 = vpop.f32.mrb[0].mxu0
        %3799 = vmatprep.mubr.f32.mxu0 0.0
        %v3800 = vand.u32 %v3666, 4294901760
        %v3801 = vsub.f32 %v3666, %v3800
        %v3802 = vand.u32 %v3801, 4294901760
        %v3803 = vsub.f32 %v3801, %v3802
        %v3804 = vand.u32 %v3803, 4294901760
        %3805 = vmatmul.mubr.f32.gmra.mrb[0].mxu0 %v3804
        %v3806 = vpop.f32.mrb[0].mxu0
        %v3807 = vadd.f32 %v3638, %v3806
        %v3808 = vpop.f32.mrb[0].mxu0
        %3809 = vmatprep.mubr.f32.mxu0 0.0
        %v3810 = vand.u32 %v3669, 4294901760
        %v3811 = vsub.f32 %v3669, %v3810
        %v3812 = vand.u32 %v3811, 4294901760
        %v3813 = vsub.f32 %v3811, %v3812
        %v3814 = vand.u32 %v3813, 4294901760
        %3815 = vmatmul.mubr.f32.gmra.mrb[0].mxu0 %v3814
        %v3816 = vpop.f32.mrb[0].mxu0
        %v3817 = vadd.f32 %v3644, %v3816
        %v3818 = vpop.f32.mrb[0].mxu0
        %3819 = vdwg.mxu0
        %3820 = vmatprep.subr.mxu0 0.0
        %v3821 = vand.u32 %v3672, 4294901760
        %v3822 = vsub.f32 %v3672, %v3821
        %v3823 = vand.u32 %v3822, 4294901760
        %v3824 = vsub.f32 %v3822, %v3823
        %v3825 = vand.u32 %v3824, 4294901760
        %3826 = vmatpush1.msra.mxu0 %v3825
        %3827 = vmatprep.subr.mxu0 0.0
        %3828 = vmatpush1.msra.mxu0 0.0
        %3829 = vmatprep.subr.mxu0 0.0
        %3830 = vmatpush1.msra.mxu0 0.0
        %3831 = vmatprep.subr.mxu0 0.0
        %3832 = vmatpush1.msra.mxu0 0.0
        %3833 = vmatprep.subr.mxu0 0.0
        %3834 = vmatpush1.msra.mxu0 0.0
        %3835 = vmatprep.subr.mxu0 0.0
        %3836 = vmatpush1.msra.mxu0 0.0
        %3837 = vmatprep.subr.mxu0 0.0
        %3838 = vmatpush1.msra.mxu0 0.0
        %3839 = vmatprep.subr.mxu0 0.0
        %3840 = vmatpush1.msra.mxu0 0.0
        %3841 = vmatprep.subr.mxu0 0.0
        %3842 = vmatpush1.msra.mxu0 0.0
        %3843 = vmatprep.subr.mxu0 0.0
        %3844 = vmatpush1.msra.mxu0 0.0
        %3845 = vmatprep.subr.mxu0 0.0
        %3846 = vmatpush1.msra.mxu0 0.0
        %3847 = vmatprep.subr.mxu0 0.0
        %3848 = vmatpush1.msra.mxu0 0.0
        %3849 = vmatprep.subr.mxu0 0.0
        %3850 = vmatpush1.msra.mxu0 0.0
        %3851 = vmatprep.subr.mxu0 0.0
        %3852 = vmatpush1.msra.mxu0 0.0
        %3853 = vmatprep.subr.mxu0 0.0
        %3854 = vmatpush1.msra.mxu0 0.0
        %3855 = vmatprep.subr.mxu0 0.0
        %3856 = vmatpush1.msra.mxu0 0.0
        %3857 = vmatprep.subr.mxu0 0.0
        %3858 = vmatpush1.msra.mxu0 0.0
        %3859 = vmatprep.subr.mxu0 0.0
        %3860 = vmatpush1.msra.mxu0 0.0
        %3861 = vmatprep.subr.mxu0 0.0
        %3862 = vmatpush1.msra.mxu0 0.0
        %3863 = vmatprep.subr.mxu0 0.0
        %3864 = vmatpush1.msra.mxu0 0.0
        %3865 = vmatprep.subr.mxu0 0.0
        %3866 = vmatpush1.msra.mxu0 0.0
        %3867 = vmatprep.subr.mxu0 0.0
        %3868 = vmatpush1.msra.mxu0 0.0
        %3869 = vmatprep.subr.mxu0 0.0
        %3870 = vmatpush1.msra.mxu0 0.0
        %3871 = vmatprep.subr.mxu0 0.0
        %3872 = vmatpush1.msra.mxu0 0.0
        %3873 = vmatprep.subr.mxu0 0.0
        %3874 = vmatpush1.msra.mxu0 0.0
        %3875 = vmatprep.subr.mxu0 0.0
        %3876 = vmatpush1.msra.mxu0 0.0
        %3877 = vmatprep.subr.mxu0 0.0
        %3878 = vmatpush1.msra.mxu0 0.0
        %3879 = vmatprep.subr.mxu0 0.0
        %3880 = vmatpush1.msra.mxu0 0.0
        %3881 = vmatprep.subr.mxu0 0.0
        %3882 = vmatpush1.msra.mxu0 0.0
        %3883 = vmatprep.subr.mxu0 0.0
        %3884 = vmatpush1.msra.mxu0 0.0
        %3885 = vmatprep.subr.mxu0 0.0
        %3886 = vmatpush1.msra.mxu0 0.0
        %3887 = vmatprep.subr.mxu0 0.0
        %3888 = vmatpush1.msra.mxu0 0.0
        %3889 = vmatprep.mubr.f32.mxu0 0.0
        %v3890 = vand.u32 %v3648, 4294901760
        %3891 = vmatmul.mubr.f32.gmra.mrb[0].mxu0 %v3890
        %v3892 = vpop.f32.mrb[0].mxu0
        %v3893 = vadd.f32 %v3747, %v3892
        %v3894 = vpop.f32.mrb[0].mxu0
        %3895 = vmatprep.mubr.f32.mxu0 0.0
        %v3896 = vand.u32 %v3651, 4294901760
        %3897 = vmatmul.mubr.f32.gmra.mrb[0].mxu0 %v3896
        %v3898 = vpop.f32.mrb[0].mxu0
        %v3899 = vadd.f32 %v3757, %v3898
        %v3900 = vpop.f32.mrb[0].mxu0
        %3901 = vmatprep.mubr.f32.mxu0 0.0
        %v3902 = vand.u32 %v3654, 4294901760
        %3903 = vmatmul.mubr.f32.gmra.mrb[0].mxu0 %v3902
        %v3904 = vpop.f32.mrb[0].mxu0
        %v3905 = vadd.f32 %v3767, %v3904
        %v3906 = vpop.f32.mrb[0].mxu0
        %3907 = vmatprep.mubr.f32.mxu0 0.0
        %v3908 = vand.u32 %v3657, 4294901760
        %3909 = vmatmul.mubr.f32.gmra.mrb[0].mxu0 %v3908
        %v3910 = vpop.f32.mrb[0].mxu0
        %v3911 = vadd.f32 %v3777, %v3910
        %v3912 = vpop.f32.mrb[0].mxu0
        %3913 = vmatprep.mubr.f32.mxu0 0.0
        %v3914 = vand.u32 %v3660, 4294901760
        %3915 = vmatmul.mubr.f32.gmra.mrb[0].mxu0 %v3914
        %v3916 = vpop.f32.mrb[0].mxu0
        %v3917 = vadd.f32 %v3787, %v3916
        %v3918 = vpop.f32.mrb[0].mxu0
        %3919 = vmatprep.mubr.f32.mxu0 0.0
        %v3920 = vand.u32 %v3663, 4294901760
        %3921 = vmatmul.mubr.f32.gmra.mrb[0].mxu0 %v3920
        %v3922 = vpop.f32.mrb[0].mxu0
        %v3923 = vadd.f32 %v3797, %v3922
        %v3924 = vpop.f32.mrb[0].mxu0
        %3925 = vmatprep.mubr.f32.mxu0 0.0
        %v3926 = vand.u32 %v3666, 4294901760
        %3927 = vmatmul.mubr.f32.gmra.mrb[0].mxu0 %v3926
        %v3928 = vpop.f32.mrb[0].mxu0
        %v3929 = vadd.f32 %v3807, %v3928
        %v3930 = vpop.f32.mrb[0].mxu0
        %3931 = vmatprep.mubr.f32.mxu0 0.0
        %v3932 = vand.u32 %v3669, 4294901760
        %3933 = vmatmul.mubr.f32.gmra.mrb[0].mxu0 %v3932
        %v3934 = vpop.f32.mrb[0].mxu0
        %v3935 = vadd.f32 %v3817, %v3934
        %v3936 = vpop.f32.mrb[0].mxu0
        %3937 = vdwg.mxu0
        %3938 = vmatprep.subr.mxu0 0.0
        %v3939 = vand.u32 %v3672, 4294901760
        %v3940 = vsub.f32 %v3672, %v3939
        %3941 = vmatpush1.msra.mxu0 %v3940
        %3942 = vmatprep.subr.mxu0 0.0
        %3943 = vmatpush1.msra.mxu0 0.0
        %3944 = vmatprep.subr.mxu0 0.0
        %3945 = vmatpush1.msra.mxu0 0.0
        %3946 = vmatprep.subr.mxu0 0.0
        %3947 = vmatpush1.msra.mxu0 0.0
        %3948 = vmatprep.subr.mxu0 0.0
        %3949 = vmatpush1.msra.mxu0 0.0
        %3950 = vmatprep.subr.mxu0 0.0
        %3951 = vmatpush1.msra.mxu0 0.0
        %3952 = vmatprep.subr.mxu0 0.0
        %3953 = vmatpush1.msra.mxu0 0.0
        %3954 = vmatprep.subr.mxu0 0.0
        %3955 = vmatpush1.msra.mxu0 0.0
        %3956 = vmatprep.subr.mxu0 0.0
        %3957 = vmatpush1.msra.mxu0 0.0
        %3958 = vmatprep.subr.mxu0 0.0
        %3959 = vmatpush1.msra.mxu0 0.0
        %3960 = vmatprep.subr.mxu0 0.0
        %3961 = vmatpush1.msra.mxu0 0.0
        %3962 = vmatprep.subr.mxu0 0.0
        %3963 = vmatpush1.msra.mxu0 0.0
        %3964 = vmatprep.subr.mxu0 0.0
        %3965 = vmatpush1.msra.mxu0 0.0
        %3966 = vmatprep.subr.mxu0 0.0
        %3967 = vmatpush1.msra.mxu0 0.0
        %3968 = vmatprep.subr.mxu0 0.0
        %3969 = vmatpush1.msra.mxu0 0.0
        %3970 = vmatprep.subr.mxu0 0.0
        %3971 = vmatpush1.msra.mxu0 0.0
        %3972 = vmatprep.subr.mxu0 0.0
        %3973 = vmatpush1.msra.mxu0 0.0
        %3974 = vmatprep.subr.mxu0 0.0
        %3975 = vmatpush1.msra.mxu0 0.0
        %3976 = vmatprep.subr.mxu0 0.0
        %3977 = vmatpush1.msra.mxu0 0.0
        %3978 = vmatprep.subr.mxu0 0.0
        %3979 = vmatpush1.msra.mxu0 0.0
        %3980 = vmatprep.subr.mxu0 0.0
        %3981 = vmatpush1.msra.mxu0 0.0
        %3982 = vmatprep.subr.mxu0 0.0
        %3983 = vmatpush1.msra.mxu0 0.0
        %3984 = vmatprep.subr.mxu0 0.0
        %3985 = vmatpush1.msra.mxu0 0.0
        %3986 = vmatprep.subr.mxu0 0.0
        %3987 = vmatpush1.msra.mxu0 0.0
        %3988 = vmatprep.subr.mxu0 0.0
        %3989 = vmatpush1.msra.mxu0 0.0
        %3990 = vmatprep.subr.mxu0 0.0
        %3991 = vmatpush1.msra.mxu0 0.0
        %3992 = vmatprep.subr.mxu0 0.0
        %3993 = vmatpush1.msra.mxu0 0.0
        %3994 = vmatprep.subr.mxu0 0.0
        %3995 = vmatpush1.msra.mxu0 0.0
        %3996 = vmatprep.subr.mxu0 0.0
        %3997 = vmatpush1.msra.mxu0 0.0
        %3998 = vmatprep.subr.mxu0 0.0
        %3999 = vmatpush1.msra.mxu0 0.0
        %4000 = vmatprep.subr.mxu0 0.0
        %4001 = vmatpush1.msra.mxu0 0.0
        %4002 = vmatprep.subr.mxu0 0.0
        %4003 = vmatpush1.msra.mxu0 0.0
        %4004 = vmatprep.mubr.f32.mxu0 0.0
        %v4005 = vand.u32 %v3648, 4294901760
        %v4006 = vsub.f32 %v3648, %v4005
        %4007 = vmatmul.mubr.f32.gmra.mrb[0].mxu0 %v4006
        %v4008 = vpop.f32.mrb[0].mxu0
        %v4009 = vadd.f32 %v3893, %v4008
        %v4010 = vpop.f32.mrb[0].mxu0
        %4011 = vmatprep.mubr.f32.mxu0 0.0
        %v4012 = vand.u32 %v3651, 4294901760
        %v4013 = vsub.f32 %v3651, %v4012
        %4014 = vmatmul.mubr.f32.gmra.mrb[0].mxu0 %v4013
        %v4015 = vpop.f32.mrb[0].mxu0
        %v4016 = vadd.f32 %v3899, %v4015
        %v4017 = vpop.f32.mrb[0].mxu0
        %4018 = vmatprep.mubr.f32.mxu0 0.0
        %v4019 = vand.u32 %v3654, 4294901760
        %v4020 = vsub.f32 %v3654, %v4019
        %4021 = vmatmul.mubr.f32.gmra.mrb[0].mxu0 %v4020
        %v4022 = vpop.f32.mrb[0].mxu0
        %v4023 = vadd.f32 %v3905, %v4022
        %v4024 = vpop.f32.mrb[0].mxu0
        %4025 = vmatprep.mubr.f32.mxu0 0.0
        %v4026 = vand.u32 %v3657, 4294901760
        %v4027 = vsub.f32 %v3657, %v4026
        %4028 = vmatmul.mubr.f32.gmra.mrb[0].mxu0 %v4027
        %v4029 = vpop.f32.mrb[0].mxu0
        %v4030 = vadd.f32 %v3911, %v4029
        %v4031 = vpop.f32.mrb[0].mxu0
        %4032 = vmatprep.mubr.f32.mxu0 0.0
        %v4033 = vand.u32 %v3660, 4294901760
        %v4034 = vsub.f32 %v3660, %v4033
        %4035 = vmatmul.mubr.f32.gmra.mrb[0].mxu0 %v4034
        %v4036 = vpop.f32.mrb[0].mxu0
        %v4037 = vadd.f32 %v3917, %v4036
        %v4038 = vpop.f32.mrb[0].mxu0
        %4039 = vmatprep.mubr.f32.mxu0 0.0
        %v4040 = vand.u32 %v3663, 4294901760
        %v4041 = vsub.f32 %v3663, %v4040
        %4042 = vmatmul.mubr.f32.gmra.mrb[0].mxu0 %v4041
        %v4043 = vpop.f32.mrb[0].mxu0
        %v4044 = vadd.f32 %v3923, %v4043
        %v4045 = vpop.f32.mrb[0].mxu0
        %4046 = vmatprep.mubr.f32.mxu0 0.0
        %v4047 = vand.u32 %v3666, 4294901760
        %v4048 = vsub.f32 %v3666, %v4047
        %4049 = vmatmul.mubr.f32.gmra.mrb[0].mxu0 %v4048
        %v4050 = vpop.f32.mrb[0].mxu0
        %v4051 = vadd.f32 %v3929, %v4050
        %v4052 = vpop.f32.mrb[0].mxu0
        %4053 = vmatprep.mubr.f32.mxu0 0.0
        %v4054 = vand.u32 %v3669, 4294901760
        %v4055 = vsub.f32 %v3669, %v4054
        %4056 = vmatmul.mubr.f32.gmra.mrb[0].mxu0 %v4055
        %v4057 = vpop.f32.mrb[0].mxu0
        %v4058 = vadd.f32 %v3935, %v4057
        %v4059 = vpop.f32.mrb[0].mxu0
        %4060 = vdwg.mxu0
        %4061 = vmatprep.subr.mxu0 0.0
        %v4062 = vand.u32 %v3672, 4294901760
        %4063 = vmatpush1.msra.mxu0 %v4062
        %4064 = vmatprep.subr.mxu0 0.0
        %4065 = vmatpush1.msra.mxu0 0.0
        %4066 = vmatprep.subr.mxu0 0.0
        %4067 = vmatpush1.msra.mxu0 0.0
        %4068 = vmatprep.subr.mxu0 0.0
        %4069 = vmatpush1.msra.mxu0 0.0
        %4070 = vmatprep.subr.mxu0 0.0
        %4071 = vmatpush1.msra.mxu0 0.0
        %4072 = vmatprep.subr.mxu0 0.0
        %4073 = vmatpush1.msra.mxu0 0.0
        %4074 = vmatprep.subr.mxu0 0.0
        %4075 = vmatpush1.msra.mxu0 0.0
        %4076 = vmatprep.subr.mxu0 0.0
        %4077 = vmatpush1.msra.mxu0 0.0
        %4078 = vmatprep.subr.mxu0 0.0
        %4079 = vmatpush1.msra.mxu0 0.0
        %4080 = vmatprep.subr.mxu0 0.0
        %4081 = vmatpush1.msra.mxu0 0.0
        %4082 = vmatprep.subr.mxu0 0.0
        %4083 = vmatpush1.msra.mxu0 0.0
        %4084 = vmatprep.subr.mxu0 0.0
        %4085 = vmatpush1.msra.mxu0 0.0
        %4086 = vmatprep.subr.mxu0 0.0
        %4087 = vmatpush1.msra.mxu0 0.0
        %4088 = vmatprep.subr.mxu0 0.0
        %4089 = vmatpush1.msra.mxu0 0.0
        %4090 = vmatprep.subr.mxu0 0.0
        %4091 = vmatpush1.msra.mxu0 0.0
        %4092 = vmatprep.subr.mxu0 0.0
        %4093 = vmatpush1.msra.mxu0 0.0
        %4094 = vmatprep.subr.mxu0 0.0
        %4095 = vmatpush1.msra.mxu0 0.0
        %4096 = vmatprep.subr.mxu0 0.0
        %4097 = vmatpush1.msra.mxu0 0.0
        %4098 = vmatprep.subr.mxu0 0.0
        %4099 = vmatpush1.msra.mxu0 0.0
        %4100 = vmatprep.subr.mxu0 0.0
        %4101 = vmatpush1.msra.mxu0 0.0
        %4102 = vmatprep.subr.mxu0 0.0
        %4103 = vmatpush1.msra.mxu0 0.0
        %4104 = vmatprep.subr.mxu0 0.0
        %4105 = vmatpush1.msra.mxu0 0.0
        %4106 = vmatprep.subr.mxu0 0.0
        %4107 = vmatpush1.msra.mxu0 0.0
        %4108 = vmatprep.subr.mxu0 0.0
        %4109 = vmatpush1.msra.mxu0 0.0
        %4110 = vmatprep.subr.mxu0 0.0
        %4111 = vmatpush1.msra.mxu0 0.0
        %4112 = vmatprep.subr.mxu0 0.0
        %4113 = vmatpush1.msra.mxu0 0.0
        %4114 = vmatprep.subr.mxu0 0.0
        %4115 = vmatpush1.msra.mxu0 0.0
        %4116 = vmatprep.subr.mxu0 0.0
        %4117 = vmatpush1.msra.mxu0 0.0
        %4118 = vmatprep.subr.mxu0 0.0
        %4119 = vmatpush1.msra.mxu0 0.0
        %4120 = vmatprep.subr.mxu0 0.0
        %4121 = vmatpush1.msra.mxu0 0.0
        %4122 = vmatprep.subr.mxu0 0.0
        %4123 = vmatpush1.msra.mxu0 0.0
        %4124 = vmatprep.subr.mxu0 0.0
        %4125 = vmatpush1.msra.mxu0 0.0
        %4126 = vmatprep.mubr.f32.mxu0 0.0
        %v4127 = vand.u32 %v3648, 4294901760
        %v4128 = vsub.f32 %v3648, %v4127
        %v4129 = vand.u32 %v4128, 4294901760
        %4130 = vmatmul.mubr.f32.gmra.mrb[0].mxu0 %v4129
        %v4131 = vpop.f32.mrb[0].mxu0
        %v4132 = vadd.f32 %v4009, %v4131
        %v4133 = vpop.f32.mrb[0].mxu0
        %4134 = vmatprep.mubr.f32.mxu0 0.0
        %v4135 = vand.u32 %v3651, 4294901760
        %v4136 = vsub.f32 %v3651, %v4135
        %v4137 = vand.u32 %v4136, 4294901760
        %4138 = vmatmul.mubr.f32.gmra.mrb[0].mxu0 %v4137
        %v4139 = vpop.f32.mrb[0].mxu0
        %v4140 = vadd.f32 %v4016, %v4139
        %v4141 = vpop.f32.mrb[0].mxu0
        %4142 = vmatprep.mubr.f32.mxu0 0.0
        %v4143 = vand.u32 %v3654, 4294901760
        %v4144 = vsub.f32 %v3654, %v4143
        %v4145 = vand.u32 %v4144, 4294901760
        %4146 = vmatmul.mubr.f32.gmra.mrb[0].mxu0 %v4145
        %v4147 = vpop.f32.mrb[0].mxu0
        %v4148 = vadd.f32 %v4023, %v4147
        %v4149 = vpop.f32.mrb[0].mxu0
        %4150 = vmatprep.mubr.f32.mxu0 0.0
        %v4151 = vand.u32 %v3657, 4294901760
        %v4152 = vsub.f32 %v3657, %v4151
        %v4153 = vand.u32 %v4152, 4294901760
        %4154 = vmatmul.mubr.f32.gmra.mrb[0].mxu0 %v4153
        %v4155 = vpop.f32.mrb[0].mxu0
        %v4156 = vadd.f32 %v4030, %v4155
        %v4157 = vpop.f32.mrb[0].mxu0
        %4158 = vmatprep.mubr.f32.mxu0 0.0
        %v4159 = vand.u32 %v3660, 4294901760
        %v4160 = vsub.f32 %v3660, %v4159
        %v4161 = vand.u32 %v4160, 4294901760
        %4162 = vmatmul.mubr.f32.gmra.mrb[0].mxu0 %v4161
        %v4163 = vpop.f32.mrb[0].mxu0
        %v4164 = vadd.f32 %v4037, %v4163
        %v4165 = vpop.f32.mrb[0].mxu0
        %4166 = vmatprep.mubr.f32.mxu0 0.0
        %v4167 = vand.u32 %v3663, 4294901760
        %v4168 = vsub.f32 %v3663, %v4167
        %v4169 = vand.u32 %v4168, 4294901760
        %4170 = vmatmul.mubr.f32.gmra.mrb[0].mxu0 %v4169
        %v4171 = vpop.f32.mrb[0].mxu0
        %v4172 = vadd.f32 %v4044, %v4171
        %v4173 = vpop.f32.mrb[0].mxu0
        %4174 = vmatprep.mubr.f32.mxu0 0.0
        %v4175 = vand.u32 %v3666, 4294901760
        %v4176 = vsub.f32 %v3666, %v4175
        %v4177 = vand.u32 %v4176, 4294901760
        %4178 = vmatmul.mubr.f32.gmra.mrb[0].mxu0 %v4177
        %v4179 = vpop.f32.mrb[0].mxu0
        %v4180 = vadd.f32 %v4051, %v4179
        %v4181 = vpop.f32.mrb[0].mxu0
        %4182 = vmatprep.mubr.f32.mxu0 0.0
        %v4183 = vand.u32 %v3669, 4294901760
        %v4184 = vsub.f32 %v3669, %v4183
        %v4185 = vand.u32 %v4184, 4294901760
        %4186 = vmatmul.mubr.f32.gmra.mrb[0].mxu0 %v4185
        %v4187 = vpop.f32.mrb[0].mxu0
        %v4188 = vadd.f32 %v4058, %v4187
        %v4189 = vpop.f32.mrb[0].mxu0
        %4190 = vdwg.mxu0
        %4191 = vmatprep.subr.mxu0 0.0
        %v4192 = vand.u32 %v3672, 4294901760
        %v4193 = vsub.f32 %v3672, %v4192
        %v4194 = vand.u32 %v4193, 4294901760
        %4195 = vmatpush1.msra.mxu0 %v4194
        %4196 = vmatprep.subr.mxu0 0.0
        %4197 = vmatpush1.msra.mxu0 0.0
        %4198 = vmatprep.subr.mxu0 0.0
        %4199 = vmatpush1.msra.mxu0 0.0
        %4200 = vmatprep.subr.mxu0 0.0
        %4201 = vmatpush1.msra.mxu0 0.0
        %4202 = vmatprep.subr.mxu0 0.0
        %4203 = vmatpush1.msra.mxu0 0.0
        %4204 = vmatprep.subr.mxu0 0.0
        %4205 = vmatpush1.msra.mxu0 0.0
        %4206 = vmatprep.subr.mxu0 0.0
        %4207 = vmatpush1.msra.mxu0 0.0
        %4208 = vmatprep.subr.mxu0 0.0
        %4209 = vmatpush1.msra.mxu0 0.0
        %4210 = vmatprep.subr.mxu0 0.0
        %4211 = vmatpush1.msra.mxu0 0.0
        %4212 = vmatprep.subr.mxu0 0.0
        %4213 = vmatpush1.msra.mxu0 0.0
        %4214 = vmatprep.subr.mxu0 0.0
        %4215 = vmatpush1.msra.mxu0 0.0
        %4216 = vmatprep.subr.mxu0 0.0
        %4217 = vmatpush1.msra.mxu0 0.0
        %4218 = vmatprep.subr.mxu0 0.0
        %4219 = vmatpush1.msra.mxu0 0.0
        %4220 = vmatprep.subr.mxu0 0.0
        %4221 = vmatpush1.msra.mxu0 0.0
        %4222 = vmatprep.subr.mxu0 0.0
        %4223 = vmatpush1.msra.mxu0 0.0
        %4224 = vmatprep.subr.mxu0 0.0
        %4225 = vmatpush1.msra.mxu0 0.0
        %4226 = vmatprep.subr.mxu0 0.0
        %4227 = vmatpush1.msra.mxu0 0.0
        %4228 = vmatprep.subr.mxu0 0.0
        %4229 = vmatpush1.msra.mxu0 0.0
        %4230 = vmatprep.subr.mxu0 0.0
        %4231 = vmatpush1.msra.mxu0 0.0
        %4232 = vmatprep.subr.mxu0 0.0
        %4233 = vmatpush1.msra.mxu0 0.0
        %4234 = vmatprep.subr.mxu0 0.0
        %4235 = vmatpush1.msra.mxu0 0.0
        %4236 = vmatprep.subr.mxu0 0.0
        %4237 = vmatpush1.msra.mxu0 0.0
        %4238 = vmatprep.subr.mxu0 0.0
        %4239 = vmatpush1.msra.mxu0 0.0
        %4240 = vmatprep.subr.mxu0 0.0
        %4241 = vmatpush1.msra.mxu0 0.0
        %4242 = vmatprep.subr.mxu0 0.0
        %4243 = vmatpush1.msra.mxu0 0.0
        %4244 = vmatprep.subr.mxu0 0.0
        %4245 = vmatpush1.msra.mxu0 0.0
        %4246 = vmatprep.subr.mxu0 0.0
        %4247 = vmatpush1.msra.mxu0 0.0
        %4248 = vmatprep.subr.mxu0 0.0
        %4249 = vmatpush1.msra.mxu0 0.0
        %4250 = vmatprep.subr.mxu0 0.0
        %4251 = vmatpush1.msra.mxu0 0.0
        %4252 = vmatprep.subr.mxu0 0.0
        %4253 = vmatpush1.msra.mxu0 0.0
        %4254 = vmatprep.subr.mxu0 0.0
        %4255 = vmatpush1.msra.mxu0 0.0
        %4256 = vmatprep.subr.mxu0 0.0
        %4257 = vmatpush1.msra.mxu0 0.0
        %4258 = vmatprep.mubr.f32.mxu0 0.0
        %v4259 = vand.u32 %v3648, 4294901760
        %4260 = vmatmul.mubr.f32.gmra.mrb[0].mxu0 %v4259
        %v4261 = vpop.f32.mrb[0].mxu0
        %v4262 = vadd.f32 %v4132, %v4261
        %v4263 = vpop.f32.mrb[0].mxu0
        %4264 = vmatprep.mubr.f32.mxu0 0.0
        %v4265 = vand.u32 %v3651, 4294901760
        %4266 = vmatmul.mubr.f32.gmra.mrb[0].mxu0 %v4265
        %v4267 = vpop.f32.mrb[0].mxu0
        %v4268 = vadd.f32 %v4140, %v4267
        %v4269 = vpop.f32.mrb[0].mxu0
        %4270 = vmatprep.mubr.f32.mxu0 0.0
        %v4271 = vand.u32 %v3654, 4294901760
        %4272 = vmatmul.mubr.f32.gmra.mrb[0].mxu0 %v4271
        %v4273 = vpop.f32.mrb[0].mxu0
        %v4274 = vadd.f32 %v4148, %v4273
        %v4275 = vpop.f32.mrb[0].mxu0
        %4276 = vmatprep.mubr.f32.mxu0 0.0
        %v4277 = vand.u32 %v3657, 4294901760
        %4278 = vmatmul.mubr.f32.gmra.mrb[0].mxu0 %v4277
        %v4279 = vpop.f32.mrb[0].mxu0
        %v4280 = vadd.f32 %v4156, %v4279
        %v4281 = vpop.f32.mrb[0].mxu0
        %4282 = vmatprep.mubr.f32.mxu0 0.0
        %v4283 = vand.u32 %v3660, 4294901760
        %4284 = vmatmul.mubr.f32.gmra.mrb[0].mxu0 %v4283
        %v4285 = vpop.f32.mrb[0].mxu0
        %v4286 = vadd.f32 %v4164, %v4285
        %v4287 = vpop.f32.mrb[0].mxu0
        %4288 = vmatprep.mubr.f32.mxu0 0.0
        %v4289 = vand.u32 %v3663, 4294901760
        %4290 = vmatmul.mubr.f32.gmra.mrb[0].mxu0 %v4289
        %v4291 = vpop.f32.mrb[0].mxu0
        %v4292 = vadd.f32 %v4172, %v4291
        %v4293 = vpop.f32.mrb[0].mxu0
        %4294 = vmatprep.mubr.f32.mxu0 0.0
        %v4295 = vand.u32 %v3666, 4294901760
        %4296 = vmatmul.mubr.f32.gmra.mrb[0].mxu0 %v4295
        %v4297 = vpop.f32.mrb[0].mxu0
        %v4298 = vadd.f32 %v4180, %v4297
        %v4299 = vpop.f32.mrb[0].mxu0
        %4300 = vmatprep.mubr.f32.mxu0 0.0
        %v4301 = vand.u32 %v3669, 4294901760
        %4302 = vmatmul.mubr.f32.gmra.mrb[0].mxu0 %v4301
        %v4303 = vpop.f32.mrb[0].mxu0
        %v4304 = vadd.f32 %v4188, %v4303
        %v4305 = vpop.f32.mrb[0].mxu0
        %4306 = vdwg.mxu0
        %4307 = vmatprep.subr.mxu0 0.0
        %v4308 = vand.u32 %v3672, 4294901760
        %4309 = vmatpush1.msra.mxu0 %v4308
        %4310 = vmatprep.subr.mxu0 0.0
        %4311 = vmatpush1.msra.mxu0 0.0
        %4312 = vmatprep.subr.mxu0 0.0
        %4313 = vmatpush1.msra.mxu0 0.0
        %4314 = vmatprep.subr.mxu0 0.0
        %4315 = vmatpush1.msra.mxu0 0.0
        %4316 = vmatprep.subr.mxu0 0.0
        %4317 = vmatpush1.msra.mxu0 0.0
        %4318 = vmatprep.subr.mxu0 0.0
        %4319 = vmatpush1.msra.mxu0 0.0
        %4320 = vmatprep.subr.mxu0 0.0
        %4321 = vmatpush1.msra.mxu0 0.0
        %4322 = vmatprep.subr.mxu0 0.0
        %4323 = vmatpush1.msra.mxu0 0.0
        %4324 = vmatprep.subr.mxu0 0.0
        %4325 = vmatpush1.msra.mxu0 0.0
        %4326 = vmatprep.subr.mxu0 0.0
        %4327 = vmatpush1.msra.mxu0 0.0
        %4328 = vmatprep.subr.mxu0 0.0
        %4329 = vmatpush1.msra.mxu0 0.0
        %4330 = vmatprep.subr.mxu0 0.0
        %4331 = vmatpush1.msra.mxu0 0.0
        %4332 = vmatprep.subr.mxu0 0.0
        %4333 = vmatpush1.msra.mxu0 0.0
        %4334 = vmatprep.subr.mxu0 0.0
        %4335 = vmatpush1.msra.mxu0 0.0
        %4336 = vmatprep.subr.mxu0 0.0
        %4337 = vmatpush1.msra.mxu0 0.0
        %4338 = vmatprep.subr.mxu0 0.0
        %4339 = vmatpush1.msra.mxu0 0.0
        %4340 = vmatprep.subr.mxu0 0.0
        %4341 = vmatpush1.msra.mxu0 0.0
        %4342 = vmatprep.subr.mxu0 0.0
        %4343 = vmatpush1.msra.mxu0 0.0
        %4344 = vmatprep.subr.mxu0 0.0
        %4345 = vmatpush1.msra.mxu0 0.0
        %4346 = vmatprep.subr.mxu0 0.0
        %4347 = vmatpush1.msra.mxu0 0.0
        %4348 = vmatprep.subr.mxu0 0.0
        %4349 = vmatpush1.msra.mxu0 0.0
        %4350 = vmatprep.subr.mxu0 0.0
        %4351 = vmatpush1.msra.mxu0 0.0
        %4352 = vmatprep.subr.mxu0 0.0
        %4353 = vmatpush1.msra.mxu0 0.0
        %4354 = vmatprep.subr.mxu0 0.0
        %4355 = vmatpush1.msra.mxu0 0.0
        %4356 = vmatprep.subr.mxu0 0.0
        %4357 = vmatpush1.msra.mxu0 0.0
        %4358 = vmatprep.subr.mxu0 0.0
        %4359 = vmatpush1.msra.mxu0 0.0
        %4360 = vmatprep.subr.mxu0 0.0
        %4361 = vmatpush1.msra.mxu0 0.0
        %4362 = vmatprep.subr.mxu0 0.0
        %4363 = vmatpush1.msra.mxu0 0.0
        %4364 = vmatprep.subr.mxu0 0.0
        %4365 = vmatpush1.msra.mxu0 0.0
        %4366 = vmatprep.subr.mxu0 0.0
        %4367 = vmatpush1.msra.mxu0 0.0
        %4368 = vmatprep.subr.mxu0 0.0
        %4369 = vmatpush1.msra.mxu0 0.0
        %4370 = vmatprep.subr.mxu0 0.0
        %4371 = vmatpush1.msra.mxu0 0.0
        %4372 = vmatprep.mubr.f32.mxu0 0.0
        %v4373 = vand.u32 %v3648, 4294901760
        %4374 = vmatmul.mubr.f32.gmra.mrb[0].mxu0 %v4373
        %v4375 = vpop.f32.mrb[0].mxu0
        %v4376 = vadd.f32 %v4262, %v4375
        %v4377 = vpop.f32.mrb[0].mxu0
        %4378 = vmatprep.mubr.f32.mxu0 0.0
        %v4379 = vand.u32 %v3651, 4294901760
        %4380 = vmatmul.mubr.f32.gmra.mrb[0].mxu0 %v4379
        %v4381 = vpop.f32.mrb[0].mxu0
        %v4382 = vadd.f32 %v4268, %v4381
        %v4383 = vpop.f32.mrb[0].mxu0
        %4384 = vmatprep.mubr.f32.mxu0 0.0
        %v4385 = vand.u32 %v3654, 4294901760
        %4386 = vmatmul.mubr.f32.gmra.mrb[0].mxu0 %v4385
        %v4387 = vpop.f32.mrb[0].mxu0
        %v4388 = vadd.f32 %v4274, %v4387
        %v4389 = vpop.f32.mrb[0].mxu0
        %4390 = vmatprep.mubr.f32.mxu0 0.0
        %v4391 = vand.u32 %v3657, 4294901760
        %4392 = vmatmul.mubr.f32.gmra.mrb[0].mxu0 %v4391
        %v4393 = vpop.f32.mrb[0].mxu0
        %v4394 = vadd.f32 %v4280, %v4393
        %v4395 = vpop.f32.mrb[0].mxu0
        %4396 = vmatprep.mubr.f32.mxu0 0.0
        %v4397 = vand.u32 %v3660, 4294901760
        %4398 = vmatmul.mubr.f32.gmra.mrb[0].mxu0 %v4397
        %v4399 = vpop.f32.mrb[0].mxu0
        %v4400 = vadd.f32 %v4286, %v4399
        %v4401 = vpop.f32.mrb[0].mxu0
        %4402 = vmatprep.mubr.f32.mxu0 0.0
        %v4403 = vand.u32 %v3663, 4294901760
        %4404 = vmatmul.mubr.f32.gmra.mrb[0].mxu0 %v4403
        %v4405 = vpop.f32.mrb[0].mxu0
        %v4406 = vadd.f32 %v4292, %v4405
        %v4407 = vpop.f32.mrb[0].mxu0
        %4408 = vmatprep.mubr.f32.mxu0 0.0
        %v4409 = vand.u32 %v3666, 4294901760
        %4410 = vmatmul.mubr.f32.gmra.mrb[0].mxu0 %v4409
        %v4411 = vpop.f32.mrb[0].mxu0
        %v4412 = vadd.f32 %v4298, %v4411
        %v4413 = vpop.f32.mrb[0].mxu0
        %4414 = vmatprep.mubr.f32.mxu0 0.0
        %v4415 = vand.u32 %v3669, 4294901760
        %4416 = vmatmul.mubr.f32.gmra.mrb[0].mxu0 %v4415
        %v4417 = vpop.f32.mrb[0].mxu0
        %v4418 = vadd.f32 %v4304, %v4417
        %v4419 = vpop.f32.mrb[0].mxu0
        %4420 = vdwg.mxu0
        %v4421 = vld [vmem:[%s7] sm:$0x1]
        %v4423 = vlaneseq
        %v4424 = vshrl.u32 %v4423, 7
        %v4425 = vsub.s32 0, %v4424
        %v4426 = vrot.slane %v4421, %v4425
        %v4428 = vadd.f32 %v4376, %v4426
        %v4429 = vadd.f32 %v4382, %v4426
        %v4430 = vadd.f32 %v4388, %v4426
        %v4431 = vadd.f32 %v4394, %v4426
        %v4432 = vadd.f32 %v4400, %v4426
        %v4433 = vadd.f32 %v4406, %v4426
        %v4434 = vadd.f32 %v4412, %v4426
        %v4435 = vadd.f32 %v4418, %v4426
        %v4436 = vmax.f32 %v4428, 0.0
        %v4437 = vmax.f32 %v4429, 0.0
        %v4438 = vmax.f32 %v4430, 0.0
        %v4439 = vmax.f32 %v4431, 0.0
        %v4440 = vmax.f32 %v4432, 0.0
        %v4441 = vmax.f32 %v4433, 0.0
        %v4442 = vmax.f32 %v4434, 0.0
        %v4443 = vmax.f32 %v4435, 0.0
        %vm4444 = vcmask 64512
        %4445 = vst.msk [vmem:[%s298] sm:$0xff] %vm4444, %v4436
        %4446 = vst.msk [vmem:[%s298 + $0x8] sm:$0xff] %vm4444, %v4437
        %4447 = vst.msk [vmem:[%s298 + $0x10] sm:$0xff] %vm4444, %v4438
        %4448 = vst.msk [vmem:[%s298 + $0x18] sm:$0xff] %vm4444, %v4439
        %4449 = vst.msk [vmem:[%s298 + $0x20] sm:$0xff] %vm4444, %v4440
        %4450 = vst.msk [vmem:[%s298 + $0x28] sm:$0xff] %vm4444, %v4441
        %4451 = vst.msk [vmem:[%s298 + $0x30] sm:$0xff] %vm4444, %v4442
        %4452 = vst.msk [vmem:[%s298 + $0x38] sm:$0xff] %vm4444, %v4443
        %s4453 = sand.u32 %s203, 1
        %s4454 = scalar_lea.sflag [#allocation4], %s4453
        %s4455 = sand.u32 %s203, 1
        %s4456 = smul.addr %s4455, 64
        %s4457 = scalar_lea.vmem [#allocation3], %s4456
        // Predicated region
        $region53: #{tpu_custom_call.1} parent=51 // pred_check
          %p4458 = pneg %p213
        $region54: #{tpu_custom_call.1} parent=51 // pred_check_branch
          %4460 = sbr.rel (%p4458) target = $region56
        $region55: #{tpu_custom_call.1} parent=51 // pred_region
          %s4462 = ssub.s32 1024, 1024
          %4463 = vsyncadd %s4454, %s4462
          %s4464 = smul.addr %s22, 8
          %s4465 = smul.addr %s4464, 128
          %s4466 = scalar_lea.hbm %s8, %s4465
          %s4467 = sshll.u32 %s4457, 4
          %s4468 = int_to_ptr.vmem [resolvable:$true] %s4467
          %4473 = dma.vmem_to_hbm [thread:$0]  %s4468, 1024, %s4466, %s4454, 128, 128, 8
        $region56: #{tpu_custom_call.1} parent=51 // pred_fallthru
          _
      $region52: #{tpu_custom_call.1} parent=5 // pred_fallthru
        _
      %p4474 = scmp.le.s32.totalorder 2, %s17
      // Predicated region
      $region57: #{tpu_custom_call.1} parent=5 // pred_check
        %p4475 = pneg %p4474
      $region58: #{tpu_custom_call.1} parent=5 // pred_check_branch
        %4477 = sbr.rel (%p4475) target = $region60
      $region59: #{tpu_custom_call.1} parent=5 // pred_region
        %s4478 = ssub.s32 %s17, 2
        // Predicated region
        $region61: #{tpu_custom_call.1} parent=59 // pred_check
          %p4479 = pneg %p219
        $region62: #{tpu_custom_call.1} parent=59 // pred_check_branch
          %4481 = sbr.rel (%p4479) target = $region64
        $region63: #{tpu_custom_call.1} parent=59 // pred_region
          %s4482 = sand.u32 %s204, 1
          %s4483 = scalar_lea.sflag [#allocation4], %s4482
          %s4484 = sand.u32 %s204, 1
          %s4485 = smul.addr %s4484, 64
          %s4486 = scalar_lea.vmem [#allocation3], %s4485
          %4487 = dma.done %s4483, 1024
        $region64: #{tpu_custom_call.1} parent=59 // pred_fallthru
          _
      $region60: #{tpu_custom_call.1} parent=5 // pred_fallthru
        _
    $region6: #{tpu_custom_call.1} parent=1 // loop_footer
      %s21 = sadd.s32 1, %s17
    $region7: #{tpu_custom_call.1} parent=1 // loop_footer_branch
      %16 = sbr.rel target = $region3
    $region8: #{tpu_custom_call.1} parent=1 // loop_exit
      _
    %4488 = vsyncpa [#allocation4], 1
    %s4489 = scalar_lea.sflag [#allocation4], 1
    %4490 = vsyncpa %s4489, 1

</llo_original>
